<compile_context>
chip_gen: v7x
topology: tpu7x:2x2x1
jax: 0.10.0
libtpu: 0.0.40
codegen_flags: <defaults>
</compile_context>

<pallas_src>
import jax
import jax.numpy as jnp
import numpy as np
from jax.experimental import pallas as pl
from jax.experimental.pallas import tpu as pltpu

KS = 7
PAD = (KS - 1) // 2  # 3


def _ceil(a, m):
    return -(-a // m) * m


def _make_band(w, Q):
    """Banded MXU weights for one AttentionGate conv, split per ZPool channel.

    w: (2, KS, KS) float32 conv weight (BN already folded in).
    Returns band: (2, KS, Q, Q) bfloat16 such that, with z_ch row-zero-padded by
    PAD on top/bottom, conv = sum_{ch,i} z_ch_pad[i:i+P, :] @ band[ch, i]
    equals the zero-padded 'same' 7x7 conv of (zmax, zmean) with weight w
    (the kw taps and the column-edge clipping are folded into the band).
    """
    w = jnp.asarray(w, jnp.float32)
    band = jnp.zeros((2, KS, Q, Q), jnp.float32)
    for s in range(KS):
        off = s - PAD
        lo, hi = max(0, -off), min(Q, Q - off)
        if lo >= hi:
            continue
        q = np.arange(lo, hi)
        # band[ch, i, q + off, q] = w[ch, i, s]
        band = band.at[:, :, q + off, q].set(w[:, :, s][:, :, None])
    return band.astype(jnp.bfloat16)


def _gate(zmax, zmean, band_ref, bias):
    """sigmoid(conv7x7 over [zmax; zmean]) * (1/3).

    zmax, zmean: (Bt, P, Q).  band_ref: (2, KS, Q, Q) bf16 VMEM ref.
    Conv runs as 2*KS flat bf16 matmuls on the MXU (M = Bt*P, f32 accumulate).
    """
    Bt, P, Q = zmax.shape
    zrow = jnp.zeros((Bt, PAD, Q), jnp.bfloat16)
    zm = jnp.concatenate([zrow, zmax.astype(jnp.bfloat16), zrow], axis=1)
    za = jnp.concatenate([zrow, zmean.astype(jnp.bfloat16), zrow], axis=1)
    acc = jnp.zeros((Bt * P, Q), jnp.float32)
    for i in range(KS):
        wm = zm[:, i:i + P, :].reshape(Bt * P, Q)
        wa = za[:, i:i + P, :].reshape(Bt * P, Q)
        acc = acc + jnp.dot(wm, band_ref[0, i], preferred_element_type=jnp.float32)
        acc = acc + jnp.dot(wa, band_ref[1, i], preferred_element_type=jnp.float32)
    g = jax.nn.sigmoid(acc + bias) * jnp.float32(1.0 / 3.0)
    return g.reshape(Bt, P, Q)


def _make_kernel(C, H, W, Ct):
    assert C % Ct == 0
    HW = H * W
    nchunk = C // Ct

    def kernel(bias_ref, bhw_ref, bcw_ref, bhc_ref, x_ref, o_ref):
        Bt = x_ref.shape[0]

        # ---- Phase 1: fused ZPools (one sweep over the lane-dense block) ----
        zc_max = None            # (Bt, H, W) running max over C, input dtype
        zc_sum = None            # (Bt, H, W) running sum over C, f32
        zh_max, zh_sum = [], []  # per chunk (Bt, Ct, W)
        zw_max, zw_sum = [], []  # per chunk (Bt, Ct, H)
        for k in range(nchunk):
            sl = slice(k * Ct, (k + 1) * Ct)
            # Transient unflatten of just this chunk (the only padded-(H,W)
            # layout temporary in the kernel).
            x2 = x_ref[:, sl, :].reshape(Bt, Ct, H, W)
            x2f = x2.astype(jnp.float32)
            cm = jnp.max(x2, axis=1)
            cs = jnp.sum(x2f, axis=1)
            zc_max = cm if k == 0 else jnp.maximum(zc_max, cm)
            zc_sum = cs if k == 0 else zc_sum + cs
            zh_max.append(jnp.max(x2, axis=2))
            zh_sum.append(jnp.sum(x2f, axis=2))
            zw_max.append(jnp.max(x2, axis=3))
            zw_sum.append(jnp.sum(x2f, axis=3))

        def _cat(parts):
            return parts[0] if nchunk == 1 else jnp.concatenate(parts, axis=1)

        # ---- Phase 2: three gates on the small ZPool maps (MXU banded conv) -
        s_hw = _gate(zc_max, zc_sum * jnp.float32(1.0 / C),
                     bhw_ref, bias_ref[0])                        # (Bt, H, W)
        s_cw = _gate(_cat(zh_max), _cat(zh_sum) * jnp.float32(1.0 / H),
                     bcw_ref, bias_ref[1])                        # (Bt, C, W)
        s_hc = _gate(_cat(zw_max), _cat(zw_sum) * jnp.float32(1.0 / W),
                     bhc_ref, bias_ref[2])                        # (Bt, C, H)

        # ---- Phase 3: fused combine + lane-dense store ----------------------
        for k in range(nchunk):
            sl = slice(k * Ct, (k + 1) * Ct)
            g2 = (s_hw[:, None, :, :]
                  + s_cw[:, sl][:, :, None, :]
                  + s_hc[:, sl][:, :, :, None])                   # (Bt, Ct, H, W), already /3
            gf = g2.reshape(Bt, Ct, HW)
            xc = x_ref[:, sl, :]
            o_ref[:, sl, :] = (xc * gf.astype(xc.dtype)).astype(o_ref.dtype)

    return kernel


def _vmem_capacity_bytes():
    try:
        info = pltpu.get_tpu_info()
        cap = getattr(info, "vmem_capacity_bytes", None)
        if cap:
            return int(cap)
    except Exception:
        pass
    return 64 * 1024 * 1024   # v7x per-TensorCore capacity: the safe lower bound


def _pick_batch_block(B, C, H, W, Ct, itemsize, budget_bytes):
    """Largest Bt dividing B whose double-buffered in/out blocks plus the
    in-kernel chunk intermediates fit the budget, while keeping enough grid
    steps (>= 6 when B allows) for both TCs of a v7x chip to pipeline."""
    HW = H * W
    blk = _ceil(C, 8) * _ceil(HW, 128) * itemsize          # one in/out buffer per batch
    inter = 3 * Ct * _ceil(H, 8) * _ceil(W, 128) * 4        # unflattened chunk + gate chunk (+slack)
    min_steps = min(B, 6)
    best = 1
    for bt in range(1, B + 1):
        if B % bt:
            continue
        if B // bt < min_steps:
            continue
        if bt * (4 * blk + inter) <= budget_bytes:
            best = bt
    return best


def triplet_attention(x, w_hw, b_hw, w_cw, b_cw, w_hc, b_hc):
    """x: (B, C, H, W); w_*: (2, KS, KS) BN-folded conv weights; b_*: scalar biases."""
    B, C, H, W = x.shape
    HW = H * W

    band_hw = _make_band(w_hw, W)                              # (2, KS, W, W) bf16
    band_cw = _make_band(w_cw, W)                              # (2, KS, W, W) bf16
    band_hc = _make_band(jnp.transpose(w_hc, (0, 2, 1)), H)    # (2, KS, H, H) bf16
    bias = jnp.stack([b_hw, b_cw, b_hc]).astype(jnp.float32)   # (3,)

    # Channel chunk: a multiple of 8 keeps the in-kernel chunk slices
    # sublane-aligned; otherwise process all of C at once.
    Ct = next((c for c in (32, 16, 8) if C % c == 0), C)

    cap = _vmem_capacity_bytes()
    vmem_limit = int(cap * 3 // 4)                 # ~48 MiB on v7x, ~96 MiB on v5e/v6e
    Bt = _pick_batch_block(B, C, H, W, Ct, x.dtype.itemsize, vmem_limit // 2)

    kernel = _make_kernel(C, H, W, Ct)
    out_flat = pl.pallas_call(
        kernel,
        out_shape=jax.ShapeDtypeStruct((B, C, HW), x.dtype),
        grid=(B // Bt,),
        in_specs=[
            pl.BlockSpec(memory_space=pltpu.MemorySpace.SMEM),          # bias (3,)
            pl.BlockSpec(band_hw.shape, lambda b: (0, 0, 0, 0)),        # band hw
            pl.BlockSpec(band_cw.shape, lambda b: (0, 0, 0, 0)),        # band cw
            pl.BlockSpec(band_hc.shape, lambda b: (0, 0, 0, 0)),        # band hc
            pl.BlockSpec((Bt, C, HW), lambda b: (b, 0, 0)),             # x (lane-dense)
        ],
        out_specs=pl.BlockSpec((Bt, C, HW), lambda b: (b, 0, 0)),
        compiler_params=pltpu.CompilerParams(
            dimension_semantics=("parallel",),
            vmem_limit_bytes=vmem_limit),
    )(bias, band_hw, band_cw, band_hc, x.reshape(B, C, HW))
    return out_flat.reshape(B, C, H, W)


# ------------------------- pure-JAX reference ------------------------------
def _gate_ref(xp, w, bias):
    """AttentionGate on an already-permuted tensor xp: (B, R, P, Q)."""
    B, R, P, Q = xp.shape
    z = jnp.stack([xp.max(axis=1), xp.mean(axis=1)], axis=1)   # (B, 2, P, Q)
    zp = jnp.pad(z, ((0, 0), (0, 0), (PAD, PAD), (PAD, PAD)))
    acc = jnp.zeros((B, P, Q), jnp.float32)
    for i in range(KS):
        for j in range(KS):
            acc = acc + w[0, i, j] * zp[:, 0, i:i + P, j:j + Q]
            acc = acc + w[1, i, j] * zp[:, 1, i:i + P, j:j + Q]
    s = jax.nn.sigmoid(acc + bias)
    return xp * s[:, None, :, :]


def _triplet_ref(x, w_hw, b_hw, w_cw, b_cw, w_hc, b_hc):
    o1 = jnp.transpose(_gate_ref(jnp.transpose(x, (0, 2, 1, 3)), w_cw, b_cw),
                       (0, 2, 1, 3))
    o2 = jnp.transpose(_gate_ref(jnp.transpose(x, (0, 3, 2, 1)), w_hc, b_hc),
                       (0, 3, 2, 1))
    o0 = _gate_ref(x, w_hw, b_hw)
    return (o0 + o1 + o2) * (1.0 / 3.0)


if __name__ == "__main__":
    key = jax.random.PRNGKey(0)
    kx, k0, k1, k2 = jax.random.split(key, 4)
    B, C, H, W = 2, 4, 16, 16
    x = jax.random.normal(kx, (B, C, H, W), jnp.float32)

    # Conv2d(2,1,7,7,bias=False) per branch, eval-mode BatchNorm2d(1) folded
    # into the conv weight + a bias scalar (non-trivial BN stats to exercise
    # the bias path).
    def make_branch(k):
        kw, kg, kb, km, kv = jax.random.split(k, 5)
        w = jax.random.normal(kw, (2, KS, KS), jnp.float32) * 0.1
        gamma = 1.0 + 0.1 * jax.random.normal(kg, (), jnp.float32)
        beta = 0.1 * jax.random.normal(kb, (), jnp.float32)
        rmean = 0.1 * jax.random.normal(km, (), jnp.float32)
        rvar = 1.0 + 0.1 * jax.random.uniform(kv, (), jnp.float32)
        eps = 1e-5
        s = gamma / jnp.sqrt(rvar + eps)
        return w * s, beta - rmean * s

    w_hw, b_hw = make_branch(k0)
    w_cw, b_cw = make_branch(k1)
    w_hc, b_hc = make_branch(k2)

    out = jax.block_until_ready(
        triplet_attention(x, w_hw, b_hw, w_cw, b_cw, w_hc, b_hc))
    ref = jax.block_until_ready(
        _triplet_ref(x, w_hw, b_hw, w_cw, b_cw, w_hc, b_hc))

    # Tolerance: the gate conv runs with bf16 weights and bf16 ZPool operands
    # on the MXU (f32 accumulate) vs. the all-f32 VPU reference, giving ~1e-3
    # level differences after the sigmoid; real indexing/orientation bugs
    # produce errors orders of magnitude larger.
    np.testing.assert_allclose(np.asarray(out), np.asarray(ref),
                               rtol=1e-2, atol=1e-2)
    print("KERNEL_OK")
</pallas_src>

<mosaic_0001>
module attributes {stable_mosaic.version = 11 : i64} {
  func.func @kernel(%arg0: i32, %arg1: memref<3xf32, #tpu.memory_space<smem>>, %arg2: memref<2x7x16x16xbf16, #tpu.memory_space<vmem>>, %arg3: memref<2x7x16x16xbf16, #tpu.memory_space<vmem>>, %arg4: memref<2x7x16x16xbf16, #tpu.memory_space<vmem>>, %arg5: memref<1x4x256xf32, #tpu.memory_space<vmem>>, %arg6: memref<1x4x256xf32, #tpu.memory_space<vmem>>) attributes {dimension_semantics = [#tpu.dimension_semantics<parallel>], iteration_bounds = array<i64: 2>, scalar_prefetch = 0 : i64, scratch_operands = 0 : i64, tpu.core_type = #tpu.core_type<tc>, window_params = [{transform_indices = @transform_0, window_bounds = array<i64: 3>}, {pipeline_mode = #tpu.pipeline_mode<synchronous>, transform_indices = @transform_1, window_bounds = array<i64: 2, 7, 16, 16>}, {pipeline_mode = #tpu.pipeline_mode<synchronous>, transform_indices = @transform_2, window_bounds = array<i64: 2, 7, 16, 16>}, {pipeline_mode = #tpu.pipeline_mode<synchronous>, transform_indices = @transform_3, window_bounds = array<i64: 2, 7, 16, 16>}, {transform_indices = @transform_4, window_bounds = array<i64: 1, 4, 256>}, {transform_indices = @transform_5, window_bounds = array<i64: 1, 4, 256>}]} {
    %c0 = arith.constant 0 : index
    %c0_0 = arith.constant 0 : index
    %c0_1 = arith.constant 0 : index
    %0 = vector.load %arg5[%c0, %c0_0, %c0_1] : memref<1x4x256xf32, #tpu.memory_space<vmem>>, vector<1x4x256xf32>
    %1 = vector.shape_cast %0 : vector<1x4x256xf32> to vector<1x4x16x16xf32>
    %cst = arith.constant dense<0xFF800000> : vector<1x16x16xf32>
    %2 = vector.multi_reduction <maximumf>, %1, %cst [1] : vector<1x4x16x16xf32> to vector<1x16x16xf32>
    %cst_2 = arith.constant dense<0.000000e+00> : vector<1x16x16xf32>
    %3 = vector.multi_reduction <add>, %1, %cst_2 [1] : vector<1x4x16x16xf32> to vector<1x16x16xf32>
    %cst_3 = arith.constant dense<0xFF800000> : vector<1x4x16xf32>
    %4 = vector.multi_reduction <maximumf>, %1, %cst_3 [2] : vector<1x4x16x16xf32> to vector<1x4x16xf32>
    %cst_4 = arith.constant dense<0.000000e+00> : vector<1x4x16xf32>
    %5 = vector.multi_reduction <add>, %1, %cst_4 [2] : vector<1x4x16x16xf32> to vector<1x4x16xf32>
    %cst_5 = arith.constant dense<0xFF800000> : vector<1x4x16xf32>
    %6 = vector.multi_reduction <maximumf>, %1, %cst_5 [3] : vector<1x4x16x16xf32> to vector<1x4x16xf32>
    %cst_6 = arith.constant dense<0.000000e+00> : vector<1x4x16xf32>
    %7 = vector.multi_reduction <add>, %1, %cst_6 [3] : vector<1x4x16x16xf32> to vector<1x4x16xf32>
    %cst_7 = arith.constant 2.500000e-01 : f32
    %8 = vector.broadcast %cst_7 : f32 to vector<1x16x16xf32>
    %9 = arith.mulf %3, %8 : vector<1x16x16xf32>
    %c0_8 = arith.constant 0 : index
    %10 = memref.load %arg1[%c0_8] : memref<3xf32, #tpu.memory_space<smem>>
    %cst_9 = arith.constant 0.000000e+00 : bf16
    %11 = vector.broadcast %cst_9 : bf16 to vector<1x3x16xbf16>
    %12 = arith.truncf %2 : vector<1x16x16xf32> to vector<1x16x16xbf16>
    %13 = tpu.concatenate %11, %12, %11 in 1 : vector<1x3x16xbf16>, vector<1x16x16xbf16>, vector<1x3x16xbf16> -> vector<1x22x16xbf16>
    %14 = arith.truncf %9 : vector<1x16x16xf32> to vector<1x16x16xbf16>
    %15 = tpu.concatenate %11, %14, %11 in 1 : vector<1x3x16xbf16>, vector<1x16x16xbf16>, vector<1x3x16xbf16> -> vector<1x22x16xbf16>
    %cst_10 = arith.constant 0.000000e+00 : f32
    %16 = vector.broadcast %cst_10 : f32 to vector<16x16xf32>
    %17 = vector.extract_strided_slice %13 {offsets = [0, 0, 0], sizes = [1, 16, 16], strides = [1, 1, 1]} : vector<1x22x16xbf16> to vector<1x16x16xbf16>
    %18 = vector.shape_cast %17 : vector<1x16x16xbf16> to vector<16x16xbf16>
    %19 = vector.extract_strided_slice %15 {offsets = [0, 0, 0], sizes = [1, 16, 16], strides = [1, 1, 1]} : vector<1x22x16xbf16> to vector<1x16x16xbf16>
    %20 = vector.shape_cast %19 : vector<1x16x16xbf16> to vector<16x16xbf16>
    %c0_11 = arith.constant 0 : index
    %c0_12 = arith.constant 0 : index
    %c0_13 = arith.constant 0 : index
    %c0_14 = arith.constant 0 : index
    %21 = vector.load %arg2[%c0_11, %c0_12, %c0_13, %c0_14] : memref<2x7x16x16xbf16, #tpu.memory_space<vmem>>, vector<1x1x16x16xbf16>
    %22 = vector.shape_cast %21 : vector<1x1x16x16xbf16> to vector<16x16xbf16>
    %cst_15 = arith.constant dense<0.000000e+00> : vector<16x16xf32>
    %23 = tpu.matmul %18, %22, %cst_15 {dimension_numbers = #tpu.dot_dimension_numbers<[1], [0], [0], [1], [0, 0, 1, 1], [], []>} : vector<16x16xbf16>, vector<16x16xbf16>, vector<16x16xf32> -> vector<16x16xf32>
    %24 = arith.addf %16, %23 : vector<16x16xf32>
    %c1 = arith.constant 1 : index
    %c0_16 = arith.constant 0 : index
    %c0_17 = arith.constant 0 : index
    %c0_18 = arith.constant 0 : index
    %25 = vector.load %arg2[%c1, %c0_16, %c0_17, %c0_18] : memref<2x7x16x16xbf16, #tpu.memory_space<vmem>>, vector<1x1x16x16xbf16>
    %26 = vector.shape_cast %25 : vector<1x1x16x16xbf16> to vector<16x16xbf16>
    %cst_19 = arith.constant dense<0.000000e+00> : vector<16x16xf32>
    %27 = tpu.matmul %20, %26, %cst_19 {dimension_numbers = #tpu.dot_dimension_numbers<[1], [0], [0], [1], [0, 0, 1, 1], [], []>} : vector<16x16xbf16>, vector<16x16xbf16>, vector<16x16xf32> -> vector<16x16xf32>
    %28 = arith.addf %24, %27 : vector<16x16xf32>
    %29 = vector.extract_strided_slice %13 {offsets = [0, 1, 0], sizes = [1, 16, 16], strides = [1, 1, 1]} : vector<1x22x16xbf16> to vector<1x16x16xbf16>
    %30 = vector.shape_cast %29 : vector<1x16x16xbf16> to vector<16x16xbf16>
    %31 = vector.extract_strided_slice %15 {offsets = [0, 1, 0], sizes = [1, 16, 16], strides = [1, 1, 1]} : vector<1x22x16xbf16> to vector<1x16x16xbf16>
    %32 = vector.shape_cast %31 : vector<1x16x16xbf16> to vector<16x16xbf16>
    %c0_20 = arith.constant 0 : index
    %c1_21 = arith.constant 1 : index
    %c0_22 = arith.constant 0 : index
    %c0_23 = arith.constant 0 : index
    %33 = vector.load %arg2[%c0_20, %c1_21, %c0_22, %c0_23] : memref<2x7x16x16xbf16, #tpu.memory_space<vmem>>, vector<1x1x16x16xbf16>
    %34 = vector.shape_cast %33 : vector<1x1x16x16xbf16> to vector<16x16xbf16>
    %cst_24 = arith.constant dense<0.000000e+00> : vector<16x16xf32>
    %35 = tpu.matmul %30, %34, %cst_24 {dimension_numbers = #tpu.dot_dimension_numbers<[1], [0], [0], [1], [0, 0, 1, 1], [], []>} : vector<16x16xbf16>, vector<16x16xbf16>, vector<16x16xf32> -> vector<16x16xf32>
    %36 = arith.addf %28, %35 : vector<16x16xf32>
    %c1_25 = arith.constant 1 : index
    %c1_26 = arith.constant 1 : index
    %c0_27 = arith.constant 0 : index
    %c0_28 = arith.constant 0 : index
    %37 = vector.load %arg2[%c1_25, %c1_26, %c0_27, %c0_28] : memref<2x7x16x16xbf16, #tpu.memory_space<vmem>>, vector<1x1x16x16xbf16>
    %38 = vector.shape_cast %37 : vector<1x1x16x16xbf16> to vector<16x16xbf16>
    %cst_29 = arith.constant dense<0.000000e+00> : vector<16x16xf32>
    %39 = tpu.matmul %32, %38, %cst_29 {dimension_numbers = #tpu.dot_dimension_numbers<[1], [0], [0], [1], [0, 0, 1, 1], [], []>} : vector<16x16xbf16>, vector<16x16xbf16>, vector<16x16xf32> -> vector<16x16xf32>
    %40 = arith.addf %36, %39 : vector<16x16xf32>
    %41 = vector.extract_strided_slice %13 {offsets = [0, 2, 0], sizes = [1, 16, 16], strides = [1, 1, 1]} : vector<1x22x16xbf16> to vector<1x16x16xbf16>
    %42 = vector.shape_cast %41 : vector<1x16x16xbf16> to vector<16x16xbf16>
    %43 = vector.extract_strided_slice %15 {offsets = [0, 2, 0], sizes = [1, 16, 16], strides = [1, 1, 1]} : vector<1x22x16xbf16> to vector<1x16x16xbf16>
    %44 = vector.shape_cast %43 : vector<1x16x16xbf16> to vector<16x16xbf16>
    %c0_30 = arith.constant 0 : index
    %c2 = arith.constant 2 : index
    %c0_31 = arith.constant 0 : index
    %c0_32 = arith.constant 0 : index
    %45 = vector.load %arg2[%c0_30, %c2, %c0_31, %c0_32] : memref<2x7x16x16xbf16, #tpu.memory_space<vmem>>, vector<1x1x16x16xbf16>
    %46 = vector.shape_cast %45 : vector<1x1x16x16xbf16> to vector<16x16xbf16>
    %cst_33 = arith.constant dense<0.000000e+00> : vector<16x16xf32>
    %47 = tpu.matmul %42, %46, %cst_33 {dimension_numbers = #tpu.dot_dimension_numbers<[1], [0], [0], [1], [0, 0, 1, 1], [], []>} : vector<16x16xbf16>, vector<16x16xbf16>, vector<16x16xf32> -> vector<16x16xf32>
    %48 = arith.addf %40, %47 : vector<16x16xf32>
    %c1_34 = arith.constant 1 : index
    %c2_35 = arith.constant 2 : index
    %c0_36 = arith.constant 0 : index
    %c0_37 = arith.constant 0 : index
    %49 = vector.load %arg2[%c1_34, %c2_35, %c0_36, %c0_37] : memref<2x7x16x16xbf16, #tpu.memory_space<vmem>>, vector<1x1x16x16xbf16>
    %50 = vector.shape_cast %49 : vector<1x1x16x16xbf16> to vector<16x16xbf16>
    %cst_38 = arith.constant dense<0.000000e+00> : vector<16x16xf32>
    %51 = tpu.matmul %44, %50, %cst_38 {dimension_numbers = #tpu.dot_dimension_numbers<[1], [0], [0], [1], [0, 0, 1, 1], [], []>} : vector<16x16xbf16>, vector<16x16xbf16>, vector<16x16xf32> -> vector<16x16xf32>
    %52 = arith.addf %48, %51 : vector<16x16xf32>
    %53 = vector.extract_strided_slice %13 {offsets = [0, 3, 0], sizes = [1, 16, 16], strides = [1, 1, 1]} : vector<1x22x16xbf16> to vector<1x16x16xbf16>
    %54 = vector.shape_cast %53 : vector<1x16x16xbf16> to vector<16x16xbf16>
    %55 = vector.extract_strided_slice %15 {offsets = [0, 3, 0], sizes = [1, 16, 16], strides = [1, 1, 1]} : vector<1x22x16xbf16> to vector<1x16x16xbf16>
    %56 = vector.shape_cast %55 : vector<1x16x16xbf16> to vector<16x16xbf16>
    %c0_39 = arith.constant 0 : index
    %c3 = arith.constant 3 : index
    %c0_40 = arith.constant 0 : index
    %c0_41 = arith.constant 0 : index
    %57 = vector.load %arg2[%c0_39, %c3, %c0_40, %c0_41] : memref<2x7x16x16xbf16, #tpu.memory_space<vmem>>, vector<1x1x16x16xbf16>
    %58 = vector.shape_cast %57 : vector<1x1x16x16xbf16> to vector<16x16xbf16>
    %cst_42 = arith.constant dense<0.000000e+00> : vector<16x16xf32>
    %59 = tpu.matmul %54, %58, %cst_42 {dimension_numbers = #tpu.dot_dimension_numbers<[1], [0], [0], [1], [0, 0, 1, 1], [], []>} : vector<16x16xbf16>, vector<16x16xbf16>, vector<16x16xf32> -> vector<16x16xf32>
    %60 = arith.addf %52, %59 : vector<16x16xf32>
    %c1_43 = arith.constant 1 : index
    %c3_44 = arith.constant 3 : index
    %c0_45 = arith.constant 0 : index
    %c0_46 = arith.constant 0 : index
    %61 = vector.load %arg2[%c1_43, %c3_44, %c0_45, %c0_46] : memref<2x7x16x16xbf16, #tpu.memory_space<vmem>>, vector<1x1x16x16xbf16>
    %62 = vector.shape_cast %61 : vector<1x1x16x16xbf16> to vector<16x16xbf16>
    %cst_47 = arith.constant dense<0.000000e+00> : vector<16x16xf32>
    %63 = tpu.matmul %56, %62, %cst_47 {dimension_numbers = #tpu.dot_dimension_numbers<[1], [0], [0], [1], [0, 0, 1, 1], [], []>} : vector<16x16xbf16>, vector<16x16xbf16>, vector<16x16xf32> -> vector<16x16xf32>
    %64 = arith.addf %60, %63 : vector<16x16xf32>
    %65 = vector.extract_strided_slice %13 {offsets = [0, 4, 0], sizes = [1, 16, 16], strides = [1, 1, 1]} : vector<1x22x16xbf16> to vector<1x16x16xbf16>
    %66 = vector.shape_cast %65 : vector<1x16x16xbf16> to vector<16x16xbf16>
    %67 = vector.extract_strided_slice %15 {offsets = [0, 4, 0], sizes = [1, 16, 16], strides = [1, 1, 1]} : vector<1x22x16xbf16> to vector<1x16x16xbf16>
    %68 = vector.shape_cast %67 : vector<1x16x16xbf16> to vector<16x16xbf16>
    %c0_48 = arith.constant 0 : index
    %c4 = arith.constant 4 : index
    %c0_49 = arith.constant 0 : index
    %c0_50 = arith.constant 0 : index
    %69 = vector.load %arg2[%c0_48, %c4, %c0_49, %c0_50] : memref<2x7x16x16xbf16, #tpu.memory_space<vmem>>, vector<1x1x16x16xbf16>
    %70 = vector.shape_cast %69 : vector<1x1x16x16xbf16> to vector<16x16xbf16>
    %cst_51 = arith.constant dense<0.000000e+00> : vector<16x16xf32>
    %71 = tpu.matmul %66, %70, %cst_51 {dimension_numbers = #tpu.dot_dimension_numbers<[1], [0], [0], [1], [0, 0, 1, 1], [], []>} : vector<16x16xbf16>, vector<16x16xbf16>, vector<16x16xf32> -> vector<16x16xf32>
    %72 = arith.addf %64, %71 : vector<16x16xf32>
    %c1_52 = arith.constant 1 : index
    %c4_53 = arith.constant 4 : index
    %c0_54 = arith.constant 0 : index
    %c0_55 = arith.constant 0 : index
    %73 = vector.load %arg2[%c1_52, %c4_53, %c0_54, %c0_55] : memref<2x7x16x16xbf16, #tpu.memory_space<vmem>>, vector<1x1x16x16xbf16>
    %74 = vector.shape_cast %73 : vector<1x1x16x16xbf16> to vector<16x16xbf16>
    %cst_56 = arith.constant dense<0.000000e+00> : vector<16x16xf32>
    %75 = tpu.matmul %68, %74, %cst_56 {dimension_numbers = #tpu.dot_dimension_numbers<[1], [0], [0], [1], [0, 0, 1, 1], [], []>} : vector<16x16xbf16>, vector<16x16xbf16>, vector<16x16xf32> -> vector<16x16xf32>
    %76 = arith.addf %72, %75 : vector<16x16xf32>
    %77 = vector.extract_strided_slice %13 {offsets = [0, 5, 0], sizes = [1, 16, 16], strides = [1, 1, 1]} : vector<1x22x16xbf16> to vector<1x16x16xbf16>
    %78 = vector.shape_cast %77 : vector<1x16x16xbf16> to vector<16x16xbf16>
    %79 = vector.extract_strided_slice %15 {offsets = [0, 5, 0], sizes = [1, 16, 16], strides = [1, 1, 1]} : vector<1x22x16xbf16> to vector<1x16x16xbf16>
    %80 = vector.shape_cast %79 : vector<1x16x16xbf16> to vector<16x16xbf16>
    %c0_57 = arith.constant 0 : index
    %c5 = arith.constant 5 : index
    %c0_58 = arith.constant 0 : index
    %c0_59 = arith.constant 0 : index
    %81 = vector.load %arg2[%c0_57, %c5, %c0_58, %c0_59] : memref<2x7x16x16xbf16, #tpu.memory_space<vmem>>, vector<1x1x16x16xbf16>
    %82 = vector.shape_cast %81 : vector<1x1x16x16xbf16> to vector<16x16xbf16>
    %cst_60 = arith.constant dense<0.000000e+00> : vector<16x16xf32>
    %83 = tpu.matmul %78, %82, %cst_60 {dimension_numbers = #tpu.dot_dimension_numbers<[1], [0], [0], [1], [0, 0, 1, 1], [], []>} : vector<16x16xbf16>, vector<16x16xbf16>, vector<16x16xf32> -> vector<16x16xf32>
    %84 = arith.addf %76, %83 : vector<16x16xf32>
    %c1_61 = arith.constant 1 : index
    %c5_62 = arith.constant 5 : index
    %c0_63 = arith.constant 0 : index
    %c0_64 = arith.constant 0 : index
    %85 = vector.load %arg2[%c1_61, %c5_62, %c0_63, %c0_64] : memref<2x7x16x16xbf16, #tpu.memory_space<vmem>>, vector<1x1x16x16xbf16>
    %86 = vector.shape_cast %85 : vector<1x1x16x16xbf16> to vector<16x16xbf16>
    %cst_65 = arith.constant dense<0.000000e+00> : vector<16x16xf32>
    %87 = tpu.matmul %80, %86, %cst_65 {dimension_numbers = #tpu.dot_dimension_numbers<[1], [0], [0], [1], [0, 0, 1, 1], [], []>} : vector<16x16xbf16>, vector<16x16xbf16>, vector<16x16xf32> -> vector<16x16xf32>
    %88 = arith.addf %84, %87 : vector<16x16xf32>
    %89 = vector.extract_strided_slice %13 {offsets = [0, 6, 0], sizes = [1, 16, 16], strides = [1, 1, 1]} : vector<1x22x16xbf16> to vector<1x16x16xbf16>
    %90 = vector.shape_cast %89 : vector<1x16x16xbf16> to vector<16x16xbf16>
    %91 = vector.extract_strided_slice %15 {offsets = [0, 6, 0], sizes = [1, 16, 16], strides = [1, 1, 1]} : vector<1x22x16xbf16> to vector<1x16x16xbf16>
    %92 = vector.shape_cast %91 : vector<1x16x16xbf16> to vector<16x16xbf16>
    %c0_66 = arith.constant 0 : index
    %c6 = arith.constant 6 : index
    %c0_67 = arith.constant 0 : index
    %c0_68 = arith.constant 0 : index
    %93 = vector.load %arg2[%c0_66, %c6, %c0_67, %c0_68] : memref<2x7x16x16xbf16, #tpu.memory_space<vmem>>, vector<1x1x16x16xbf16>
    %94 = vector.shape_cast %93 : vector<1x1x16x16xbf16> to vector<16x16xbf16>
    %cst_69 = arith.constant dense<0.000000e+00> : vector<16x16xf32>
    %95 = tpu.matmul %90, %94, %cst_69 {dimension_numbers = #tpu.dot_dimension_numbers<[1], [0], [0], [1], [0, 0, 1, 1], [], []>} : vector<16x16xbf16>, vector<16x16xbf16>, vector<16x16xf32> -> vector<16x16xf32>
    %96 = arith.addf %88, %95 : vector<16x16xf32>
    %c1_70 = arith.constant 1 : index
    %c6_71 = arith.constant 6 : index
    %c0_72 = arith.constant 0 : index
    %c0_73 = arith.constant 0 : index
    %97 = vector.load %arg2[%c1_70, %c6_71, %c0_72, %c0_73] : memref<2x7x16x16xbf16, #tpu.memory_space<vmem>>, vector<1x1x16x16xbf16>
    %98 = vector.shape_cast %97 : vector<1x1x16x16xbf16> to vector<16x16xbf16>
    %cst_74 = arith.constant dense<0.000000e+00> : vector<16x16xf32>
    %99 = tpu.matmul %92, %98, %cst_74 {dimension_numbers = #tpu.dot_dimension_numbers<[1], [0], [0], [1], [0, 0, 1, 1], [], []>} : vector<16x16xbf16>, vector<16x16xbf16>, vector<16x16xf32> -> vector<16x16xf32>
    %100 = arith.addf %96, %99 : vector<16x16xf32>
    %101 = vector.broadcast %10 : f32 to vector<16x16xf32>
    %102 = arith.addf %100, %101 : vector<16x16xf32>
    %103 = arith.negf %102 : vector<16x16xf32>
    %104 = math.exp %103 : vector<16x16xf32>
    %cst_75 = arith.constant 1.000000e+00 : f32
    %105 = vector.broadcast %cst_75 : f32 to vector<16x16xf32>
    %106 = arith.addf %105, %104 : vector<16x16xf32>
    %107 = arith.divf %105, %106 : vector<16x16xf32>
    %cst_76 = arith.constant 0.333333343 : f32
    %108 = vector.broadcast %cst_76 : f32 to vector<16x16xf32>
    %109 = arith.mulf %107, %108 : vector<16x16xf32>
    %110 = vector.shape_cast %109 : vector<16x16xf32> to vector<1x16x16xf32>
    %cst_77 = arith.constant 6.250000e-02 : f32
    %111 = vector.broadcast %cst_77 : f32 to vector<1x4x16xf32>
    %112 = arith.mulf %5, %111 : vector<1x4x16xf32>
    %c1_78 = arith.constant 1 : index
    %113 = memref.load %arg1[%c1_78] : memref<3xf32, #tpu.memory_space<smem>>
    %cst_79 = arith.constant 0.000000e+00 : bf16
    %114 = vector.broadcast %cst_79 : bf16 to vector<1x3x16xbf16>
    %115 = arith.truncf %4 : vector<1x4x16xf32> to vector<1x4x16xbf16>
    %116 = tpu.concatenate %114, %115, %114 in 1 : vector<1x3x16xbf16>, vector<1x4x16xbf16>, vector<1x3x16xbf16> -> vector<1x10x16xbf16>
    %117 = arith.truncf %112 : vector<1x4x16xf32> to vector<1x4x16xbf16>
    %118 = tpu.concatenate %114, %117, %114 in 1 : vector<1x3x16xbf16>, vector<1x4x16xbf16>, vector<1x3x16xbf16> -> vector<1x10x16xbf16>
    %cst_80 = arith.constant 0.000000e+00 : f32
    %119 = vector.broadcast %cst_80 : f32 to vector<4x16xf32>
    %120 = vector.extract_strided_slice %116 {offsets = [0, 0, 0], sizes = [1, 4, 16], strides = [1, 1, 1]} : vector<1x10x16xbf16> to vector<1x4x16xbf16>
    %121 = vector.shape_cast %120 : vector<1x4x16xbf16> to vector<4x16xbf16>
    %122 = vector.extract_strided_slice %118 {offsets = [0, 0, 0], sizes = [1, 4, 16], strides = [1, 1, 1]} : vector<1x10x16xbf16> to vector<1x4x16xbf16>
    %123 = vector.shape_cast %122 : vector<1x4x16xbf16> to vector<4x16xbf16>
    %c0_81 = arith.constant 0 : index
    %c0_82 = arith.constant 0 : index
    %c0_83 = arith.constant 0 : index
    %c0_84 = arith.constant 0 : index
    %124 = vector.load %arg3[%c0_81, %c0_82, %c0_83, %c0_84] : memref<2x7x16x16xbf16, #tpu.memory_space<vmem>>, vector<1x1x16x16xbf16>
    %125 = vector.shape_cast %124 : vector<1x1x16x16xbf16> to vector<16x16xbf16>
    %cst_85 = arith.constant dense<0.000000e+00> : vector<4x16xf32>
    %126 = tpu.matmul %121, %125, %cst_85 {dimension_numbers = #tpu.dot_dimension_numbers<[1], [0], [0], [1], [0, 0, 1, 1], [], []>} : vector<4x16xbf16>, vector<16x16xbf16>, vector<4x16xf32> -> vector<4x16xf32>
    %127 = arith.addf %119, %126 : vector<4x16xf32>
    %c1_86 = arith.constant 1 : index
    %c0_87 = arith.constant 0 : index
    %c0_88 = arith.constant 0 : index
    %c0_89 = arith.constant 0 : index
    %128 = vector.load %arg3[%c1_86, %c0_87, %c0_88, %c0_89] : memref<2x7x16x16xbf16, #tpu.memory_space<vmem>>, vector<1x1x16x16xbf16>
    %129 = vector.shape_cast %128 : vector<1x1x16x16xbf16> to vector<16x16xbf16>
    %cst_90 = arith.constant dense<0.000000e+00> : vector<4x16xf32>
    %130 = tpu.matmul %123, %129, %cst_90 {dimension_numbers = #tpu.dot_dimension_numbers<[1], [0], [0], [1], [0, 0, 1, 1], [], []>} : vector<4x16xbf16>, vector<16x16xbf16>, vector<4x16xf32> -> vector<4x16xf32>
    %131 = arith.addf %127, %130 : vector<4x16xf32>
    %132 = vector.extract_strided_slice %116 {offsets = [0, 1, 0], sizes = [1, 4, 16], strides = [1, 1, 1]} : vector<1x10x16xbf16> to vector<1x4x16xbf16>
    %133 = vector.shape_cast %132 : vector<1x4x16xbf16> to vector<4x16xbf16>
    %134 = vector.extract_strided_slice %118 {offsets = [0, 1, 0], sizes = [1, 4, 16], strides = [1, 1, 1]} : vector<1x10x16xbf16> to vector<1x4x16xbf16>
    %135 = vector.shape_cast %134 : vector<1x4x16xbf16> to vector<4x16xbf16>
    %c0_91 = arith.constant 0 : index
    %c1_92 = arith.constant 1 : index
    %c0_93 = arith.constant 0 : index
    %c0_94 = arith.constant 0 : index
    %136 = vector.load %arg3[%c0_91, %c1_92, %c0_93, %c0_94] : memref<2x7x16x16xbf16, #tpu.memory_space<vmem>>, vector<1x1x16x16xbf16>
    %137 = vector.shape_cast %136 : vector<1x1x16x16xbf16> to vector<16x16xbf16>
    %cst_95 = arith.constant dense<0.000000e+00> : vector<4x16xf32>
    %138 = tpu.matmul %133, %137, %cst_95 {dimension_numbers = #tpu.dot_dimension_numbers<[1], [0], [0], [1], [0, 0, 1, 1], [], []>} : vector<4x16xbf16>, vector<16x16xbf16>, vector<4x16xf32> -> vector<4x16xf32>
    %139 = arith.addf %131, %138 : vector<4x16xf32>
    %c1_96 = arith.constant 1 : index
    %c1_97 = arith.constant 1 : index
    %c0_98 = arith.constant 0 : index
    %c0_99 = arith.constant 0 : index
    %140 = vector.load %arg3[%c1_96, %c1_97, %c0_98, %c0_99] : memref<2x7x16x16xbf16, #tpu.memory_space<vmem>>, vector<1x1x16x16xbf16>
    %141 = vector.shape_cast %140 : vector<1x1x16x16xbf16> to vector<16x16xbf16>
    %cst_100 = arith.constant dense<0.000000e+00> : vector<4x16xf32>
    %142 = tpu.matmul %135, %141, %cst_100 {dimension_numbers = #tpu.dot_dimension_numbers<[1], [0], [0], [1], [0, 0, 1, 1], [], []>} : vector<4x16xbf16>, vector<16x16xbf16>, vector<4x16xf32> -> vector<4x16xf32>
    %143 = arith.addf %139, %142 : vector<4x16xf32>
    %144 = vector.extract_strided_slice %116 {offsets = [0, 2, 0], sizes = [1, 4, 16], strides = [1, 1, 1]} : vector<1x10x16xbf16> to vector<1x4x16xbf16>
    %145 = vector.shape_cast %144 : vector<1x4x16xbf16> to vector<4x16xbf16>
    %146 = vector.extract_strided_slice %118 {offsets = [0, 2, 0], sizes = [1, 4, 16], strides = [1, 1, 1]} : vector<1x10x16xbf16> to vector<1x4x16xbf16>
    %147 = vector.shape_cast %146 : vector<1x4x16xbf16> to vector<4x16xbf16>
    %c0_101 = arith.constant 0 : index
    %c2_102 = arith.constant 2 : index
    %c0_103 = arith.constant 0 : index
    %c0_104 = arith.constant 0 : index
    %148 = vector.load %arg3[%c0_101, %c2_102, %c0_103, %c0_104] : memref<2x7x16x16xbf16, #tpu.memory_space<vmem>>, vector<1x1x16x16xbf16>
    %149 = vector.shape_cast %148 : vector<1x1x16x16xbf16> to vector<16x16xbf16>
    %cst_105 = arith.constant dense<0.000000e+00> : vector<4x16xf32>
    %150 = tpu.matmul %145, %149, %cst_105 {dimension_numbers = #tpu.dot_dimension_numbers<[1], [0], [0], [1], [0, 0, 1, 1], [], []>} : vector<4x16xbf16>, vector<16x16xbf16>, vector<4x16xf32> -> vector<4x16xf32>
    %151 = arith.addf %143, %150 : vector<4x16xf32>
    %c1_106 = arith.constant 1 : index
    %c2_107 = arith.constant 2 : index
    %c0_108 = arith.constant 0 : index
    %c0_109 = arith.constant 0 : index
    %152 = vector.load %arg3[%c1_106, %c2_107, %c0_108, %c0_109] : memref<2x7x16x16xbf16, #tpu.memory_space<vmem>>, vector<1x1x16x16xbf16>
    %153 = vector.shape_cast %152 : vector<1x1x16x16xbf16> to vector<16x16xbf16>
    %cst_110 = arith.constant dense<0.000000e+00> : vector<4x16xf32>
    %154 = tpu.matmul %147, %153, %cst_110 {dimension_numbers = #tpu.dot_dimension_numbers<[1], [0], [0], [1], [0, 0, 1, 1], [], []>} : vector<4x16xbf16>, vector<16x16xbf16>, vector<4x16xf32> -> vector<4x16xf32>
    %155 = arith.addf %151, %154 : vector<4x16xf32>
    %156 = vector.extract_strided_slice %116 {offsets = [0, 3, 0], sizes = [1, 4, 16], strides = [1, 1, 1]} : vector<1x10x16xbf16> to vector<1x4x16xbf16>
    %157 = vector.shape_cast %156 : vector<1x4x16xbf16> to vector<4x16xbf16>
    %158 = vector.extract_strided_slice %118 {offsets = [0, 3, 0], sizes = [1, 4, 16], strides = [1, 1, 1]} : vector<1x10x16xbf16> to vector<1x4x16xbf16>
    %159 = vector.shape_cast %158 : vector<1x4x16xbf16> to vector<4x16xbf16>
    %c0_111 = arith.constant 0 : index
    %c3_112 = arith.constant 3 : index
    %c0_113 = arith.constant 0 : index
    %c0_114 = arith.constant 0 : index
    %160 = vector.load %arg3[%c0_111, %c3_112, %c0_113, %c0_114] : memref<2x7x16x16xbf16, #tpu.memory_space<vmem>>, vector<1x1x16x16xbf16>
    %161 = vector.shape_cast %160 : vector<1x1x16x16xbf16> to vector<16x16xbf16>
    %cst_115 = arith.constant dense<0.000000e+00> : vector<4x16xf32>
    %162 = tpu.matmul %157, %161, %cst_115 {dimension_numbers = #tpu.dot_dimension_numbers<[1], [0], [0], [1], [0, 0, 1, 1], [], []>} : vector<4x16xbf16>, vector<16x16xbf16>, vector<4x16xf32> -> vector<4x16xf32>
    %163 = arith.addf %155, %162 : vector<4x16xf32>
    %c1_116 = arith.constant 1 : index
    %c3_117 = arith.constant 3 : index
    %c0_118 = arith.constant 0 : index
    %c0_119 = arith.constant 0 : index
    %164 = vector.load %arg3[%c1_116, %c3_117, %c0_118, %c0_119] : memref<2x7x16x16xbf16, #tpu.memory_space<vmem>>, vector<1x1x16x16xbf16>
    %165 = vector.shape_cast %164 : vector<1x1x16x16xbf16> to vector<16x16xbf16>
    %cst_120 = arith.constant dense<0.000000e+00> : vector<4x16xf32>
    %166 = tpu.matmul %159, %165, %cst_120 {dimension_numbers = #tpu.dot_dimension_numbers<[1], [0], [0], [1], [0, 0, 1, 1], [], []>} : vector<4x16xbf16>, vector<16x16xbf16>, vector<4x16xf32> -> vector<4x16xf32>
    %167 = arith.addf %163, %166 : vector<4x16xf32>
    %168 = vector.extract_strided_slice %116 {offsets = [0, 4, 0], sizes = [1, 4, 16], strides = [1, 1, 1]} : vector<1x10x16xbf16> to vector<1x4x16xbf16>
    %169 = vector.shape_cast %168 : vector<1x4x16xbf16> to vector<4x16xbf16>
    %170 = vector.extract_strided_slice %118 {offsets = [0, 4, 0], sizes = [1, 4, 16], strides = [1, 1, 1]} : vector<1x10x16xbf16> to vector<1x4x16xbf16>
    %171 = vector.shape_cast %170 : vector<1x4x16xbf16> to vector<4x16xbf16>
    %c0_121 = arith.constant 0 : index
    %c4_122 = arith.constant 4 : index
    %c0_123 = arith.constant 0 : index
    %c0_124 = arith.constant 0 : index
    %172 = vector.load %arg3[%c0_121, %c4_122, %c0_123, %c0_124] : memref<2x7x16x16xbf16, #tpu.memory_space<vmem>>, vector<1x1x16x16xbf16>
    %173 = vector.shape_cast %172 : vector<1x1x16x16xbf16> to vector<16x16xbf16>
    %cst_125 = arith.constant dense<0.000000e+00> : vector<4x16xf32>
    %174 = tpu.matmul %169, %173, %cst_125 {dimension_numbers = #tpu.dot_dimension_numbers<[1], [0], [0], [1], [0, 0, 1, 1], [], []>} : vector<4x16xbf16>, vector<16x16xbf16>, vector<4x16xf32> -> vector<4x16xf32>
    %175 = arith.addf %167, %174 : vector<4x16xf32>
    %c1_126 = arith.constant 1 : index
    %c4_127 = arith.constant 4 : index
    %c0_128 = arith.constant 0 : index
    %c0_129 = arith.constant 0 : index
    %176 = vector.load %arg3[%c1_126, %c4_127, %c0_128, %c0_129] : memref<2x7x16x16xbf16, #tpu.memory_space<vmem>>, vector<1x1x16x16xbf16>
    %177 = vector.shape_cast %176 : vector<1x1x16x16xbf16> to vector<16x16xbf16>
    %cst_130 = arith.constant dense<0.000000e+00> : vector<4x16xf32>
    %178 = tpu.matmul %171, %177, %cst_130 {dimension_numbers = #tpu.dot_dimension_numbers<[1], [0], [0], [1], [0, 0, 1, 1], [], []>} : vector<4x16xbf16>, vector<16x16xbf16>, vector<4x16xf32> -> vector<4x16xf32>
    %179 = arith.addf %175, %178 : vector<4x16xf32>
    %180 = vector.extract_strided_slice %116 {offsets = [0, 5, 0], sizes = [1, 4, 16], strides = [1, 1, 1]} : vector<1x10x16xbf16> to vector<1x4x16xbf16>
    %181 = vector.shape_cast %180 : vector<1x4x16xbf16> to vector<4x16xbf16>
    %182 = vector.extract_strided_slice %118 {offsets = [0, 5, 0], sizes = [1, 4, 16], strides = [1, 1, 1]} : vector<1x10x16xbf16> to vector<1x4x16xbf16>
    %183 = vector.shape_cast %182 : vector<1x4x16xbf16> to vector<4x16xbf16>
    %c0_131 = arith.constant 0 : index
    %c5_132 = arith.constant 5 : index
    %c0_133 = arith.constant 0 : index
    %c0_134 = arith.constant 0 : index
    %184 = vector.load %arg3[%c0_131, %c5_132, %c0_133, %c0_134] : memref<2x7x16x16xbf16, #tpu.memory_space<vmem>>, vector<1x1x16x16xbf16>
    %185 = vector.shape_cast %184 : vector<1x1x16x16xbf16> to vector<16x16xbf16>
    %cst_135 = arith.constant dense<0.000000e+00> : vector<4x16xf32>
    %186 = tpu.matmul %181, %185, %cst_135 {dimension_numbers = #tpu.dot_dimension_numbers<[1], [0], [0], [1], [0, 0, 1, 1], [], []>} : vector<4x16xbf16>, vector<16x16xbf16>, vector<4x16xf32> -> vector<4x16xf32>
    %187 = arith.addf %179, %186 : vector<4x16xf32>
    %c1_136 = arith.constant 1 : index
    %c5_137 = arith.constant 5 : index
    %c0_138 = arith.constant 0 : index
    %c0_139 = arith.constant 0 : index
    %188 = vector.load %arg3[%c1_136, %c5_137, %c0_138, %c0_139] : memref<2x7x16x16xbf16, #tpu.memory_space<vmem>>, vector<1x1x16x16xbf16>
    %189 = vector.shape_cast %188 : vector<1x1x16x16xbf16> to vector<16x16xbf16>
    %cst_140 = arith.constant dense<0.000000e+00> : vector<4x16xf32>
    %190 = tpu.matmul %183, %189, %cst_140 {dimension_numbers = #tpu.dot_dimension_numbers<[1], [0], [0], [1], [0, 0, 1, 1], [], []>} : vector<4x16xbf16>, vector<16x16xbf16>, vector<4x16xf32> -> vector<4x16xf32>
    %191 = arith.addf %187, %190 : vector<4x16xf32>
    %192 = vector.extract_strided_slice %116 {offsets = [0, 6, 0], sizes = [1, 4, 16], strides = [1, 1, 1]} : vector<1x10x16xbf16> to vector<1x4x16xbf16>
    %193 = vector.shape_cast %192 : vector<1x4x16xbf16> to vector<4x16xbf16>
    %194 = vector.extract_strided_slice %118 {offsets = [0, 6, 0], sizes = [1, 4, 16], strides = [1, 1, 1]} : vector<1x10x16xbf16> to vector<1x4x16xbf16>
    %195 = vector.shape_cast %194 : vector<1x4x16xbf16> to vector<4x16xbf16>
    %c0_141 = arith.constant 0 : index
    %c6_142 = arith.constant 6 : index
    %c0_143 = arith.constant 0 : index
    %c0_144 = arith.constant 0 : index
    %196 = vector.load %arg3[%c0_141, %c6_142, %c0_143, %c0_144] : memref<2x7x16x16xbf16, #tpu.memory_space<vmem>>, vector<1x1x16x16xbf16>
    %197 = vector.shape_cast %196 : vector<1x1x16x16xbf16> to vector<16x16xbf16>
    %cst_145 = arith.constant dense<0.000000e+00> : vector<4x16xf32>
    %198 = tpu.matmul %193, %197, %cst_145 {dimension_numbers = #tpu.dot_dimension_numbers<[1], [0], [0], [1], [0, 0, 1, 1], [], []>} : vector<4x16xbf16>, vector<16x16xbf16>, vector<4x16xf32> -> vector<4x16xf32>
    %199 = arith.addf %191, %198 : vector<4x16xf32>
    %c1_146 = arith.constant 1 : index
    %c6_147 = arith.constant 6 : index
    %c0_148 = arith.constant 0 : index
    %c0_149 = arith.constant 0 : index
    %200 = vector.load %arg3[%c1_146, %c6_147, %c0_148, %c0_149] : memref<2x7x16x16xbf16, #tpu.memory_space<vmem>>, vector<1x1x16x16xbf16>
    %201 = vector.shape_cast %200 : vector<1x1x16x16xbf16> to vector<16x16xbf16>
    %cst_150 = arith.constant dense<0.000000e+00> : vector<4x16xf32>
    %202 = tpu.matmul %195, %201, %cst_150 {dimension_numbers = #tpu.dot_dimension_numbers<[1], [0], [0], [1], [0, 0, 1, 1], [], []>} : vector<4x16xbf16>, vector<16x16xbf16>, vector<4x16xf32> -> vector<4x16xf32>
    %203 = arith.addf %199, %202 : vector<4x16xf32>
    %204 = vector.broadcast %113 : f32 to vector<4x16xf32>
    %205 = arith.addf %203, %204 : vector<4x16xf32>
    %206 = arith.negf %205 : vector<4x16xf32>
    %207 = math.exp %206 : vector<4x16xf32>
    %cst_151 = arith.constant 1.000000e+00 : f32
    %208 = vector.broadcast %cst_151 : f32 to vector<4x16xf32>
    %209 = arith.addf %208, %207 : vector<4x16xf32>
    %210 = arith.divf %208, %209 : vector<4x16xf32>
    %cst_152 = arith.constant 0.333333343 : f32
    %211 = vector.broadcast %cst_152 : f32 to vector<4x16xf32>
    %212 = arith.mulf %210, %211 : vector<4x16xf32>
    %213 = vector.shape_cast %212 : vector<4x16xf32> to vector<1x4x16xf32>
    %cst_153 = arith.constant 6.250000e-02 : f32
    %214 = vector.broadcast %cst_153 : f32 to vector<1x4x16xf32>
    %215 = arith.mulf %7, %214 : vector<1x4x16xf32>
    %c2_154 = arith.constant 2 : index
    %216 = memref.load %arg1[%c2_154] : memref<3xf32, #tpu.memory_space<smem>>
    %cst_155 = arith.constant 0.000000e+00 : bf16
    %217 = vector.broadcast %cst_155 : bf16 to vector<1x3x16xbf16>
    %218 = arith.truncf %6 : vector<1x4x16xf32> to vector<1x4x16xbf16>
    %219 = tpu.concatenate %217, %218, %217 in 1 : vector<1x3x16xbf16>, vector<1x4x16xbf16>, vector<1x3x16xbf16> -> vector<1x10x16xbf16>
    %220 = arith.truncf %215 : vector<1x4x16xf32> to vector<1x4x16xbf16>
    %221 = tpu.concatenate %217, %220, %217 in 1 : vector<1x3x16xbf16>, vector<1x4x16xbf16>, vector<1x3x16xbf16> -> vector<1x10x16xbf16>
    %cst_156 = arith.constant 0.000000e+00 : f32
    %222 = vector.broadcast %cst_156 : f32 to vector<4x16xf32>
    %223 = vector.extract_strided_slice %219 {offsets = [0, 0, 0], sizes = [1, 4, 16], strides = [1, 1, 1]} : vector<1x10x16xbf16> to vector<1x4x16xbf16>
    %224 = vector.shape_cast %223 : vector<1x4x16xbf16> to vector<4x16xbf16>
    %225 = vector.extract_strided_slice %221 {offsets = [0, 0, 0], sizes = [1, 4, 16], strides = [1, 1, 1]} : vector<1x10x16xbf16> to vector<1x4x16xbf16>
    %226 = vector.shape_cast %225 : vector<1x4x16xbf16> to vector<4x16xbf16>
    %c0_157 = arith.constant 0 : index
    %c0_158 = arith.constant 0 : index
    %c0_159 = arith.constant 0 : index
    %c0_160 = arith.constant 0 : index
    %227 = vector.load %arg4[%c0_157, %c0_158, %c0_159, %c0_160] : memref<2x7x16x16xbf16, #tpu.memory_space<vmem>>, vector<1x1x16x16xbf16>
    %228 = vector.shape_cast %227 : vector<1x1x16x16xbf16> to vector<16x16xbf16>
    %cst_161 = arith.constant dense<0.000000e+00> : vector<4x16xf32>
    %229 = tpu.matmul %224, %228, %cst_161 {dimension_numbers = #tpu.dot_dimension_numbers<[1], [0], [0], [1], [0, 0, 1, 1], [], []>} : vector<4x16xbf16>, vector<16x16xbf16>, vector<4x16xf32> -> vector<4x16xf32>
    %230 = arith.addf %222, %229 : vector<4x16xf32>
    %c1_162 = arith.constant 1 : index
    %c0_163 = arith.constant 0 : index
    %c0_164 = arith.constant 0 : index
    %c0_165 = arith.constant 0 : index
    %231 = vector.load %arg4[%c1_162, %c0_163, %c0_164, %c0_165] : memref<2x7x16x16xbf16, #tpu.memory_space<vmem>>, vector<1x1x16x16xbf16>
    %232 = vector.shape_cast %231 : vector<1x1x16x16xbf16> to vector<16x16xbf16>
    %cst_166 = arith.constant dense<0.000000e+00> : vector<4x16xf32>
    %233 = tpu.matmul %226, %232, %cst_166 {dimension_numbers = #tpu.dot_dimension_numbers<[1], [0], [0], [1], [0, 0, 1, 1], [], []>} : vector<4x16xbf16>, vector<16x16xbf16>, vector<4x16xf32> -> vector<4x16xf32>
    %234 = arith.addf %230, %233 : vector<4x16xf32>
    %235 = vector.extract_strided_slice %219 {offsets = [0, 1, 0], sizes = [1, 4, 16], strides = [1, 1, 1]} : vector<1x10x16xbf16> to vector<1x4x16xbf16>
    %236 = vector.shape_cast %235 : vector<1x4x16xbf16> to vector<4x16xbf16>
    %237 = vector.extract_strided_slice %221 {offsets = [0, 1, 0], sizes = [1, 4, 16], strides = [1, 1, 1]} : vector<1x10x16xbf16> to vector<1x4x16xbf16>
    %238 = vector.shape_cast %237 : vector<1x4x16xbf16> to vector<4x16xbf16>
    %c0_167 = arith.constant 0 : index
    %c1_168 = arith.constant 1 : index
    %c0_169 = arith.constant 0 : index
    %c0_170 = arith.constant 0 : index
    %239 = vector.load %arg4[%c0_167, %c1_168, %c0_169, %c0_170] : memref<2x7x16x16xbf16, #tpu.memory_space<vmem>>, vector<1x1x16x16xbf16>
    %240 = vector.shape_cast %239 : vector<1x1x16x16xbf16> to vector<16x16xbf16>
    %cst_171 = arith.constant dense<0.000000e+00> : vector<4x16xf32>
    %241 = tpu.matmul %236, %240, %cst_171 {dimension_numbers = #tpu.dot_dimension_numbers<[1], [0], [0], [1], [0, 0, 1, 1], [], []>} : vector<4x16xbf16>, vector<16x16xbf16>, vector<4x16xf32> -> vector<4x16xf32>
    %242 = arith.addf %234, %241 : vector<4x16xf32>
    %c1_172 = arith.constant 1 : index
    %c1_173 = arith.constant 1 : index
    %c0_174 = arith.constant 0 : index
    %c0_175 = arith.constant 0 : index
    %243 = vector.load %arg4[%c1_172, %c1_173, %c0_174, %c0_175] : memref<2x7x16x16xbf16, #tpu.memory_space<vmem>>, vector<1x1x16x16xbf16>
    %244 = vector.shape_cast %243 : vector<1x1x16x16xbf16> to vector<16x16xbf16>
    %cst_176 = arith.constant dense<0.000000e+00> : vector<4x16xf32>
    %245 = tpu.matmul %238, %244, %cst_176 {dimension_numbers = #tpu.dot_dimension_numbers<[1], [0], [0], [1], [0, 0, 1, 1], [], []>} : vector<4x16xbf16>, vector<16x16xbf16>, vector<4x16xf32> -> vector<4x16xf32>
    %246 = arith.addf %242, %245 : vector<4x16xf32>
    %247 = vector.extract_strided_slice %219 {offsets = [0, 2, 0], sizes = [1, 4, 16], strides = [1, 1, 1]} : vector<1x10x16xbf16> to vector<1x4x16xbf16>
    %248 = vector.shape_cast %247 : vector<1x4x16xbf16> to vector<4x16xbf16>
    %249 = vector.extract_strided_slice %221 {offsets = [0, 2, 0], sizes = [1, 4, 16], strides = [1, 1, 1]} : vector<1x10x16xbf16> to vector<1x4x16xbf16>
    %250 = vector.shape_cast %249 : vector<1x4x16xbf16> to vector<4x16xbf16>
    %c0_177 = arith.constant 0 : index
    %c2_178 = arith.constant 2 : index
    %c0_179 = arith.constant 0 : index
    %c0_180 = arith.constant 0 : index
    %251 = vector.load %arg4[%c0_177, %c2_178, %c0_179, %c0_180] : memref<2x7x16x16xbf16, #tpu.memory_space<vmem>>, vector<1x1x16x16xbf16>
    %252 = vector.shape_cast %251 : vector<1x1x16x16xbf16> to vector<16x16xbf16>
    %cst_181 = arith.constant dense<0.000000e+00> : vector<4x16xf32>
    %253 = tpu.matmul %248, %252, %cst_181 {dimension_numbers = #tpu.dot_dimension_numbers<[1], [0], [0], [1], [0, 0, 1, 1], [], []>} : vector<4x16xbf16>, vector<16x16xbf16>, vector<4x16xf32> -> vector<4x16xf32>
    %254 = arith.addf %246, %253 : vector<4x16xf32>
    %c1_182 = arith.constant 1 : index
    %c2_183 = arith.constant 2 : index
    %c0_184 = arith.constant 0 : index
    %c0_185 = arith.constant 0 : index
    %255 = vector.load %arg4[%c1_182, %c2_183, %c0_184, %c0_185] : memref<2x7x16x16xbf16, #tpu.memory_space<vmem>>, vector<1x1x16x16xbf16>
    %256 = vector.shape_cast %255 : vector<1x1x16x16xbf16> to vector<16x16xbf16>
    %cst_186 = arith.constant dense<0.000000e+00> : vector<4x16xf32>
    %257 = tpu.matmul %250, %256, %cst_186 {dimension_numbers = #tpu.dot_dimension_numbers<[1], [0], [0], [1], [0, 0, 1, 1], [], []>} : vector<4x16xbf16>, vector<16x16xbf16>, vector<4x16xf32> -> vector<4x16xf32>
    %258 = arith.addf %254, %257 : vector<4x16xf32>
    %259 = vector.extract_strided_slice %219 {offsets = [0, 3, 0], sizes = [1, 4, 16], strides = [1, 1, 1]} : vector<1x10x16xbf16> to vector<1x4x16xbf16>
    %260 = vector.shape_cast %259 : vector<1x4x16xbf16> to vector<4x16xbf16>
    %261 = vector.extract_strided_slice %221 {offsets = [0, 3, 0], sizes = [1, 4, 16], strides = [1, 1, 1]} : vector<1x10x16xbf16> to vector<1x4x16xbf16>
    %262 = vector.shape_cast %261 : vector<1x4x16xbf16> to vector<4x16xbf16>
    %c0_187 = arith.constant 0 : index
    %c3_188 = arith.constant 3 : index
    %c0_189 = arith.constant 0 : index
    %c0_190 = arith.constant 0 : index
    %263 = vector.load %arg4[%c0_187, %c3_188, %c0_189, %c0_190] : memref<2x7x16x16xbf16, #tpu.memory_space<vmem>>, vector<1x1x16x16xbf16>
    %264 = vector.shape_cast %263 : vector<1x1x16x16xbf16> to vector<16x16xbf16>
    %cst_191 = arith.constant dense<0.000000e+00> : vector<4x16xf32>
    %265 = tpu.matmul %260, %264, %cst_191 {dimension_numbers = #tpu.dot_dimension_numbers<[1], [0], [0], [1], [0, 0, 1, 1], [], []>} : vector<4x16xbf16>, vector<16x16xbf16>, vector<4x16xf32> -> vector<4x16xf32>
    %266 = arith.addf %258, %265 : vector<4x16xf32>
    %c1_192 = arith.constant 1 : index
    %c3_193 = arith.constant 3 : index
    %c0_194 = arith.constant 0 : index
    %c0_195 = arith.constant 0 : index
    %267 = vector.load %arg4[%c1_192, %c3_193, %c0_194, %c0_195] : memref<2x7x16x16xbf16, #tpu.memory_space<vmem>>, vector<1x1x16x16xbf16>
    %268 = vector.shape_cast %267 : vector<1x1x16x16xbf16> to vector<16x16xbf16>
    %cst_196 = arith.constant dense<0.000000e+00> : vector<4x16xf32>
    %269 = tpu.matmul %262, %268, %cst_196 {dimension_numbers = #tpu.dot_dimension_numbers<[1], [0], [0], [1], [0, 0, 1, 1], [], []>} : vector<4x16xbf16>, vector<16x16xbf16>, vector<4x16xf32> -> vector<4x16xf32>
    %270 = arith.addf %266, %269 : vector<4x16xf32>
    %271 = vector.extract_strided_slice %219 {offsets = [0, 4, 0], sizes = [1, 4, 16], strides = [1, 1, 1]} : vector<1x10x16xbf16> to vector<1x4x16xbf16>
    %272 = vector.shape_cast %271 : vector<1x4x16xbf16> to vector<4x16xbf16>
    %273 = vector.extract_strided_slice %221 {offsets = [0, 4, 0], sizes = [1, 4, 16], strides = [1, 1, 1]} : vector<1x10x16xbf16> to vector<1x4x16xbf16>
    %274 = vector.shape_cast %273 : vector<1x4x16xbf16> to vector<4x16xbf16>
    %c0_197 = arith.constant 0 : index
    %c4_198 = arith.constant 4 : index
    %c0_199 = arith.constant 0 : index
    %c0_200 = arith.constant 0 : index
    %275 = vector.load %arg4[%c0_197, %c4_198, %c0_199, %c0_200] : memref<2x7x16x16xbf16, #tpu.memory_space<vmem>>, vector<1x1x16x16xbf16>
    %276 = vector.shape_cast %275 : vector<1x1x16x16xbf16> to vector<16x16xbf16>
    %cst_201 = arith.constant dense<0.000000e+00> : vector<4x16xf32>
    %277 = tpu.matmul %272, %276, %cst_201 {dimension_numbers = #tpu.dot_dimension_numbers<[1], [0], [0], [1], [0, 0, 1, 1], [], []>} : vector<4x16xbf16>, vector<16x16xbf16>, vector<4x16xf32> -> vector<4x16xf32>
    %278 = arith.addf %270, %277 : vector<4x16xf32>
    %c1_202 = arith.constant 1 : index
    %c4_203 = arith.constant 4 : index
    %c0_204 = arith.constant 0 : index
    %c0_205 = arith.constant 0 : index
    %279 = vector.load %arg4[%c1_202, %c4_203, %c0_204, %c0_205] : memref<2x7x16x16xbf16, #tpu.memory_space<vmem>>, vector<1x1x16x16xbf16>
    %280 = vector.shape_cast %279 : vector<1x1x16x16xbf16> to vector<16x16xbf16>
    %cst_206 = arith.constant dense<0.000000e+00> : vector<4x16xf32>
    %281 = tpu.matmul %274, %280, %cst_206 {dimension_numbers = #tpu.dot_dimension_numbers<[1], [0], [0], [1], [0, 0, 1, 1], [], []>} : vector<4x16xbf16>, vector<16x16xbf16>, vector<4x16xf32> -> vector<4x16xf32>
    %282 = arith.addf %278, %281 : vector<4x16xf32>
    %283 = vector.extract_strided_slice %219 {offsets = [0, 5, 0], sizes = [1, 4, 16], strides = [1, 1, 1]} : vector<1x10x16xbf16> to vector<1x4x16xbf16>
    %284 = vector.shape_cast %283 : vector<1x4x16xbf16> to vector<4x16xbf16>
    %285 = vector.extract_strided_slice %221 {offsets = [0, 5, 0], sizes = [1, 4, 16], strides = [1, 1, 1]} : vector<1x10x16xbf16> to vector<1x4x16xbf16>
    %286 = vector.shape_cast %285 : vector<1x4x16xbf16> to vector<4x16xbf16>
    %c0_207 = arith.constant 0 : index
    %c5_208 = arith.constant 5 : index
    %c0_209 = arith.constant 0 : index
    %c0_210 = arith.constant 0 : index
    %287 = vector.load %arg4[%c0_207, %c5_208, %c0_209, %c0_210] : memref<2x7x16x16xbf16, #tpu.memory_space<vmem>>, vector<1x1x16x16xbf16>
    %288 = vector.shape_cast %287 : vector<1x1x16x16xbf16> to vector<16x16xbf16>
    %cst_211 = arith.constant dense<0.000000e+00> : vector<4x16xf32>
    %289 = tpu.matmul %284, %288, %cst_211 {dimension_numbers = #tpu.dot_dimension_numbers<[1], [0], [0], [1], [0, 0, 1, 1], [], []>} : vector<4x16xbf16>, vector<16x16xbf16>, vector<4x16xf32> -> vector<4x16xf32>
    %290 = arith.addf %282, %289 : vector<4x16xf32>
    %c1_212 = arith.constant 1 : index
    %c5_213 = arith.constant 5 : index
    %c0_214 = arith.constant 0 : index
    %c0_215 = arith.constant 0 : index
    %291 = vector.load %arg4[%c1_212, %c5_213, %c0_214, %c0_215] : memref<2x7x16x16xbf16, #tpu.memory_space<vmem>>, vector<1x1x16x16xbf16>
    %292 = vector.shape_cast %291 : vector<1x1x16x16xbf16> to vector<16x16xbf16>
    %cst_216 = arith.constant dense<0.000000e+00> : vector<4x16xf32>
    %293 = tpu.matmul %286, %292, %cst_216 {dimension_numbers = #tpu.dot_dimension_numbers<[1], [0], [0], [1], [0, 0, 1, 1], [], []>} : vector<4x16xbf16>, vector<16x16xbf16>, vector<4x16xf32> -> vector<4x16xf32>
    %294 = arith.addf %290, %293 : vector<4x16xf32>
    %295 = vector.extract_strided_slice %219 {offsets = [0, 6, 0], sizes = [1, 4, 16], strides = [1, 1, 1]} : vector<1x10x16xbf16> to vector<1x4x16xbf16>
    %296 = vector.shape_cast %295 : vector<1x4x16xbf16> to vector<4x16xbf16>
    %297 = vector.extract_strided_slice %221 {offsets = [0, 6, 0], sizes = [1, 4, 16], strides = [1, 1, 1]} : vector<1x10x16xbf16> to vector<1x4x16xbf16>
    %298 = vector.shape_cast %297 : vector<1x4x16xbf16> to vector<4x16xbf16>
    %c0_217 = arith.constant 0 : index
    %c6_218 = arith.constant 6 : index
    %c0_219 = arith.constant 0 : index
    %c0_220 = arith.constant 0 : index
    %299 = vector.load %arg4[%c0_217, %c6_218, %c0_219, %c0_220] : memref<2x7x16x16xbf16, #tpu.memory_space<vmem>>, vector<1x1x16x16xbf16>
    %300 = vector.shape_cast %299 : vector<1x1x16x16xbf16> to vector<16x16xbf16>
    %cst_221 = arith.constant dense<0.000000e+00> : vector<4x16xf32>
    %301 = tpu.matmul %296, %300, %cst_221 {dimension_numbers = #tpu.dot_dimension_numbers<[1], [0], [0], [1], [0, 0, 1, 1], [], []>} : vector<4x16xbf16>, vector<16x16xbf16>, vector<4x16xf32> -> vector<4x16xf32>
    %302 = arith.addf %294, %301 : vector<4x16xf32>
    %c1_222 = arith.constant 1 : index
    %c6_223 = arith.constant 6 : index
    %c0_224 = arith.constant 0 : index
    %c0_225 = arith.constant 0 : index
    %303 = vector.load %arg4[%c1_222, %c6_223, %c0_224, %c0_225] : memref<2x7x16x16xbf16, #tpu.memory_space<vmem>>, vector<1x1x16x16xbf16>
    %304 = vector.shape_cast %303 : vector<1x1x16x16xbf16> to vector<16x16xbf16>
    %cst_226 = arith.constant dense<0.000000e+00> : vector<4x16xf32>
    %305 = tpu.matmul %298, %304, %cst_226 {dimension_numbers = #tpu.dot_dimension_numbers<[1], [0], [0], [1], [0, 0, 1, 1], [], []>} : vector<4x16xbf16>, vector<16x16xbf16>, vector<4x16xf32> -> vector<4x16xf32>
    %306 = arith.addf %302, %305 : vector<4x16xf32>
    %307 = vector.broadcast %216 : f32 to vector<4x16xf32>
    %308 = arith.addf %306, %307 : vector<4x16xf32>
    %309 = arith.negf %308 : vector<4x16xf32>
    %310 = math.exp %309 : vector<4x16xf32>
    %cst_227 = arith.constant 1.000000e+00 : f32
    %311 = vector.broadcast %cst_227 : f32 to vector<4x16xf32>
    %312 = arith.addf %311, %310 : vector<4x16xf32>
    %313 = arith.divf %311, %312 : vector<4x16xf32>
    %cst_228 = arith.constant 0.333333343 : f32
    %314 = vector.broadcast %cst_228 : f32 to vector<4x16xf32>
    %315 = arith.mulf %313, %314 : vector<4x16xf32>
    %316 = vector.shape_cast %315 : vector<4x16xf32> to vector<1x4x16xf32>
    %317 = vector.shape_cast %110 : vector<1x16x16xf32> to vector<1x1x16x16xf32>
    %318 = vector.shape_cast %213 : vector<1x4x16xf32> to vector<1x4x1x16xf32>
    %319 = vector.broadcast %317 : vector<1x1x16x16xf32> to vector<1x4x16x16xf32>
    %320 = vector.broadcast %318 : vector<1x4x1x16xf32> to vector<1x4x16x16xf32>
    %321 = arith.addf %319, %320 : vector<1x4x16x16xf32>
    %322 = vector.shape_cast %316 : vector<1x4x16xf32> to vector<1x4x16x1xf32>
    %323 = vector.broadcast %322 : vector<1x4x16x1xf32> to vector<1x4x16x16xf32>
    %324 = arith.addf %321, %323 : vector<1x4x16x16xf32>
    %325 = vector.shape_cast %324 : vector<1x4x16x16xf32> to vector<1x4x256xf32>
    %c0_229 = arith.constant 0 : index
    %c0_230 = arith.constant 0 : index
    %c0_231 = arith.constant 0 : index
    %326 = vector.load %arg5[%c0_229, %c0_230, %c0_231] : memref<1x4x256xf32, #tpu.memory_space<vmem>>, vector<1x4x256xf32>
    %327 = arith.mulf %326, %325 : vector<1x4x256xf32>
    %c0_232 = arith.constant 0 : index
    %c0_233 = arith.constant 0 : index
    %c0_234 = arith.constant 0 : index
    %328 = vector.load %arg6[%c0_232, %c0_233, %c0_234] : memref<1x4x256xf32, #tpu.memory_space<vmem>>, vector<1x4x256xf32>
    tpu.vector_store %arg6[%c0_232, %c0_233, %c0_234], %327 {strides = array<i32>} : memref<1x4x256xf32, #tpu.memory_space<vmem>>, vector<1x4x256xf32>,
    return
  }
  func.func @transform_0(%arg0: i32) -> i32 {
    %c0_i32 = arith.constant 0 : i32
    %c0_i32_0 = arith.constant 0 : i32
    return %c0_i32 : i32
  }
  func.func @transform_1(%arg0: i32) -> (i32, i32, i32, i32) {
    %c0_i32 = arith.constant 0 : i32
    %c0_i32_0 = arith.constant 0 : i32
    %c0_i32_1 = arith.constant 0 : i32
    %c0_i32_2 = arith.constant 0 : i32
    %c0_i32_3 = arith.constant 0 : i32
    return %c0_i32, %c0_i32_0, %c0_i32_1, %c0_i32_2 : i32, i32, i32, i32
  }
  func.func @transform_2(%arg0: i32) -> (i32, i32, i32, i32) {
    %c0_i32 = arith.constant 0 : i32
    %c0_i32_0 = arith.constant 0 : i32
    %c0_i32_1 = arith.constant 0 : i32
    %c0_i32_2 = arith.constant 0 : i32
    %c0_i32_3 = arith.constant 0 : i32
    return %c0_i32, %c0_i32_0, %c0_i32_1, %c0_i32_2 : i32, i32, i32, i32
  }
  func.func @transform_3(%arg0: i32) -> (i32, i32, i32, i32) {
    %c0_i32 = arith.constant 0 : i32
    %c0_i32_0 = arith.constant 0 : i32
    %c0_i32_1 = arith.constant 0 : i32
    %c0_i32_2 = arith.constant 0 : i32
    %c0_i32_3 = arith.constant 0 : i32
    return %c0_i32, %c0_i32_0, %c0_i32_1, %c0_i32_2 : i32, i32, i32, i32
  }
  func.func @transform_4(%arg0: i32) -> (i32, i32, i32) {
    %c0_i32 = arith.constant 0 : i32
    %c0_i32_0 = arith.constant 0 : i32
    %c0_i32_1 = arith.constant 0 : i32
    return %arg0, %c0_i32, %c0_i32_0 : i32, i32, i32
  }
  func.func @transform_5(%arg0: i32) -> (i32, i32, i32) {
    %c0_i32 = arith.constant 0 : i32
    %c0_i32_0 = arith.constant 0 : i32
    %c0_i32_1 = arith.constant 0 : i32
    return %arg0, %c0_i32, %c0_i32_0 : i32, i32, i32
  }
}

</mosaic_0001>

<llo_original>
// kernel: tpu_custom_call.1
$region0: #{tpu_custom_call.1}
  #allocation0 [shape = 'u32[]', space=smem, size = 0x4, offset = 0x4, fixed_abs, tag = 'smem constant byte address 0x4 - core index']
  #allocation1 [shape = 'u32[144,128]{1,0:T(1,128)}', space=vmem, size = 0x12000, scoped, tag = 'internal scratch']
  %s0 = inlined_call_operand.hbm [shape: f32[3], index: 0, kind: input, shape index: {}]
  %s1 = inlined_call_operand.hbm [shape: bf16[2,7,16,16], index: 1, kind: input, shape index: {}]
  %s2 = inlined_call_operand.hbm [shape: bf16[2,7,16,16], index: 2, kind: input, shape index: {}]
  %s3 = inlined_call_operand.hbm [shape: bf16[2,7,16,16], index: 3, kind: input, shape index: {}]
  %s4 = inlined_call_operand.hbm [shape: f32[2,4,256], index: 4, kind: input, shape index: {}]
  %s5 = inlined_call_operand.hbm [shape: f32[2,4,256], index: 5, kind: output, shape index: {}]
  %s6 = sld [smem:[#allocation0]]
  $region73: #{tpu_custom_call.1} parent=0
    _
  %s8 = ssub.s32 1, %s6
  %s9 = scalar_select 0, %s8, %s6
  $region1: #{tpu_custom_call.1} parent=0
    #allocation2 [shape = 'u8[512]{0}', space=smem, size = 0x200, scoped, tag = 'input window, operand 0, single buffered']
    #allocation3 [shape = 's32[2]{0}', space=sflag, size = 0x8, scoped, tag = 'scoped memory for tpu_custom_call.1']
    #allocation4 [shape = 's32[2]{0}', space=sflag, size = 0x8, scoped, tag = 'scoped memory for tpu_custom_call.1']
    #allocation5 [shape = 's32[2]{0}', space=sflag, size = 0x8, scoped, tag = 'scoped memory for tpu_custom_call.1']
    #allocation6 [shape = 'u8[57344]{0}', space=vmem, size = 0xe000, scoped, tag = 'input window, operand 1, single buffered']
    #allocation7 [shape = 'u8[57344]{0}', space=vmem, size = 0xe000, scoped, tag = 'input window, operand 2, single buffered']
    #allocation8 [shape = 's32[1]{0}', space=sflag, size = 0x4, scoped, tag = 'scoped memory for tpu_custom_call.1']
    #allocation9 [shape = 'u8[57344]{0}', space=vmem, size = 0xe000, scoped, tag = 'input window, operand 3, single buffered']
    #allocation10 [shape = 'u8[8192]{0}', space=vmem, size = 0x2000, scoped, tag = 'input window, operand 4']
    #allocation11 [shape = 's32[2]{0}', space=sflag, size = 0x8, scoped, tag = 'scoped memory for tpu_custom_call.1']
    #allocation12 [shape = 'u8[8192]{0}', space=vmem, size = 0x2000, scoped, tag = 'output window, operand 0']
    %10 = vsyncpa [#allocation5], 0
    %11 = vsyncpa [#allocation3], 0
    %12 = vsyncpa [#allocation8], 0
    %13 = vsyncpa [#allocation11], 0
    %s14 = scalar_lea.sflag [#allocation11], 1
    %15 = vsyncpa %s14, 0
    %16 = vsyncpa [#allocation4], 0
    %s17 = scalar_lea.sflag [#allocation4], 1
    %18 = vsyncpa %s17, 0
    loop: start=0, step=1, limit=4
    $region2: #{tpu_custom_call.1} parent=1 // loop_pre_header
      _
    $region3: #{tpu_custom_call.1} parent=1 // loop_header
      %s20 = sphi 0, %s24
      %p21 = scmp.ge.s32.totalorder %s20, 4
      %s28 = sphi 0, %s28
      %s30 = sphi 0, %s28
      %s31 = sphi 0, %s30
      %s45 = sphi 0, %s31
      %s49 = sphi 0, %s49
      %s51 = sphi 0, %s49
      %s52 = sphi 0, %s51
      %s66 = sphi 0, %s52
      %s70 = sphi 0, %s70
      %s72 = sphi 0, %s70
      %s73 = sphi 0, %s72
      %s87 = sphi 0, %s73
      %s91 = sphi 0, %s91
      %s93 = sphi 0, %s91
      %s94 = sphi 0, %s93
      %s108 = sphi 0, %s94
      %s114 = sphi 0, %s116
      %s117 = sphi 0, %s114
      %s118 = sphi 0, %s117
      %s134 = sphi 0, %s118
      %s140 = sphi 0, %s142
      %s143 = sphi 0, %s140
      %s144 = sphi 0, %s143
      %s160 = sphi 0, %s144
    $region4: #{tpu_custom_call.1} parent=1 // loop_header_branch
      %23 = sbr.rel (%p21) target = $region8
    $region5: #{tpu_custom_call.1} parent=1 // loop_body
      %s25 = ssub.s32 %s20, 1
      %s26 = ssub.s32 %s20, 2
      %s27 = sadd.s32 %s20, 1
      %s29 = sadd.s32 %s28, 1
      %p32 = scmp.eq.s32.totalorder %s20, 1
      %p33 = scmp.ne.s32.totalorder %s28, %s30
      %p34 = scmp.eq.s32.totalorder %s20, 0
      %p35 = por %p33, %p34
      %p36 = scmp.ne.s32.totalorder %s28, %s30
      %p37 = scmp.eq.s32.totalorder %s25, 1
      %p38 = por %p36, %p37
      %p39 = scmp.ne.s32.totalorder %s30, %s31
      %p40 = scmp.eq.s32.totalorder %s25, 0
      %p41 = por %p39, %p40
      %p42 = scmp.ne.s32.totalorder %s30, %s31
      %p43 = scmp.eq.s32.totalorder %s26, 1
      %p44 = por %p42, %p43
      %p46 = scmp.ne.s32.totalorder %s31, %s45
      %p47 = scmp.eq.s32.totalorder %s26, 0
      %p48 = por %p46, %p47
      %s50 = sadd.s32 %s49, 1
      %p53 = scmp.eq.s32.totalorder %s20, 1
      %p54 = scmp.ne.s32.totalorder %s49, %s51
      %p55 = scmp.eq.s32.totalorder %s20, 0
      %p56 = por %p54, %p55
      %p57 = scmp.ne.s32.totalorder %s49, %s51
      %p58 = scmp.eq.s32.totalorder %s25, 1
      %p59 = por %p57, %p58
      %p60 = scmp.ne.s32.totalorder %s51, %s52
      %p61 = scmp.eq.s32.totalorder %s25, 0
      %p62 = por %p60, %p61
      %p63 = scmp.ne.s32.totalorder %s51, %s52
      %p64 = scmp.eq.s32.totalorder %s26, 1
      %p65 = por %p63, %p64
      %p67 = scmp.ne.s32.totalorder %s52, %s66
      %p68 = scmp.eq.s32.totalorder %s26, 0
      %p69 = por %p67, %p68
      %s71 = sadd.s32 %s70, 1
      %p74 = scmp.eq.s32.totalorder %s20, 1
      %p75 = scmp.ne.s32.totalorder %s70, %s72
      %p76 = scmp.eq.s32.totalorder %s20, 0
      %p77 = por %p75, %p76
      %p78 = scmp.ne.s32.totalorder %s70, %s72
      %p79 = scmp.eq.s32.totalorder %s25, 1
      %p80 = por %p78, %p79
      %p81 = scmp.ne.s32.totalorder %s72, %s73
      %p82 = scmp.eq.s32.totalorder %s25, 0
      %p83 = por %p81, %p82
      %p84 = scmp.ne.s32.totalorder %s72, %s73
      %p85 = scmp.eq.s32.totalorder %s26, 1
      %p86 = por %p84, %p85
      %p88 = scmp.ne.s32.totalorder %s73, %s87
      %p89 = scmp.eq.s32.totalorder %s26, 0
      %p90 = por %p88, %p89
      %s92 = sadd.s32 %s91, 1
      %p95 = scmp.eq.s32.totalorder %s20, 1
      %p96 = scmp.ne.s32.totalorder %s91, %s93
      %p97 = scmp.eq.s32.totalorder %s20, 0
      %p98 = por %p96, %p97
      %p99 = scmp.ne.s32.totalorder %s91, %s93
      %p100 = scmp.eq.s32.totalorder %s25, 1
      %p101 = por %p99, %p100
      %p102 = scmp.ne.s32.totalorder %s93, %s94
      %p103 = scmp.eq.s32.totalorder %s25, 0
      %p104 = por %p102, %p103
      %p105 = scmp.ne.s32.totalorder %s93, %s94
      %p106 = scmp.eq.s32.totalorder %s26, 1
      %p107 = por %p105, %p106
      %p109 = scmp.ne.s32.totalorder %s94, %s108
      %p110 = scmp.eq.s32.totalorder %s26, 0
      %p111 = por %p109, %p110
      %s112 = ssub.s32 %s20, %s27
      %p113 = scmp.eq.s32.totalorder %s112, 0
      %s115 = sadd.s32 %s114, 1
      %s116 = scalar_select %p113, %s114, %s115
      %p119 = pneg %p113
      %p120 = scmp.eq.s32.totalorder %s20, 1
      %p121 = por %p119, %p120
      %p122 = scmp.ne.s32.totalorder %s114, %s117
      %p123 = scmp.eq.s32.totalorder %s20, 0
      %p124 = por %p122, %p123
      %p125 = scmp.ne.s32.totalorder %s114, %s117
      %p126 = scmp.eq.s32.totalorder %s25, 1
      %p127 = por %p125, %p126
      %p128 = scmp.ne.s32.totalorder %s117, %s118
      %p129 = scmp.eq.s32.totalorder %s25, 0
      %p130 = por %p128, %p129
      %p131 = scmp.ne.s32.totalorder %s117, %s118
      %p132 = scmp.eq.s32.totalorder %s26, 1
      %p133 = por %p131, %p132
      %p135 = scmp.ne.s32.totalorder %s118, %s134
      %p136 = scmp.eq.s32.totalorder %s26, 0
      %p137 = por %p135, %p136
      %s138 = ssub.s32 %s20, %s27
      %p139 = scmp.eq.s32.totalorder %s138, 0
      %s141 = sadd.s32 %s140, 1
      %s142 = scalar_select %p139, %s140, %s141
      %p145 = pneg %p139
      %p146 = scmp.eq.s32.totalorder %s20, 1
      %p147 = por %p145, %p146
      %p148 = scmp.ne.s32.totalorder %s140, %s143
      %p149 = scmp.eq.s32.totalorder %s20, 0
      %p150 = por %p148, %p149
      %p151 = scmp.ne.s32.totalorder %s140, %s143
      %p152 = scmp.eq.s32.totalorder %s25, 1
      %p153 = por %p151, %p152
      %p154 = scmp.ne.s32.totalorder %s143, %s144
      %p155 = scmp.eq.s32.totalorder %s25, 0
      %p156 = por %p154, %p155
      %p157 = scmp.ne.s32.totalorder %s143, %s144
      %p158 = scmp.eq.s32.totalorder %s26, 1
      %p159 = por %p157, %p158
      %p161 = scmp.ne.s32.totalorder %s144, %s160
      %p162 = scmp.eq.s32.totalorder %s26, 0
      %p163 = por %p161, %p162
      %p164 = scmp.le.s32.totalorder 1, %s20
      %p165 = scmp.lt.s32.totalorder %s20, 3
      %p166 = pnand %p164, %p165
      %p167 = pneg %p166
      // Predicated region
      $region9: #{tpu_custom_call.1} parent=5 // pred_check
        _
      $region10: #{tpu_custom_call.1} parent=5 // pred_check_branch
        %169 = sbr.rel (%p166) target = $region12
      $region11: #{tpu_custom_call.1} parent=5 // pred_region
        %s170 = ssub.s32 %s20, 1
        // Predicated region
        $region13: #{tpu_custom_call.1} parent=11 // pred_check
          %p171 = pneg %p41
        $region14: #{tpu_custom_call.1} parent=11 // pred_check_branch
          %173 = sbr.rel (%p171) target = $region16
        $region15: #{tpu_custom_call.1} parent=11 // pred_region
          %s175 = ssub.s32 16, 16
          %176 = vsyncadd [#allocation5], %s175
          %179 = dma.hbm_to_smem %s0, 16, [#allocation2], [#allocation5]
        $region16: #{tpu_custom_call.1} parent=11 // pred_fallthru
          _
        // Predicated region
        $region17: #{tpu_custom_call.1} parent=11 // pred_check
          %p180 = pneg %p62
        $region18: #{tpu_custom_call.1} parent=11 // pred_check_branch
          %182 = sbr.rel (%p180) target = $region20
        $region19: #{tpu_custom_call.1} parent=11 // pred_region
          %s184 = ssub.s32 1792, 1792
          %185 = vsyncadd [#allocation3], %s184
          %s186 = sshll.u32 [#allocation6], 4
          %s187 = int_to_ptr.vmem [resolvable:$true] %s186
          %192 = dma.hbm_to_vmem [thread:$0]  %s1, 1792, %s187, [#allocation3], 64, 64, 4
        $region20: #{tpu_custom_call.1} parent=11 // pred_fallthru
          _
        // Predicated region
        $region21: #{tpu_custom_call.1} parent=11 // pred_check
          %p193 = pneg %p83
        $region22: #{tpu_custom_call.1} parent=11 // pred_check_branch
          %195 = sbr.rel (%p193) target = $region24
        $region23: #{tpu_custom_call.1} parent=11 // pred_region
          %s197 = ssub.s32 1792, 1792
          %198 = vsyncadd [#allocation8], %s197
          %s199 = sshll.u32 [#allocation7], 4
          %s200 = int_to_ptr.vmem [resolvable:$true] %s199
          %205 = dma.hbm_to_vmem [thread:$0]  %s2, 1792, %s200, [#allocation8], 64, 64, 4
        $region24: #{tpu_custom_call.1} parent=11 // pred_fallthru
          _
        // Predicated region
        $region25: #{tpu_custom_call.1} parent=11 // pred_check
          %p206 = pneg %p104
        $region26: #{tpu_custom_call.1} parent=11 // pred_check_branch
          %208 = sbr.rel (%p206) target = $region28
        $region27: #{tpu_custom_call.1} parent=11 // pred_region
          %s210 = ssub.s32 1792, 1792
          %211 = vsyncadd [#allocation8], %s210
          %s212 = sshll.u32 [#allocation9], 4
          %s213 = int_to_ptr.vmem [resolvable:$true] %s212
          %218 = dma.hbm_to_vmem [thread:$0]  %s3, 1792, %s213, [#allocation8], 64, 64, 4
        $region28: #{tpu_custom_call.1} parent=11 // pred_fallthru
          _
      $region12: #{tpu_custom_call.1} parent=5 // pred_fallthru
        _
      %p219 = scmp.lt.s32.totalorder %s20, 2
      // Predicated region
      $region29: #{tpu_custom_call.1} parent=5 // pred_check
        %p220 = pneg %p219
      $region30: #{tpu_custom_call.1} parent=5 // pred_check_branch
        %222 = sbr.rel (%p220) target = $region32
      $region31: #{tpu_custom_call.1} parent=5 // pred_region
        // Predicated region
        $region33: #{tpu_custom_call.1} parent=31 // pred_check
          %p223 = pneg %p124
        $region34: #{tpu_custom_call.1} parent=31 // pred_check_branch
          %225 = sbr.rel (%p223) target = $region36
        $region35: #{tpu_custom_call.1} parent=31 // pred_region
          %s226 = sand.u32 %s114, 1
          %s227 = scalar_lea.sflag [#allocation11], %s226
          %s228 = sand.u32 %s114, 1
          %s229 = smul.addr %s228, 8
          %s230 = scalar_lea.vmem [#allocation10], %s229
          %s232 = ssub.s32 128, 128
          %233 = vsyncadd %s227, %s232
          %s234 = smul.addr %s20, 2
          %s235 = smul.addr %s234, 64
          %s236 = scalar_lea.hbm %s4, %s235
          %s238 = sshll.u32 %s230, 4
          %s239 = int_to_ptr.vmem [resolvable:$true] %s238
          %241 = dma.hbm_to_vmem [thread:$0]  %s236, 128, %s239, %s227
        $region36: #{tpu_custom_call.1} parent=31 // pred_fallthru
          _
      $region32: #{tpu_custom_call.1} parent=5 // pred_fallthru
        _
      %p242 = scmp.le.s32.totalorder 1, %s20
      %p243 = scmp.lt.s32.totalorder %s20, 3
      %p244 = pnand %p242, %p243
      %p245 = pneg %p244
      // Predicated region
      $region37: #{tpu_custom_call.1} parent=5 // pred_check
        _
      $region38: #{tpu_custom_call.1} parent=5 // pred_check_branch
        %247 = sbr.rel (%p244) target = $region40
      $region39: #{tpu_custom_call.1} parent=5 // pred_region
        %s248 = ssub.s32 %s20, 1
        // Predicated region
        $region41: #{tpu_custom_call.1} parent=39 // pred_check
          %p249 = pneg %p41
        $region42: #{tpu_custom_call.1} parent=39 // pred_check_branch
          %251 = sbr.rel (%p249) target = $region44
        $region43: #{tpu_custom_call.1} parent=39 // pred_region
          %252 = dma.done [#allocation5], 16
        $region44: #{tpu_custom_call.1} parent=39 // pred_fallthru
          _
        // Predicated region
        $region45: #{tpu_custom_call.1} parent=39 // pred_check
          %p253 = pneg %p62
        $region46: #{tpu_custom_call.1} parent=39 // pred_check_branch
          %255 = sbr.rel (%p253) target = $region48
        $region47: #{tpu_custom_call.1} parent=39 // pred_region
          %256 = dma.done [#allocation3], 1792
        $region48: #{tpu_custom_call.1} parent=39 // pred_fallthru
          _
        // Predicated region
        $region49: #{tpu_custom_call.1} parent=39 // pred_check
          %p257 = pneg %p83
        $region50: #{tpu_custom_call.1} parent=39 // pred_check_branch
          %259 = sbr.rel (%p257) target = $region52
        $region51: #{tpu_custom_call.1} parent=39 // pred_region
          %260 = dma.done [#allocation8], 1792
        $region52: #{tpu_custom_call.1} parent=39 // pred_fallthru
          _
        // Predicated region
        $region53: #{tpu_custom_call.1} parent=39 // pred_check
          %p261 = pneg %p104
        $region54: #{tpu_custom_call.1} parent=39 // pred_check_branch
          %263 = sbr.rel (%p261) target = $region56
        $region55: #{tpu_custom_call.1} parent=39 // pred_region
          %264 = dma.done [#allocation8], 1792
        $region56: #{tpu_custom_call.1} parent=39 // pred_fallthru
          _
        %s265 = sand.u32 %s117, 1
        %s266 = scalar_lea.sflag [#allocation11], %s265
        %s267 = sand.u32 %s117, 1
        %s268 = smul.addr %s267, 8
        %s269 = scalar_lea.vmem [#allocation10], %s268
        // Predicated region
        $region57: #{tpu_custom_call.1} parent=39 // pred_check
          %p270 = pneg %p130
        $region58: #{tpu_custom_call.1} parent=39 // pred_check_branch
          %272 = sbr.rel (%p270) target = $region60
        $region59: #{tpu_custom_call.1} parent=39 // pred_region
          %273 = dma.done %s266, 128
        $region60: #{tpu_custom_call.1} parent=39 // pred_fallthru
          _
        %274 = sfence
        %p275 = pneg %p41
        %p276 = pneg %p38
        %p277 = pneg %p62
        %p278 = pneg %p59
        %p279 = pneg %p83
        %p280 = pneg %p80
        %p281 = pneg %p104
        %p282 = pneg %p101
        %s283 = sand.u32 %s117, 1
        %s284 = scalar_lea.sflag [#allocation11], %s283
        %s285 = sand.u32 %s117, 1
        %s286 = smul.addr %s285, 8
        %s287 = scalar_lea.vmem [#allocation10], %s286
        %p288 = pneg %p130
        %p289 = pneg %p127
        %p290 = pneg %p156
        %p291 = pneg %p153
        %s292 = sand.u32 %s143, 1
        %s293 = scalar_lea.sflag [#allocation4], %s292
        %s294 = sand.u32 %s143, 1
        %s295 = smul.addr %s294, 8
        %s296 = scalar_lea.vmem [#allocation12], %s295
        %v298 = vld [vmem:[%s269] sm:$0xff]
        %v300 = vrot.slane %v298, 4
        %302 = vrot.lane.b32.xlu0 %v298, 112
        %v303 = vpop.permute.xlu0 %302
        %v304 = vrot.slane %v303, 4
        %306 = vrot.lane.b32.xlu0 %v298, 96
        %v307 = vpop.permute.xlu0 %306
        %v308 = vrot.slane %v307, 4
        %310 = vrot.lane.b32.xlu0 %v298, 80
        %v311 = vpop.permute.xlu0 %310
        %v312 = vrot.slane %v311, 4
        %314 = vrot.lane.b32.xlu0 %v298, 64
        %v315 = vpop.permute.xlu0 %314
        %v316 = vrot.slane %v315, 4
        %318 = vrot.lane.b32.xlu0 %v298, 48
        %v319 = vpop.permute.xlu0 %318
        %v320 = vrot.slane %v319, 4
        %322 = vrot.lane.b32.xlu0 %v298, 32
        %v323 = vpop.permute.xlu0 %322
        %v324 = vrot.slane %v323, 4
        %326 = vrot.lane.b32.xlu0 %v298, 16
        %v327 = vpop.permute.xlu0 %326
        %v328 = vrot.slane %v327, 4
        %v337 = vcombine.low %v298, %v307
        %v339 = vunpack.c.l.s4 1983009808
        %v340 = vunpack.c.0.s8 %v339
        %v341 = vlaneseq
        %v342 = vshrl.u32 %v341, 7
        %v343 = vsub.s32 %v340, %v342
        %v344 = vrot.slane %v337, %v343
        %v345 = vcombine.low %v303, %v311
        %v347 = vunpack.c.l.s4 1983009808
        %v348 = vunpack.c.0.s8 %v347
        %v349 = vlaneseq
        %v350 = vshrl.u32 %v349, 7
        %v351 = vsub.s32 %v348, %v350
        %v352 = vrot.slane %v345, %v351
        %v353 = vcombine.low %v344, %v352
        %v354 = vcombine.high %v344, %v352
        %v356 = vunpack.c.l.s4 1934713408
        %v357 = vunpack.c.0.s8 %v356
        %v358 = vlaneseq
        %v359 = vshrl.u32 %v358, 7
        %v360 = vsub.s32 %v357, %v359
        %v361 = vrot.slane %v353, %v360
        %v363 = vunpack.c.l.s4 1934713408
        %v364 = vunpack.c.0.s8 %v363
        %v365 = vlaneseq
        %v366 = vshrl.u32 %v365, 7
        %v367 = vsub.s32 %v364, %v366
        %v368 = vrot.slane %v354, %v367
        %v369 = vcombine.high %v361, 0.0
        %v370 = vcombine.high %v368, 0.0
        %v371 = vcombine.low %v315, %v323
        %v373 = vunpack.c.l.s4 1983009808
        %v374 = vunpack.c.0.s8 %v373
        %v375 = vlaneseq
        %v376 = vshrl.u32 %v375, 7
        %v377 = vsub.s32 %v374, %v376
        %v378 = vrot.slane %v371, %v377
        %v379 = vcombine.low %v319, %v327
        %v381 = vunpack.c.l.s4 1983009808
        %v382 = vunpack.c.0.s8 %v381
        %v383 = vlaneseq
        %v384 = vshrl.u32 %v383, 7
        %v385 = vsub.s32 %v382, %v384
        %v386 = vrot.slane %v379, %v385
        %v387 = vcombine.low %v378, %v386
        %v388 = vcombine.high %v378, %v386
        %v390 = vunpack.c.l.s4 1934713408
        %v391 = vunpack.c.0.s8 %v390
        %v392 = vlaneseq
        %v393 = vshrl.u32 %v392, 7
        %v394 = vsub.s32 %v391, %v393
        %v395 = vrot.slane %v387, %v394
        %v397 = vunpack.c.l.s4 1934713408
        %v398 = vunpack.c.0.s8 %v397
        %v399 = vlaneseq
        %v400 = vshrl.u32 %v399, 7
        %v401 = vsub.s32 %v398, %v400
        %v402 = vrot.slane %v388, %v401
        %v403 = vcombine.high %v395, 0.0
        %v404 = vcombine.high %v402, 0.0
        %v405 = vcombine.low %v300, %v308
        %v407 = vunpack.c.l.s4 1983009808
        %v408 = vunpack.c.0.s8 %v407
        %v409 = vlaneseq
        %v410 = vshrl.u32 %v409, 7
        %v411 = vsub.s32 %v408, %v410
        %v412 = vrot.slane %v405, %v411
        %v413 = vcombine.low %v304, %v312
        %v415 = vunpack.c.l.s4 1983009808
        %v416 = vunpack.c.0.s8 %v415
        %v417 = vlaneseq
        %v418 = vshrl.u32 %v417, 7
        %v419 = vsub.s32 %v416, %v418
        %v420 = vrot.slane %v413, %v419
        %v421 = vcombine.low %v412, %v420
        %v422 = vcombine.high %v412, %v420
        %v424 = vunpack.c.l.s4 1934713408
        %v425 = vunpack.c.0.s8 %v424
        %v426 = vlaneseq
        %v427 = vshrl.u32 %v426, 7
        %v428 = vsub.s32 %v425, %v427
        %v429 = vrot.slane %v421, %v428
        %v431 = vunpack.c.l.s4 1934713408
        %v432 = vunpack.c.0.s8 %v431
        %v433 = vlaneseq
        %v434 = vshrl.u32 %v433, 7
        %v435 = vsub.s32 %v432, %v434
        %v436 = vrot.slane %v422, %v435
        %v437 = vcombine.high %v429, 0.0
        %v438 = vcombine.high %v436, 0.0
        %v439 = vcombine.low %v316, %v324
        %v441 = vunpack.c.l.s4 1983009808
        %v442 = vunpack.c.0.s8 %v441
        %v443 = vlaneseq
        %v444 = vshrl.u32 %v443, 7
        %v445 = vsub.s32 %v442, %v444
        %v446 = vrot.slane %v439, %v445
        %v447 = vcombine.low %v320, %v328
        %v449 = vunpack.c.l.s4 1983009808
        %v450 = vunpack.c.0.s8 %v449
        %v451 = vlaneseq
        %v452 = vshrl.u32 %v451, 7
        %v453 = vsub.s32 %v450, %v452
        %v454 = vrot.slane %v447, %v453
        %v455 = vcombine.low %v446, %v454
        %v456 = vcombine.high %v446, %v454
        %v458 = vunpack.c.l.s4 1934713408
        %v459 = vunpack.c.0.s8 %v458
        %v460 = vlaneseq
        %v461 = vshrl.u32 %v460, 7
        %v462 = vsub.s32 %v459, %v461
        %v463 = vrot.slane %v455, %v462
        %v465 = vunpack.c.l.s4 1934713408
        %v466 = vunpack.c.0.s8 %v465
        %v467 = vlaneseq
        %v468 = vshrl.u32 %v467, 7
        %v469 = vsub.s32 %v466, %v468
        %v470 = vrot.slane %v456, %v469
        %v471 = vcombine.high %v463, 0.0
        %v472 = vcombine.high %v470, 0.0
        %vm473 = vcmask 125952
        %v474 = vsel %vm473, %v361, -inf
        %v475 = vsel %vm473, %v369, -inf
        %v476 = vmax.f32 %v474, %v475
        %v477 = vsel %vm473, %v368, -inf
        %v478 = vmax.f32 %v476, %v477
        %v479 = vsel %vm473, %v370, -inf
        %v480 = vmax.f32 %v478, %v479
        %v481 = vsel %vm473, %v395, -inf
        %v482 = vsel %vm473, %v403, -inf
        %v483 = vmax.f32 %v481, %v482
        %v484 = vsel %vm473, %v402, -inf
        %v485 = vmax.f32 %v483, %v484
        %v486 = vsel %vm473, %v404, -inf
        %v487 = vmax.f32 %v485, %v486
        %v488 = vsel %vm473, %v429, -inf
        %v489 = vsel %vm473, %v437, -inf
        %v490 = vmax.f32 %v488, %v489
        %v491 = vsel %vm473, %v436, -inf
        %v492 = vmax.f32 %v490, %v491
        %v493 = vsel %vm473, %v438, -inf
        %v494 = vmax.f32 %v492, %v493
        %v495 = vsel %vm473, %v463, -inf
        %v496 = vsel %vm473, %v471, -inf
        %v497 = vmax.f32 %v495, %v496
        %v498 = vsel %vm473, %v470, -inf
        %v499 = vmax.f32 %v497, %v498
        %v500 = vsel %vm473, %v472, -inf
        %v501 = vmax.f32 %v499, %v500
        %v518 = vcombine.low %v361, %v395
        %v519 = vcombine.low %v429, %v463
        %v520 = vcombine.low %v369, %v403
        %v521 = vcombine.low %v437, %v471
        %v522 = vcombine.low %v368, %v402
        %v523 = vcombine.low %v436, %v470
        %v524 = vcombine.low %v370, %v404
        %v525 = vcombine.low %v438, %v472
        %vm534 = vcmask 130048
        %v535 = vsel %vm534, %v518, 0.0
        %v536 = vsel %vm534, %v520, 0.0
        %v537 = vadd.f32 %v535, %v536
        %v538 = vsel %vm534, %v522, 0.0
        %v539 = vadd.f32 %v537, %v538
        %v540 = vsel %vm534, %v524, 0.0
        %v541 = vadd.f32 %v539, %v540
        %v542 = vsel %vm534, %v519, 0.0
        %v543 = vsel %vm534, %v521, 0.0
        %v544 = vadd.f32 %v542, %v543
        %v545 = vsel %vm534, %v523, 0.0
        %v546 = vadd.f32 %v544, %v545
        %v547 = vsel %vm534, %v525, 0.0
        %v548 = vadd.f32 %v546, %v547
        %v549 = vsel %vm534, %v518, -inf
        %v550 = vsel %vm534, %v519, -inf
        %v551 = vmax.f32 %v549, %v550
        %v552 = vrot.slane %v551, 4
        %v553 = vmax.f32 %v551, %v552
        %v554 = vrot.slane %v553, 2
        %v555 = vmax.f32 %v553, %v554
        %v556 = vrot.slane %v555, 1
        %v557 = vmax.f32 %v555, %v556
        %v558 = vsel %vm534, %v520, -inf
        %v559 = vsel %vm534, %v521, -inf
        %v560 = vmax.f32 %v558, %v559
        %v561 = vrot.slane %v560, 4
        %v562 = vmax.f32 %v560, %v561
        %v563 = vrot.slane %v562, 2
        %v564 = vmax.f32 %v562, %v563
        %v565 = vrot.slane %v564, 1
        %v566 = vmax.f32 %v564, %v565
        %v567 = vsel %vm534, %v522, -inf
        %v568 = vsel %vm534, %v523, -inf
        %v569 = vmax.f32 %v567, %v568
        %v570 = vrot.slane %v569, 4
        %v571 = vmax.f32 %v569, %v570
        %v572 = vrot.slane %v571, 2
        %v573 = vmax.f32 %v571, %v572
        %v574 = vrot.slane %v573, 1
        %v575 = vmax.f32 %v573, %v574
        %v576 = vsel %vm534, %v524, -inf
        %v577 = vsel %vm534, %v525, -inf
        %v578 = vmax.f32 %v576, %v577
        %v579 = vrot.slane %v578, 4
        %v580 = vmax.f32 %v578, %v579
        %v581 = vrot.slane %v580, 2
        %v582 = vmax.f32 %v580, %v581
        %v583 = vrot.slane %v582, 1
        %v584 = vmax.f32 %v582, %v583
        %v585 = vadd.f32 %v535, %v542
        %v586 = vrot.slane %v585, 4
        %v587 = vadd.f32 %v585, %v586
        %v588 = vrot.slane %v587, 2
        %v589 = vadd.f32 %v587, %v588
        %v590 = vrot.slane %v589, 1
        %v591 = vadd.f32 %v589, %v590
        %v592 = vadd.f32 %v536, %v543
        %v593 = vrot.slane %v592, 4
        %v594 = vadd.f32 %v592, %v593
        %v595 = vrot.slane %v594, 2
        %v596 = vadd.f32 %v594, %v595
        %v597 = vrot.slane %v596, 1
        %v598 = vadd.f32 %v596, %v597
        %v599 = vadd.f32 %v538, %v545
        %v600 = vrot.slane %v599, 4
        %v601 = vadd.f32 %v599, %v600
        %v602 = vrot.slane %v601, 2
        %v603 = vadd.f32 %v601, %v602
        %v604 = vrot.slane %v603, 1
        %v605 = vadd.f32 %v603, %v604
        %v606 = vadd.f32 %v540, %v547
        %v607 = vrot.slane %v606, 4
        %v608 = vadd.f32 %v606, %v607
        %v609 = vrot.slane %v608, 2
        %v610 = vadd.f32 %v608, %v609
        %v611 = vrot.slane %v610, 1
        %v612 = vadd.f32 %v610, %v611
        %613 = vmax.xlane.f32.xlu0 %v549
        %v614 = vpop.xlane.xlu0 %613
        %615 = vmax.xlane.f32.xlu0 %v550
        %v616 = vpop.xlane.xlu0 %615
        %617 = vmax.xlane.f32.xlu0 %v558
        %v618 = vpop.xlane.xlu0 %617
        %619 = vmax.xlane.f32.xlu0 %v559
        %v620 = vpop.xlane.xlu0 %619
        %621 = vmax.xlane.f32.xlu0 %v567
        %v622 = vpop.xlane.xlu0 %621
        %623 = vmax.xlane.f32.xlu0 %v568
        %v624 = vpop.xlane.xlu0 %623
        %625 = vmax.xlane.f32.xlu0 %v576
        %v626 = vpop.xlane.xlu0 %625
        %627 = vmax.xlane.f32.xlu0 %v577
        %v628 = vpop.xlane.xlu0 %627
        %629 = vadd.xlane.f32.xlu0 %v535
        %v630 = vpop.xlane.xlu0 %629
        %631 = vadd.xlane.f32.xlu0 %v542
        %v632 = vpop.xlane.xlu0 %631
        %633 = vadd.xlane.f32.xlu0 %v536
        %v634 = vpop.xlane.xlu0 %633
        %635 = vadd.xlane.f32.xlu0 %v543
        %v636 = vpop.xlane.xlu0 %635
        %637 = vadd.xlane.f32.xlu0 %v538
        %v638 = vpop.xlane.xlu0 %637
        %639 = vadd.xlane.f32.xlu0 %v545
        %v640 = vpop.xlane.xlu0 %639
        %641 = vadd.xlane.f32.xlu0 %v540
        %v642 = vpop.xlane.xlu0 %641
        %643 = vadd.xlane.f32.xlu0 %v547
        %v644 = vpop.xlane.xlu0 %643
        %v645 = vmul.f32 %v541, 0.25
        %v646 = vmul.f32 %v548, 0.25
        %s647 = sld [smem:[#allocation2]]
        %v652 = vcombine.low %v480, %v487
        %v653 = vcombine.low %v494, %v501
        %v656 = vpack.c.bf16 %v653, %v652
        %v658 = vshrl.u32 %v656, 16
        %v660 = vrot.slane %v658, 6
        %v661 = vshll.u32 %v656, 16
        %v663 = vrot.slane %v661, 7
        %v664 = vor.u32 %v660, %v663
        %vm666 = vcmask 1041408
        %vm667 = vsmask.f32 1280
        %vm668 = vmand %vm666, %vm667
        %v669 = vsel %vm668, 0, %v664
        %v670 = vsel %vm668, %v664, 0
        %v671 = vpack.c.bf16 %v646, %v645
        %v673 = vshrl.u32 %v671, 16
        %v675 = vrot.slane %v673, 6
        %v676 = vshll.u32 %v671, 16
        %v678 = vrot.slane %v676, 7
        %v679 = vor.u32 %v675, %v678
        %v681 = vsel %vm668, 0, %v679
        %v682 = vsel %vm668, %v679, 0
        %v683 = vld [vmem:[#allocation6] sm:$0xf]
        %v684 = vld [vmem:[#allocation6 + $0x4] sm:$0xf]
        %s685 = scalar_lea.vmem [#allocation6], 56
        %v686 = vld [vmem:[%s685] sm:$0xf]
        %v687 = vld [vmem:[%s685 + $0x4] sm:$0xf]
        %v690 = vunpack.c.l.b16 %v686
        %v691 = vunpack.c.l.b16 %v687
        %v692 = vpack.c.b16 %v691, %v690
        %v695 = vsel %vm534, %v681, 0
        %697 = vmatprep.subr.bf16.mxu0 0
        %698 = vmatpush1.bf16.msra.mxu0 %v692
        %699 = vmatprep.subr.bf16.mxu0 0
        %700 = vmatpush1.bf16.msra.mxu0 0
        %701 = vmatprep.subr.bf16.mxu0 0
        %702 = vmatpush1.bf16.msra.mxu0 0
        %703 = vmatprep.subr.bf16.mxu0 0
        %704 = vmatpush1.bf16.msra.mxu0 0
        %705 = vmatprep.subr.bf16.mxu0 0
        %706 = vmatpush1.bf16.msra.mxu0 0
        %707 = vmatprep.subr.bf16.mxu0 0
        %708 = vmatpush1.bf16.msra.mxu0 0
        %709 = vmatprep.subr.bf16.mxu0 0
        %710 = vmatpush1.bf16.msra.mxu0 0
        %711 = vmatprep.subr.bf16.mxu0 0
        %712 = vmatpush1.bf16.msra.mxu0 0
        %713 = vmatprep.subr.bf16.mxu0 0
        %714 = vmatpush1.bf16.msra.mxu0 0
        %715 = vmatprep.subr.bf16.mxu0 0
        %716 = vmatpush1.bf16.msra.mxu0 0
        %717 = vmatprep.subr.bf16.mxu0 0
        %718 = vmatpush1.bf16.msra.mxu0 0
        %719 = vmatprep.subr.bf16.mxu0 0
        %720 = vmatpush1.bf16.msra.mxu0 0
        %721 = vmatprep.subr.bf16.mxu0 0
        %722 = vmatpush1.bf16.msra.mxu0 0
        %723 = vmatprep.subr.bf16.mxu0 0
        %724 = vmatpush1.bf16.msra.mxu0 0
        %725 = vmatprep.subr.bf16.mxu0 0
        %726 = vmatpush1.bf16.msra.mxu0 0
        %727 = vmatprep.subr.bf16.mxu0 0
        %728 = vmatpush1.bf16.msra.mxu0 0
        %729 = vmatprep.mubr.bf16.mxu0 0
        %730 = vmatmul.mubr.bf16.gmra.mrb[0].mxu0 %v695
        %v731 = vpop.f32.mrb[0].mxu0
        %v732 = vadd.f32 0.0, %v731
        %v733 = vpop.f32.mrb[0].mxu0
        %v734 = vpop.f32.mrb[0].mxu0
        %v735 = vadd.f32 0.0, %v734
        %v736 = vpop.f32.mrb[0].mxu0
        %737 = vdwg.mxu0
        %v740 = vunpack.c.l.b16 %v683
        %v741 = vunpack.c.l.b16 %v684
        %v742 = vpack.c.b16 %v741, %v740
        %v745 = vsel %vm534, %v669, 0
        %747 = vmatprep.subr.bf16.mxu0 0
        %748 = vmatpush1.bf16.msra.mxu0 %v742
        %749 = vmatprep.subr.bf16.mxu0 0
        %750 = vmatpush1.bf16.msra.mxu0 0
        %751 = vmatprep.subr.bf16.mxu0 0
        %752 = vmatpush1.bf16.msra.mxu0 0
        %753 = vmatprep.subr.bf16.mxu0 0
        %754 = vmatpush1.bf16.msra.mxu0 0
        %755 = vmatprep.subr.bf16.mxu0 0
        %756 = vmatpush1.bf16.msra.mxu0 0
        %757 = vmatprep.subr.bf16.mxu0 0
        %758 = vmatpush1.bf16.msra.mxu0 0
        %759 = vmatprep.subr.bf16.mxu0 0
        %760 = vmatpush1.bf16.msra.mxu0 0
        %761 = vmatprep.subr.bf16.mxu0 0
        %762 = vmatpush1.bf16.msra.mxu0 0
        %763 = vmatprep.subr.bf16.mxu0 0
        %764 = vmatpush1.bf16.msra.mxu0 0
        %765 = vmatprep.subr.bf16.mxu0 0
        %766 = vmatpush1.bf16.msra.mxu0 0
        %767 = vmatprep.subr.bf16.mxu0 0
        %768 = vmatpush1.bf16.msra.mxu0 0
        %769 = vmatprep.subr.bf16.mxu0 0
        %770 = vmatpush1.bf16.msra.mxu0 0
        %771 = vmatprep.subr.bf16.mxu0 0
        %772 = vmatpush1.bf16.msra.mxu0 0
        %773 = vmatprep.subr.bf16.mxu0 0
        %774 = vmatpush1.bf16.msra.mxu0 0
        %775 = vmatprep.subr.bf16.mxu0 0
        %776 = vmatpush1.bf16.msra.mxu0 0
        %777 = vmatprep.subr.bf16.mxu0 0
        %778 = vmatpush1.bf16.msra.mxu0 0
        %779 = vmatprep.mubr.bf16.mxu0 0
        %780 = vmatmul.mubr.bf16.gmra.mrb[0].mxu0 %v745
        %v781 = vpop.f32.mrb[0].mxu0
        %v782 = vadd.f32 %v732, %v781
        %v783 = vpop.f32.mrb[0].mxu0
        %v784 = vpop.f32.mrb[0].mxu0
        %v785 = vadd.f32 %v735, %v784
        %v786 = vpop.f32.mrb[0].mxu0
        %787 = vdwg.mxu0
        %s788 = scalar_lea.vmem [#allocation6], 8
        %v789 = vld [vmem:[%s788] sm:$0xf]
        %v790 = vld [vmem:[%s788 + $0x4] sm:$0xf]
        %vm791 = vsmask.f32 7424
        %v792 = vshrl.u32 %v669, 16
        %v794 = vshll.u32 %v669, 16
        %v796 = vrot.slane %v794, 1
        %v797 = vor.u32 %v792, %v796
        %v799 = vshll.u32 %v670, 16
        %v801 = vrot.slane %v799, 1
        %v802 = vsel %vm791, %v797, %v801
        %v805 = vunpack.c.l.b16 %v789
        %v806 = vunpack.c.l.b16 %v790
        %v807 = vpack.c.b16 %v806, %v805
        %v810 = vsel %vm534, %v802, 0
        %812 = vmatprep.subr.bf16.mxu0 0
        %813 = vmatpush1.bf16.msra.mxu0 %v807
        %814 = vmatprep.subr.bf16.mxu0 0
        %815 = vmatpush1.bf16.msra.mxu0 0
        %816 = vmatprep.subr.bf16.mxu0 0
        %817 = vmatpush1.bf16.msra.mxu0 0
        %818 = vmatprep.subr.bf16.mxu0 0
        %819 = vmatpush1.bf16.msra.mxu0 0
        %820 = vmatprep.subr.bf16.mxu0 0
        %821 = vmatpush1.bf16.msra.mxu0 0
        %822 = vmatprep.subr.bf16.mxu0 0
        %823 = vmatpush1.bf16.msra.mxu0 0
        %824 = vmatprep.subr.bf16.mxu0 0
        %825 = vmatpush1.bf16.msra.mxu0 0
        %826 = vmatprep.subr.bf16.mxu0 0
        %827 = vmatpush1.bf16.msra.mxu0 0
        %828 = vmatprep.subr.bf16.mxu0 0
        %829 = vmatpush1.bf16.msra.mxu0 0
        %830 = vmatprep.subr.bf16.mxu0 0
        %831 = vmatpush1.bf16.msra.mxu0 0
        %832 = vmatprep.subr.bf16.mxu0 0
        %833 = vmatpush1.bf16.msra.mxu0 0
        %834 = vmatprep.subr.bf16.mxu0 0
        %835 = vmatpush1.bf16.msra.mxu0 0
        %836 = vmatprep.subr.bf16.mxu0 0
        %837 = vmatpush1.bf16.msra.mxu0 0
        %838 = vmatprep.subr.bf16.mxu0 0
        %839 = vmatpush1.bf16.msra.mxu0 0
        %840 = vmatprep.subr.bf16.mxu0 0
        %841 = vmatpush1.bf16.msra.mxu0 0
        %842 = vmatprep.subr.bf16.mxu0 0
        %843 = vmatpush1.bf16.msra.mxu0 0
        %844 = vmatprep.mubr.bf16.mxu0 0
        %845 = vmatmul.mubr.bf16.gmra.mrb[0].mxu0 %v810
        %v846 = vpop.f32.mrb[0].mxu0
        %v847 = vadd.f32 0.0, %v846
        %v848 = vpop.f32.mrb[0].mxu0
        %v849 = vpop.f32.mrb[0].mxu0
        %v850 = vadd.f32 0.0, %v849
        %v851 = vpop.f32.mrb[0].mxu0
        %852 = vdwg.mxu0
        %v853 = vadd.f32 %v782, %v847
        %v854 = vadd.f32 %v785, %v850
        %s855 = scalar_lea.vmem [#allocation6], 64
        %v856 = vld [vmem:[%s855] sm:$0xf]
        %v857 = vld [vmem:[%s855 + $0x4] sm:$0xf]
        %v858 = vshrl.u32 %v681, 16
        %v860 = vshll.u32 %v681, 16
        %v862 = vrot.slane %v860, 1
        %v863 = vor.u32 %v858, %v862
        %v865 = vshll.u32 %v682, 16
        %v867 = vrot.slane %v865, 1
        %v868 = vsel %vm791, %v863, %v867
        %v871 = vunpack.c.l.b16 %v856
        %v872 = vunpack.c.l.b16 %v857
        %v873 = vpack.c.b16 %v872, %v871
        %v876 = vsel %vm534, %v868, 0
        %878 = vmatprep.subr.bf16.mxu0 0
        %879 = vmatpush1.bf16.msra.mxu0 %v873
        %880 = vmatprep.subr.bf16.mxu0 0
        %881 = vmatpush1.bf16.msra.mxu0 0
        %882 = vmatprep.subr.bf16.mxu0 0
        %883 = vmatpush1.bf16.msra.mxu0 0
        %884 = vmatprep.subr.bf16.mxu0 0
        %885 = vmatpush1.bf16.msra.mxu0 0
        %886 = vmatprep.subr.bf16.mxu0 0
        %887 = vmatpush1.bf16.msra.mxu0 0
        %888 = vmatprep.subr.bf16.mxu0 0
        %889 = vmatpush1.bf16.msra.mxu0 0
        %890 = vmatprep.subr.bf16.mxu0 0
        %891 = vmatpush1.bf16.msra.mxu0 0
        %892 = vmatprep.subr.bf16.mxu0 0
        %893 = vmatpush1.bf16.msra.mxu0 0
        %894 = vmatprep.subr.bf16.mxu0 0
        %895 = vmatpush1.bf16.msra.mxu0 0
        %896 = vmatprep.subr.bf16.mxu0 0
        %897 = vmatpush1.bf16.msra.mxu0 0
        %898 = vmatprep.subr.bf16.mxu0 0
        %899 = vmatpush1.bf16.msra.mxu0 0
        %900 = vmatprep.subr.bf16.mxu0 0
        %901 = vmatpush1.bf16.msra.mxu0 0
        %902 = vmatprep.subr.bf16.mxu0 0
        %903 = vmatpush1.bf16.msra.mxu0 0
        %904 = vmatprep.subr.bf16.mxu0 0
        %905 = vmatpush1.bf16.msra.mxu0 0
        %906 = vmatprep.subr.bf16.mxu0 0
        %907 = vmatpush1.bf16.msra.mxu0 0
        %908 = vmatprep.subr.bf16.mxu0 0
        %909 = vmatpush1.bf16.msra.mxu0 0
        %910 = vmatprep.mubr.bf16.mxu0 0
        %911 = vmatmul.mubr.bf16.gmra.mrb[0].mxu0 %v876
        %v912 = vpop.f32.mrb[0].mxu0
        %v913 = vadd.f32 0.0, %v912
        %v914 = vpop.f32.mrb[0].mxu0
        %v915 = vpop.f32.mrb[0].mxu0
        %v916 = vadd.f32 0.0, %v915
        %v917 = vpop.f32.mrb[0].mxu0
        %918 = vdwg.mxu0
        %v919 = vadd.f32 %v853, %v913
        %v920 = vadd.f32 %v854, %v916
        %s921 = scalar_lea.vmem [#allocation6], 16
        %v922 = vld [vmem:[%s921] sm:$0xf]
        %v923 = vld [vmem:[%s921 + $0x4] sm:$0xf]
        %vm926 = vcmask 1046528
        %v927 = vrot.slane %v669, 1
        %v928 = vrot.slane %v670, 1
        %v929 = vsel %vm926, %v927, %v928
        %v932 = vunpack.c.l.b16 %v922
        %v933 = vunpack.c.l.b16 %v923
        %v934 = vpack.c.b16 %v933, %v932
        %v937 = vsel %vm534, %v929, 0
        %939 = vmatprep.subr.bf16.mxu0 0
        %940 = vmatpush1.bf16.msra.mxu0 %v934
        %941 = vmatprep.subr.bf16.mxu0 0
        %942 = vmatpush1.bf16.msra.mxu0 0
        %943 = vmatprep.subr.bf16.mxu0 0
        %944 = vmatpush1.bf16.msra.mxu0 0
        %945 = vmatprep.subr.bf16.mxu0 0
        %946 = vmatpush1.bf16.msra.mxu0 0
        %947 = vmatprep.subr.bf16.mxu0 0
        %948 = vmatpush1.bf16.msra.mxu0 0
        %949 = vmatprep.subr.bf16.mxu0 0
        %950 = vmatpush1.bf16.msra.mxu0 0
        %951 = vmatprep.subr.bf16.mxu0 0
        %952 = vmatpush1.bf16.msra.mxu0 0
        %953 = vmatprep.subr.bf16.mxu0 0
        %954 = vmatpush1.bf16.msra.mxu0 0
        %955 = vmatprep.subr.bf16.mxu0 0
        %956 = vmatpush1.bf16.msra.mxu0 0
        %957 = vmatprep.subr.bf16.mxu0 0
        %958 = vmatpush1.bf16.msra.mxu0 0
        %959 = vmatprep.subr.bf16.mxu0 0
        %960 = vmatpush1.bf16.msra.mxu0 0
        %961 = vmatprep.subr.bf16.mxu0 0
        %962 = vmatpush1.bf16.msra.mxu0 0
        %963 = vmatprep.subr.bf16.mxu0 0
        %964 = vmatpush1.bf16.msra.mxu0 0
        %965 = vmatprep.subr.bf16.mxu0 0
        %966 = vmatpush1.bf16.msra.mxu0 0
        %967 = vmatprep.subr.bf16.mxu0 0
        %968 = vmatpush1.bf16.msra.mxu0 0
        %969 = vmatprep.subr.bf16.mxu0 0
        %970 = vmatpush1.bf16.msra.mxu0 0
        %971 = vmatprep.mubr.bf16.mxu0 0
        %972 = vmatmul.mubr.bf16.gmra.mrb[0].mxu0 %v937
        %v973 = vpop.f32.mrb[0].mxu0
        %v974 = vadd.f32 0.0, %v973
        %v975 = vpop.f32.mrb[0].mxu0
        %v976 = vpop.f32.mrb[0].mxu0
        %v977 = vadd.f32 0.0, %v976
        %v978 = vpop.f32.mrb[0].mxu0
        %979 = vdwg.mxu0
        %v980 = vadd.f32 %v919, %v974
        %v981 = vadd.f32 %v920, %v977
        %s982 = scalar_lea.vmem [#allocation6], 72
        %v983 = vld [vmem:[%s982] sm:$0xf]
        %v984 = vld [vmem:[%s982 + $0x4] sm:$0xf]
        %v987 = vrot.slane %v681, 1
        %v988 = vrot.slane %v682, 1
        %v989 = vsel %vm926, %v987, %v988
        %v992 = vunpack.c.l.b16 %v983
        %v993 = vunpack.c.l.b16 %v984
        %v994 = vpack.c.b16 %v993, %v992
        %v997 = vsel %vm534, %v989, 0
        %999 = vmatprep.subr.bf16.mxu0 0
        %1000 = vmatpush1.bf16.msra.mxu0 %v994
        %1001 = vmatprep.subr.bf16.mxu0 0
        %1002 = vmatpush1.bf16.msra.mxu0 0
        %1003 = vmatprep.subr.bf16.mxu0 0
        %1004 = vmatpush1.bf16.msra.mxu0 0
        %1005 = vmatprep.subr.bf16.mxu0 0
        %1006 = vmatpush1.bf16.msra.mxu0 0
        %1007 = vmatprep.subr.bf16.mxu0 0
        %1008 = vmatpush1.bf16.msra.mxu0 0
        %1009 = vmatprep.subr.bf16.mxu0 0
        %1010 = vmatpush1.bf16.msra.mxu0 0
        %1011 = vmatprep.subr.bf16.mxu0 0
        %1012 = vmatpush1.bf16.msra.mxu0 0
        %1013 = vmatprep.subr.bf16.mxu0 0
        %1014 = vmatpush1.bf16.msra.mxu0 0
        %1015 = vmatprep.subr.bf16.mxu0 0
        %1016 = vmatpush1.bf16.msra.mxu0 0
        %1017 = vmatprep.subr.bf16.mxu0 0
        %1018 = vmatpush1.bf16.msra.mxu0 0
        %1019 = vmatprep.subr.bf16.mxu0 0
        %1020 = vmatpush1.bf16.msra.mxu0 0
        %1021 = vmatprep.subr.bf16.mxu0 0
        %1022 = vmatpush1.bf16.msra.mxu0 0
        %1023 = vmatprep.subr.bf16.mxu0 0
        %1024 = vmatpush1.bf16.msra.mxu0 0
        %1025 = vmatprep.subr.bf16.mxu0 0
        %1026 = vmatpush1.bf16.msra.mxu0 0
        %1027 = vmatprep.subr.bf16.mxu0 0
        %1028 = vmatpush1.bf16.msra.mxu0 0
        %1029 = vmatprep.subr.bf16.mxu0 0
        %1030 = vmatpush1.bf16.msra.mxu0 0
        %1031 = vmatprep.mubr.bf16.mxu0 0
        %1032 = vmatmul.mubr.bf16.gmra.mrb[0].mxu0 %v997
        %v1033 = vpop.f32.mrb[0].mxu0
        %v1034 = vadd.f32 0.0, %v1033
        %v1035 = vpop.f32.mrb[0].mxu0
        %v1036 = vpop.f32.mrb[0].mxu0
        %v1037 = vadd.f32 0.0, %v1036
        %v1038 = vpop.f32.mrb[0].mxu0
        %1039 = vdwg.mxu0
        %v1040 = vadd.f32 %v980, %v1034
        %v1041 = vadd.f32 %v981, %v1037
        %s1042 = scalar_lea.vmem [#allocation6], 24
        %v1043 = vld [vmem:[%s1042] sm:$0xf]
        %v1044 = vld [vmem:[%s1042 + $0x4] sm:$0xf]
        %vm1045 = vsmask.f32 6400
        %v1046 = vrot.slane %v792, 1
        %v1047 = vrot.slane %v794, 2
        %v1048 = vor.u32 %v1046, %v1047
        %v1049 = vshrl.u32 %v670, 16
        %v1051 = vrot.slane %v1049, 1
        %v1052 = vrot.slane %v799, 2
        %v1053 = vor.u32 %v1051, %v1052
        %v1054 = vsel %vm1045, %v1048, %v1053
        %v1057 = vunpack.c.l.b16 %v1043
        %v1058 = vunpack.c.l.b16 %v1044
        %v1059 = vpack.c.b16 %v1058, %v1057
        %v1062 = vsel %vm534, %v1054, 0
        %1064 = vmatprep.subr.bf16.mxu0 0
        %1065 = vmatpush1.bf16.msra.mxu0 %v1059
        %1066 = vmatprep.subr.bf16.mxu0 0
        %1067 = vmatpush1.bf16.msra.mxu0 0
        %1068 = vmatprep.subr.bf16.mxu0 0
        %1069 = vmatpush1.bf16.msra.mxu0 0
        %1070 = vmatprep.subr.bf16.mxu0 0
        %1071 = vmatpush1.bf16.msra.mxu0 0
        %1072 = vmatprep.subr.bf16.mxu0 0
        %1073 = vmatpush1.bf16.msra.mxu0 0
        %1074 = vmatprep.subr.bf16.mxu0 0
        %1075 = vmatpush1.bf16.msra.mxu0 0
        %1076 = vmatprep.subr.bf16.mxu0 0
        %1077 = vmatpush1.bf16.msra.mxu0 0
        %1078 = vmatprep.subr.bf16.mxu0 0
        %1079 = vmatpush1.bf16.msra.mxu0 0
        %1080 = vmatprep.subr.bf16.mxu0 0
        %1081 = vmatpush1.bf16.msra.mxu0 0
        %1082 = vmatprep.subr.bf16.mxu0 0
        %1083 = vmatpush1.bf16.msra.mxu0 0
        %1084 = vmatprep.subr.bf16.mxu0 0
        %1085 = vmatpush1.bf16.msra.mxu0 0
        %1086 = vmatprep.subr.bf16.mxu0 0
        %1087 = vmatpush1.bf16.msra.mxu0 0
        %1088 = vmatprep.subr.bf16.mxu0 0
        %1089 = vmatpush1.bf16.msra.mxu0 0
        %1090 = vmatprep.subr.bf16.mxu0 0
        %1091 = vmatpush1.bf16.msra.mxu0 0
        %1092 = vmatprep.subr.bf16.mxu0 0
        %1093 = vmatpush1.bf16.msra.mxu0 0
        %1094 = vmatprep.subr.bf16.mxu0 0
        %1095 = vmatpush1.bf16.msra.mxu0 0
        %1096 = vmatprep.mubr.bf16.mxu0 0
        %1097 = vmatmul.mubr.bf16.gmra.mrb[0].mxu0 %v1062
        %v1098 = vpop.f32.mrb[0].mxu0
        %v1099 = vadd.f32 0.0, %v1098
        %v1100 = vpop.f32.mrb[0].mxu0
        %v1101 = vpop.f32.mrb[0].mxu0
        %v1102 = vadd.f32 0.0, %v1101
        %v1103 = vpop.f32.mrb[0].mxu0
        %1104 = vdwg.mxu0
        %v1105 = vadd.f32 %v1040, %v1099
        %v1106 = vadd.f32 %v1041, %v1102
        %s1107 = scalar_lea.vmem [#allocation6], 80
        %v1108 = vld [vmem:[%s1107] sm:$0xf]
        %v1109 = vld [vmem:[%s1107 + $0x4] sm:$0xf]
        %v1110 = vrot.slane %v858, 1
        %v1111 = vrot.slane %v860, 2
        %v1112 = vor.u32 %v1110, %v1111
        %v1113 = vshrl.u32 %v682, 16
        %v1115 = vrot.slane %v1113, 1
        %v1116 = vrot.slane %v865, 2
        %v1117 = vor.u32 %v1115, %v1116
        %v1118 = vsel %vm1045, %v1112, %v1117
        %v1121 = vunpack.c.l.b16 %v1108
        %v1122 = vunpack.c.l.b16 %v1109
        %v1123 = vpack.c.b16 %v1122, %v1121
        %v1126 = vsel %vm534, %v1118, 0
        %1128 = vmatprep.subr.bf16.mxu0 0
        %1129 = vmatpush1.bf16.msra.mxu0 %v1123
        %1130 = vmatprep.subr.bf16.mxu0 0
        %1131 = vmatpush1.bf16.msra.mxu0 0
        %1132 = vmatprep.subr.bf16.mxu0 0
        %1133 = vmatpush1.bf16.msra.mxu0 0
        %1134 = vmatprep.subr.bf16.mxu0 0
        %1135 = vmatpush1.bf16.msra.mxu0 0
        %1136 = vmatprep.subr.bf16.mxu0 0
        %1137 = vmatpush1.bf16.msra.mxu0 0
        %1138 = vmatprep.subr.bf16.mxu0 0
        %1139 = vmatpush1.bf16.msra.mxu0 0
        %1140 = vmatprep.subr.bf16.mxu0 0
        %1141 = vmatpush1.bf16.msra.mxu0 0
        %1142 = vmatprep.subr.bf16.mxu0 0
        %1143 = vmatpush1.bf16.msra.mxu0 0
        %1144 = vmatprep.subr.bf16.mxu0 0
        %1145 = vmatpush1.bf16.msra.mxu0 0
        %1146 = vmatprep.subr.bf16.mxu0 0
        %1147 = vmatpush1.bf16.msra.mxu0 0
        %1148 = vmatprep.subr.bf16.mxu0 0
        %1149 = vmatpush1.bf16.msra.mxu0 0
        %1150 = vmatprep.subr.bf16.mxu0 0
        %1151 = vmatpush1.bf16.msra.mxu0 0
        %1152 = vmatprep.subr.bf16.mxu0 0
        %1153 = vmatpush1.bf16.msra.mxu0 0
        %1154 = vmatprep.subr.bf16.mxu0 0
        %1155 = vmatpush1.bf16.msra.mxu0 0
        %1156 = vmatprep.subr.bf16.mxu0 0
        %1157 = vmatpush1.bf16.msra.mxu0 0
        %1158 = vmatprep.subr.bf16.mxu0 0
        %1159 = vmatpush1.bf16.msra.mxu0 0
        %1160 = vmatprep.mubr.bf16.mxu0 0
        %1161 = vmatmul.mubr.bf16.gmra.mrb[0].mxu0 %v1126
        %v1162 = vpop.f32.mrb[0].mxu0
        %v1163 = vadd.f32 0.0, %v1162
        %v1164 = vpop.f32.mrb[0].mxu0
        %v1165 = vpop.f32.mrb[0].mxu0
        %v1166 = vadd.f32 0.0, %v1165
        %v1167 = vpop.f32.mrb[0].mxu0
        %1168 = vdwg.mxu0
        %v1169 = vadd.f32 %v1105, %v1163
        %v1170 = vadd.f32 %v1106, %v1166
        %s1171 = scalar_lea.vmem [#allocation6], 32
        %v1172 = vld [vmem:[%s1171] sm:$0xf]
        %v1173 = vld [vmem:[%s1171 + $0x4] sm:$0xf]
        %vm1174 = vcmask 1045504
        %v1175 = vrot.slane %v669, 2
        %v1176 = vrot.slane %v670, 2
        %v1177 = vsel %vm1174, %v1175, %v1176
        %v1180 = vunpack.c.l.b16 %v1172
        %v1181 = vunpack.c.l.b16 %v1173
        %v1182 = vpack.c.b16 %v1181, %v1180
        %v1185 = vsel %vm534, %v1177, 0
        %1187 = vmatprep.subr.bf16.mxu0 0
        %1188 = vmatpush1.bf16.msra.mxu0 %v1182
        %1189 = vmatprep.subr.bf16.mxu0 0
        %1190 = vmatpush1.bf16.msra.mxu0 0
        %1191 = vmatprep.subr.bf16.mxu0 0
        %1192 = vmatpush1.bf16.msra.mxu0 0
        %1193 = vmatprep.subr.bf16.mxu0 0
        %1194 = vmatpush1.bf16.msra.mxu0 0
        %1195 = vmatprep.subr.bf16.mxu0 0
        %1196 = vmatpush1.bf16.msra.mxu0 0
        %1197 = vmatprep.subr.bf16.mxu0 0
        %1198 = vmatpush1.bf16.msra.mxu0 0
        %1199 = vmatprep.subr.bf16.mxu0 0
        %1200 = vmatpush1.bf16.msra.mxu0 0
        %1201 = vmatprep.subr.bf16.mxu0 0
        %1202 = vmatpush1.bf16.msra.mxu0 0
        %1203 = vmatprep.subr.bf16.mxu0 0
        %1204 = vmatpush1.bf16.msra.mxu0 0
        %1205 = vmatprep.subr.bf16.mxu0 0
        %1206 = vmatpush1.bf16.msra.mxu0 0
        %1207 = vmatprep.subr.bf16.mxu0 0
        %1208 = vmatpush1.bf16.msra.mxu0 0
        %1209 = vmatprep.subr.bf16.mxu0 0
        %1210 = vmatpush1.bf16.msra.mxu0 0
        %1211 = vmatprep.subr.bf16.mxu0 0
        %1212 = vmatpush1.bf16.msra.mxu0 0
        %1213 = vmatprep.subr.bf16.mxu0 0
        %1214 = vmatpush1.bf16.msra.mxu0 0
        %1215 = vmatprep.subr.bf16.mxu0 0
        %1216 = vmatpush1.bf16.msra.mxu0 0
        %1217 = vmatprep.subr.bf16.mxu0 0
        %1218 = vmatpush1.bf16.msra.mxu0 0
        %1219 = vmatprep.mubr.bf16.mxu0 0
        %1220 = vmatmul.mubr.bf16.gmra.mrb[0].mxu0 %v1185
        %v1221 = vpop.f32.mrb[0].mxu0
        %v1222 = vadd.f32 0.0, %v1221
        %v1223 = vpop.f32.mrb[0].mxu0
        %v1224 = vpop.f32.mrb[0].mxu0
        %v1225 = vadd.f32 0.0, %v1224
        %v1226 = vpop.f32.mrb[0].mxu0
        %1227 = vdwg.mxu0
        %v1228 = vadd.f32 %v1169, %v1222
        %v1229 = vadd.f32 %v1170, %v1225
        %s1230 = scalar_lea.vmem [#allocation6], 88
        %v1231 = vld [vmem:[%s1230] sm:$0xf]
        %v1232 = vld [vmem:[%s1230 + $0x4] sm:$0xf]
        %v1233 = vrot.slane %v681, 2
        %v1234 = vrot.slane %v682, 2
        %v1235 = vsel %vm1174, %v1233, %v1234
        %v1238 = vunpack.c.l.b16 %v1231
        %v1239 = vunpack.c.l.b16 %v1232
        %v1240 = vpack.c.b16 %v1239, %v1238
        %v1243 = vsel %vm534, %v1235, 0
        %1245 = vmatprep.subr.bf16.mxu0 0
        %1246 = vmatpush1.bf16.msra.mxu0 %v1240
        %1247 = vmatprep.subr.bf16.mxu0 0
        %1248 = vmatpush1.bf16.msra.mxu0 0
        %1249 = vmatprep.subr.bf16.mxu0 0
        %1250 = vmatpush1.bf16.msra.mxu0 0
        %1251 = vmatprep.subr.bf16.mxu0 0
        %1252 = vmatpush1.bf16.msra.mxu0 0
        %1253 = vmatprep.subr.bf16.mxu0 0
        %1254 = vmatpush1.bf16.msra.mxu0 0
        %1255 = vmatprep.subr.bf16.mxu0 0
        %1256 = vmatpush1.bf16.msra.mxu0 0
        %1257 = vmatprep.subr.bf16.mxu0 0
        %1258 = vmatpush1.bf16.msra.mxu0 0
        %1259 = vmatprep.subr.bf16.mxu0 0
        %1260 = vmatpush1.bf16.msra.mxu0 0
        %1261 = vmatprep.subr.bf16.mxu0 0
        %1262 = vmatpush1.bf16.msra.mxu0 0
        %1263 = vmatprep.subr.bf16.mxu0 0
        %1264 = vmatpush1.bf16.msra.mxu0 0
        %1265 = vmatprep.subr.bf16.mxu0 0
        %1266 = vmatpush1.bf16.msra.mxu0 0
        %1267 = vmatprep.subr.bf16.mxu0 0
        %1268 = vmatpush1.bf16.msra.mxu0 0
        %1269 = vmatprep.subr.bf16.mxu0 0
        %1270 = vmatpush1.bf16.msra.mxu0 0
        %1271 = vmatprep.subr.bf16.mxu0 0
        %1272 = vmatpush1.bf16.msra.mxu0 0
        %1273 = vmatprep.subr.bf16.mxu0 0
        %1274 = vmatpush1.bf16.msra.mxu0 0
        %1275 = vmatprep.subr.bf16.mxu0 0
        %1276 = vmatpush1.bf16.msra.mxu0 0
        %1277 = vmatprep.mubr.bf16.mxu0 0
        %1278 = vmatmul.mubr.bf16.gmra.mrb[0].mxu0 %v1243
        %v1279 = vpop.f32.mrb[0].mxu0
        %v1280 = vadd.f32 0.0, %v1279
        %v1281 = vpop.f32.mrb[0].mxu0
        %v1282 = vpop.f32.mrb[0].mxu0
        %v1283 = vadd.f32 0.0, %v1282
        %v1284 = vpop.f32.mrb[0].mxu0
        %1285 = vdwg.mxu0
        %v1286 = vadd.f32 %v1228, %v1280
        %v1287 = vadd.f32 %v1229, %v1283
        %s1288 = scalar_lea.vmem [#allocation6], 40
        %v1289 = vld [vmem:[%s1288] sm:$0xf]
        %v1290 = vld [vmem:[%s1288 + $0x4] sm:$0xf]
        %vm1291 = vsmask.f32 5376
        %v1292 = vrot.slane %v792, 2
        %v1293 = vrot.slane %v794, 3
        %v1294 = vor.u32 %v1292, %v1293
        %v1295 = vrot.slane %v1049, 2
        %v1296 = vrot.slane %v799, 3
        %v1297 = vor.u32 %v1295, %v1296
        %v1298 = vsel %vm1291, %v1294, %v1297
        %v1301 = vunpack.c.l.b16 %v1289
        %v1302 = vunpack.c.l.b16 %v1290
        %v1303 = vpack.c.b16 %v1302, %v1301
        %v1306 = vsel %vm534, %v1298, 0
        %1308 = vmatprep.subr.bf16.mxu0 0
        %1309 = vmatpush1.bf16.msra.mxu0 %v1303
        %1310 = vmatprep.subr.bf16.mxu0 0
        %1311 = vmatpush1.bf16.msra.mxu0 0
        %1312 = vmatprep.subr.bf16.mxu0 0
        %1313 = vmatpush1.bf16.msra.mxu0 0
        %1314 = vmatprep.subr.bf16.mxu0 0
        %1315 = vmatpush1.bf16.msra.mxu0 0
        %1316 = vmatprep.subr.bf16.mxu0 0
        %1317 = vmatpush1.bf16.msra.mxu0 0
        %1318 = vmatprep.subr.bf16.mxu0 0
        %1319 = vmatpush1.bf16.msra.mxu0 0
        %1320 = vmatprep.subr.bf16.mxu0 0
        %1321 = vmatpush1.bf16.msra.mxu0 0
        %1322 = vmatprep.subr.bf16.mxu0 0
        %1323 = vmatpush1.bf16.msra.mxu0 0
        %1324 = vmatprep.subr.bf16.mxu0 0
        %1325 = vmatpush1.bf16.msra.mxu0 0
        %1326 = vmatprep.subr.bf16.mxu0 0
        %1327 = vmatpush1.bf16.msra.mxu0 0
        %1328 = vmatprep.subr.bf16.mxu0 0
        %1329 = vmatpush1.bf16.msra.mxu0 0
        %1330 = vmatprep.subr.bf16.mxu0 0
        %1331 = vmatpush1.bf16.msra.mxu0 0
        %1332 = vmatprep.subr.bf16.mxu0 0
        %1333 = vmatpush1.bf16.msra.mxu0 0
        %1334 = vmatprep.subr.bf16.mxu0 0
        %1335 = vmatpush1.bf16.msra.mxu0 0
        %1336 = vmatprep.subr.bf16.mxu0 0
        %1337 = vmatpush1.bf16.msra.mxu0 0
        %1338 = vmatprep.subr.bf16.mxu0 0
        %1339 = vmatpush1.bf16.msra.mxu0 0
        %1340 = vmatprep.mubr.bf16.mxu0 0
        %1341 = vmatmul.mubr.bf16.gmra.mrb[0].mxu0 %v1306
        %v1342 = vpop.f32.mrb[0].mxu0
        %v1343 = vadd.f32 0.0, %v1342
        %v1344 = vpop.f32.mrb[0].mxu0
        %v1345 = vpop.f32.mrb[0].mxu0
        %v1346 = vadd.f32 0.0, %v1345
        %v1347 = vpop.f32.mrb[0].mxu0
        %1348 = vdwg.mxu0
        %v1349 = vadd.f32 %v1286, %v1343
        %v1350 = vadd.f32 %v1287, %v1346
        %s1351 = scalar_lea.vmem [#allocation6], 96
        %v1352 = vld [vmem:[%s1351] sm:$0xf]
        %v1353 = vld [vmem:[%s1351 + $0x4] sm:$0xf]
        %v1354 = vrot.slane %v858, 2
        %v1355 = vrot.slane %v860, 3
        %v1356 = vor.u32 %v1354, %v1355
        %v1357 = vrot.slane %v1113, 2
        %v1358 = vrot.slane %v865, 3
        %v1359 = vor.u32 %v1357, %v1358
        %v1360 = vsel %vm1291, %v1356, %v1359
        %v1363 = vunpack.c.l.b16 %v1352
        %v1364 = vunpack.c.l.b16 %v1353
        %v1365 = vpack.c.b16 %v1364, %v1363
        %v1368 = vsel %vm534, %v1360, 0
        %1370 = vmatprep.subr.bf16.mxu0 0
        %1371 = vmatpush1.bf16.msra.mxu0 %v1365
        %1372 = vmatprep.subr.bf16.mxu0 0
        %1373 = vmatpush1.bf16.msra.mxu0 0
        %1374 = vmatprep.subr.bf16.mxu0 0
        %1375 = vmatpush1.bf16.msra.mxu0 0
        %1376 = vmatprep.subr.bf16.mxu0 0
        %1377 = vmatpush1.bf16.msra.mxu0 0
        %1378 = vmatprep.subr.bf16.mxu0 0
        %1379 = vmatpush1.bf16.msra.mxu0 0
        %1380 = vmatprep.subr.bf16.mxu0 0
        %1381 = vmatpush1.bf16.msra.mxu0 0
        %1382 = vmatprep.subr.bf16.mxu0 0
        %1383 = vmatpush1.bf16.msra.mxu0 0
        %1384 = vmatprep.subr.bf16.mxu0 0
        %1385 = vmatpush1.bf16.msra.mxu0 0
        %1386 = vmatprep.subr.bf16.mxu0 0
        %1387 = vmatpush1.bf16.msra.mxu0 0
        %1388 = vmatprep.subr.bf16.mxu0 0
        %1389 = vmatpush1.bf16.msra.mxu0 0
        %1390 = vmatprep.subr.bf16.mxu0 0
        %1391 = vmatpush1.bf16.msra.mxu0 0
        %1392 = vmatprep.subr.bf16.mxu0 0
        %1393 = vmatpush1.bf16.msra.mxu0 0
        %1394 = vmatprep.subr.bf16.mxu0 0
        %1395 = vmatpush1.bf16.msra.mxu0 0
        %1396 = vmatprep.subr.bf16.mxu0 0
        %1397 = vmatpush1.bf16.msra.mxu0 0
        %1398 = vmatprep.subr.bf16.mxu0 0
        %1399 = vmatpush1.bf16.msra.mxu0 0
        %1400 = vmatprep.subr.bf16.mxu0 0
        %1401 = vmatpush1.bf16.msra.mxu0 0
        %1402 = vmatprep.mubr.bf16.mxu0 0
        %1403 = vmatmul.mubr.bf16.gmra.mrb[0].mxu0 %v1368
        %v1404 = vpop.f32.mrb[0].mxu0
        %v1405 = vadd.f32 0.0, %v1404
        %v1406 = vpop.f32.mrb[0].mxu0
        %v1407 = vpop.f32.mrb[0].mxu0
        %v1408 = vadd.f32 0.0, %v1407
        %v1409 = vpop.f32.mrb[0].mxu0
        %1410 = vdwg.mxu0
        %v1411 = vadd.f32 %v1349, %v1405
        %v1412 = vadd.f32 %v1350, %v1408
        %s1413 = scalar_lea.vmem [#allocation6], 48
        %v1414 = vld [vmem:[%s1413] sm:$0xf]
        %v1415 = vld [vmem:[%s1413 + $0x4] sm:$0xf]
        %vm1416 = vcmask 1044480
        %v1417 = vrot.slane %v669, 3
        %v1418 = vrot.slane %v670, 3
        %v1419 = vsel %vm1416, %v1417, %v1418
        %v1422 = vunpack.c.l.b16 %v1414
        %v1423 = vunpack.c.l.b16 %v1415
        %v1424 = vpack.c.b16 %v1423, %v1422
        %v1427 = vsel %vm534, %v1419, 0
        %1429 = vmatprep.subr.bf16.mxu0 0
        %1430 = vmatpush1.bf16.msra.mxu0 %v1424
        %1431 = vmatprep.subr.bf16.mxu0 0
        %1432 = vmatpush1.bf16.msra.mxu0 0
        %1433 = vmatprep.subr.bf16.mxu0 0
        %1434 = vmatpush1.bf16.msra.mxu0 0
        %1435 = vmatprep.subr.bf16.mxu0 0
        %1436 = vmatpush1.bf16.msra.mxu0 0
        %1437 = vmatprep.subr.bf16.mxu0 0
        %1438 = vmatpush1.bf16.msra.mxu0 0
        %1439 = vmatprep.subr.bf16.mxu0 0
        %1440 = vmatpush1.bf16.msra.mxu0 0
        %1441 = vmatprep.subr.bf16.mxu0 0
        %1442 = vmatpush1.bf16.msra.mxu0 0
        %1443 = vmatprep.subr.bf16.mxu0 0
        %1444 = vmatpush1.bf16.msra.mxu0 0
        %1445 = vmatprep.subr.bf16.mxu0 0
        %1446 = vmatpush1.bf16.msra.mxu0 0
        %1447 = vmatprep.subr.bf16.mxu0 0
        %1448 = vmatpush1.bf16.msra.mxu0 0
        %1449 = vmatprep.subr.bf16.mxu0 0
        %1450 = vmatpush1.bf16.msra.mxu0 0
        %1451 = vmatprep.subr.bf16.mxu0 0
        %1452 = vmatpush1.bf16.msra.mxu0 0
        %1453 = vmatprep.subr.bf16.mxu0 0
        %1454 = vmatpush1.bf16.msra.mxu0 0
        %1455 = vmatprep.subr.bf16.mxu0 0
        %1456 = vmatpush1.bf16.msra.mxu0 0
        %1457 = vmatprep.subr.bf16.mxu0 0
        %1458 = vmatpush1.bf16.msra.mxu0 0
        %1459 = vmatprep.subr.bf16.mxu0 0
        %1460 = vmatpush1.bf16.msra.mxu0 0
        %1461 = vmatprep.mubr.bf16.mxu0 0
        %1462 = vmatmul.mubr.bf16.gmra.mrb[0].mxu0 %v1427
        %v1463 = vpop.f32.mrb[0].mxu0
        %v1464 = vadd.f32 0.0, %v1463
        %v1465 = vpop.f32.mrb[0].mxu0
        %v1466 = vpop.f32.mrb[0].mxu0
        %v1467 = vadd.f32 0.0, %v1466
        %v1468 = vpop.f32.mrb[0].mxu0
        %1469 = vdwg.mxu0
        %v1470 = vadd.f32 %v1411, %v1464
        %v1471 = vadd.f32 %v1412, %v1467
        %s1472 = scalar_lea.vmem [#allocation6], 104
        %v1473 = vld [vmem:[%s1472] sm:$0xf]
        %v1474 = vld [vmem:[%s1472 + $0x4] sm:$0xf]
        %v1475 = vrot.slane %v681, 3
        %v1476 = vrot.slane %v682, 3
        %v1477 = vsel %vm1416, %v1475, %v1476
        %v1480 = vunpack.c.l.b16 %v1473
        %v1481 = vunpack.c.l.b16 %v1474
        %v1482 = vpack.c.b16 %v1481, %v1480
        %v1485 = vsel %vm534, %v1477, 0
        %1487 = vmatprep.subr.bf16.mxu0 0
        %1488 = vmatpush1.bf16.msra.mxu0 %v1482
        %1489 = vmatprep.subr.bf16.mxu0 0
        %1490 = vmatpush1.bf16.msra.mxu0 0
        %1491 = vmatprep.subr.bf16.mxu0 0
        %1492 = vmatpush1.bf16.msra.mxu0 0
        %1493 = vmatprep.subr.bf16.mxu0 0
        %1494 = vmatpush1.bf16.msra.mxu0 0
        %1495 = vmatprep.subr.bf16.mxu0 0
        %1496 = vmatpush1.bf16.msra.mxu0 0
        %1497 = vmatprep.subr.bf16.mxu0 0
        %1498 = vmatpush1.bf16.msra.mxu0 0
        %1499 = vmatprep.subr.bf16.mxu0 0
        %1500 = vmatpush1.bf16.msra.mxu0 0
        %1501 = vmatprep.subr.bf16.mxu0 0
        %1502 = vmatpush1.bf16.msra.mxu0 0
        %1503 = vmatprep.subr.bf16.mxu0 0
        %1504 = vmatpush1.bf16.msra.mxu0 0
        %1505 = vmatprep.subr.bf16.mxu0 0
        %1506 = vmatpush1.bf16.msra.mxu0 0
        %1507 = vmatprep.subr.bf16.mxu0 0
        %1508 = vmatpush1.bf16.msra.mxu0 0
        %1509 = vmatprep.subr.bf16.mxu0 0
        %1510 = vmatpush1.bf16.msra.mxu0 0
        %1511 = vmatprep.subr.bf16.mxu0 0
        %1512 = vmatpush1.bf16.msra.mxu0 0
        %1513 = vmatprep.subr.bf16.mxu0 0
        %1514 = vmatpush1.bf16.msra.mxu0 0
        %1515 = vmatprep.subr.bf16.mxu0 0
        %1516 = vmatpush1.bf16.msra.mxu0 0
        %1517 = vmatprep.subr.bf16.mxu0 0
        %1518 = vmatpush1.bf16.msra.mxu0 0
        %1519 = vmatprep.mubr.bf16.mxu0 0
        %1520 = vmatmul.mubr.bf16.gmra.mrb[0].mxu0 %v1485
        %v1521 = vpop.f32.mrb[0].mxu0
        %v1522 = vadd.f32 0.0, %v1521
        %v1523 = vpop.f32.mrb[0].mxu0
        %v1524 = vpop.f32.mrb[0].mxu0
        %v1525 = vadd.f32 0.0, %v1524
        %v1526 = vpop.f32.mrb[0].mxu0
        %1527 = vdwg.mxu0
        %v1528 = vadd.f32 %v1470, %v1522
        %v1529 = vadd.f32 %v1471, %v1525
        %v1530 = vstv %s647
        %v1531 = vadd.f32 %v1528, %v1530
        %v1532 = vadd.f32 %v1529, %v1530
        %v1533 = vxor.u32 %v1531, 2147483648
        %v1534 = vxor.u32 %v1532, 2147483648
        %v1535 = vmul.f32 %v1533, 1.442695
        %v1536 = vpow.pop %v1535
        %v1537 = vmul.f32 %v1534, 1.442695
        %v1538 = vpow.pop %v1537
        %v1539 = vadd.f32 %v1536, 1.0
        %v1540 = vadd.f32 %v1538, 1.0
        %v1541 = vrcp.pop %v1539
        %v1542 = vmul.f32 1.0, %v1541
        %v1543 = vrcp.pop %v1540
        %v1544 = vmul.f32 1.0, %v1543
        %v1545 = vmul.f32 %v1542, 0.33333334
        %v1546 = vmul.f32 %v1544, 0.33333334
        %v1547 = vmul.f32 %v591, 0.0625
        %v1548 = vmul.f32 %v598, 0.0625
        %v1549 = vmul.f32 %v605, 0.0625
        %v1550 = vmul.f32 %v612, 0.0625
        %s1551 = sld [smem:[#allocation2 + $0x1]]
        %v1552 = vpack.c.bf16 %v557, %v557
        %v1553 = vpack.c.bf16 %v566, %v566
        %v1554 = vpack.c.bf16 %v575, %v575
        %v1555 = vpack.c.bf16 %v584, %v584
        %v1560 = vunpack.c.l.b16 %v1552
        %v1561 = vunpack.c.l.b16 %v1553
        %v1562 = vunpack.c.l.b16 %v1554
        %v1563 = vunpack.c.l.b16 %v1555
        %vm1564 = vcmask 1044484
        %v1565 = vsel %vm1564, %v1561, %v1560
        %vm1566 = vcmask 1045509
        %v1567 = vsel %vm1566, %v1562, %v1565
        %vm1568 = vcmask 1046534
        %v1569 = vsel %vm1568, %v1563, %v1567
        %v1570 = vpack.c.b16 %v1569, %v1569
        %v1572 = vsel %vm668, 0, %v1570
        %vm1573 = vcmask 1043456
        %vm1574 = vsmask.f32 3328
        %vm1575 = vmand %vm1573, %vm1574
        %v1576 = vsel %vm1575, %v1572, 0
        %v1577 = vpack.c.bf16 %v1547, %v1547
        %v1578 = vpack.c.bf16 %v1548, %v1548
        %v1579 = vpack.c.bf16 %v1549, %v1549
        %v1580 = vpack.c.bf16 %v1550, %v1550
        %v1585 = vunpack.c.l.b16 %v1577
        %v1586 = vunpack.c.l.b16 %v1578
        %v1587 = vunpack.c.l.b16 %v1579
        %v1588 = vunpack.c.l.b16 %v1580
        %v1589 = vsel %vm1564, %v1586, %v1585
        %v1590 = vsel %vm1566, %v1587, %v1589
        %v1591 = vsel %vm1568, %v1588, %v1590
        %v1592 = vpack.c.b16 %v1591, %v1591
        %v1594 = vsel %vm668, 0, %v1592
        %v1595 = vsel %vm1575, %v1594, 0
        %v1596 = vld [vmem:[#allocation7] sm:$0xf]
        %v1597 = vld [vmem:[#allocation7 + $0x4] sm:$0xf]
        %s1598 = scalar_lea.vmem [#allocation7], 56
        %v1599 = vld [vmem:[%s1598] sm:$0xf]
        %v1600 = vld [vmem:[%s1598 + $0x4] sm:$0xf]
        %v1603 = vunpack.c.l.b16 %v1599
        %v1604 = vunpack.c.l.b16 %v1600
        %v1605 = vpack.c.b16 %v1604, %v1603
        %v1608 = vsel %vm534, %v1595, 0
        %1610 = vmatprep.subr.bf16.mxu0 0
        %1611 = vmatpush1.bf16.msra.mxu0 %v1605
        %1612 = vmatprep.subr.bf16.mxu0 0
        %1613 = vmatpush1.bf16.msra.mxu0 0
        %1614 = vmatprep.subr.bf16.mxu0 0
        %1615 = vmatpush1.bf16.msra.mxu0 0
        %1616 = vmatprep.subr.bf16.mxu0 0
        %1617 = vmatpush1.bf16.msra.mxu0 0
        %1618 = vmatprep.subr.bf16.mxu0 0
        %1619 = vmatpush1.bf16.msra.mxu0 0
        %1620 = vmatprep.subr.bf16.mxu0 0
        %1621 = vmatpush1.bf16.msra.mxu0 0
        %1622 = vmatprep.subr.bf16.mxu0 0
        %1623 = vmatpush1.bf16.msra.mxu0 0
        %1624 = vmatprep.subr.bf16.mxu0 0
        %1625 = vmatpush1.bf16.msra.mxu0 0
        %1626 = vmatprep.subr.bf16.mxu0 0
        %1627 = vmatpush1.bf16.msra.mxu0 0
        %1628 = vmatprep.subr.bf16.mxu0 0
        %1629 = vmatpush1.bf16.msra.mxu0 0
        %1630 = vmatprep.subr.bf16.mxu0 0
        %1631 = vmatpush1.bf16.msra.mxu0 0
        %1632 = vmatprep.subr.bf16.mxu0 0
        %1633 = vmatpush1.bf16.msra.mxu0 0
        %1634 = vmatprep.subr.bf16.mxu0 0
        %1635 = vmatpush1.bf16.msra.mxu0 0
        %1636 = vmatprep.subr.bf16.mxu0 0
        %1637 = vmatpush1.bf16.msra.mxu0 0
        %1638 = vmatprep.subr.bf16.mxu0 0
        %1639 = vmatpush1.bf16.msra.mxu0 0
        %1640 = vmatprep.subr.bf16.mxu0 0
        %1641 = vmatpush1.bf16.msra.mxu0 0
        %1642 = vmatprep.mubr.bf16.mxu0 0
        %1643 = vmatmul.mubr.bf16.gmra.mrb[0].mxu0 %v1608
        %v1644 = vpop.f32.mrb[0].mxu0
        %v1645 = vadd.f32 0.0, %v1644
        %v1646 = vpop.f32.mrb[0].mxu0
        %v1647 = vpop.f32.mrb[0].mxu0
        %v1648 = vpop.f32.mrb[0].mxu0
        %1649 = vdwg.mxu0
        %v1652 = vunpack.c.l.b16 %v1596
        %v1653 = vunpack.c.l.b16 %v1597
        %v1654 = vpack.c.b16 %v1653, %v1652
        %v1657 = vsel %vm534, %v1576, 0
        %1659 = vmatprep.subr.bf16.mxu0 0
        %1660 = vmatpush1.bf16.msra.mxu0 %v1654
        %1661 = vmatprep.subr.bf16.mxu0 0
        %1662 = vmatpush1.bf16.msra.mxu0 0
        %1663 = vmatprep.subr.bf16.mxu0 0
        %1664 = vmatpush1.bf16.msra.mxu0 0
        %1665 = vmatprep.subr.bf16.mxu0 0
        %1666 = vmatpush1.bf16.msra.mxu0 0
        %1667 = vmatprep.subr.bf16.mxu0 0
        %1668 = vmatpush1.bf16.msra.mxu0 0
        %1669 = vmatprep.subr.bf16.mxu0 0
        %1670 = vmatpush1.bf16.msra.mxu0 0
        %1671 = vmatprep.subr.bf16.mxu0 0
        %1672 = vmatpush1.bf16.msra.mxu0 0
        %1673 = vmatprep.subr.bf16.mxu0 0
        %1674 = vmatpush1.bf16.msra.mxu0 0
        %1675 = vmatprep.subr.bf16.mxu0 0
        %1676 = vmatpush1.bf16.msra.mxu0 0
        %1677 = vmatprep.subr.bf16.mxu0 0
        %1678 = vmatpush1.bf16.msra.mxu0 0
        %1679 = vmatprep.subr.bf16.mxu0 0
        %1680 = vmatpush1.bf16.msra.mxu0 0
        %1681 = vmatprep.subr.bf16.mxu0 0
        %1682 = vmatpush1.bf16.msra.mxu0 0
        %1683 = vmatprep.subr.bf16.mxu0 0
        %1684 = vmatpush1.bf16.msra.mxu0 0
        %1685 = vmatprep.subr.bf16.mxu0 0
        %1686 = vmatpush1.bf16.msra.mxu0 0
        %1687 = vmatprep.subr.bf16.mxu0 0
        %1688 = vmatpush1.bf16.msra.mxu0 0
        %1689 = vmatprep.subr.bf16.mxu0 0
        %1690 = vmatpush1.bf16.msra.mxu0 0
        %1691 = vmatprep.mubr.bf16.mxu0 0
        %1692 = vmatmul.mubr.bf16.gmra.mrb[0].mxu0 %v1657
        %v1693 = vpop.f32.mrb[0].mxu0
        %v1694 = vadd.f32 %v1645, %v1693
        %v1695 = vpop.f32.mrb[0].mxu0
        %v1696 = vpop.f32.mrb[0].mxu0
        %v1697 = vpop.f32.mrb[0].mxu0
        %1698 = vdwg.mxu0
        %s1699 = scalar_lea.vmem [#allocation7], 8
        %v1700 = vld [vmem:[%s1699] sm:$0xf]
        %v1701 = vld [vmem:[%s1699 + $0x4] sm:$0xf]
        %v1702 = vshrl.u32 %v1576, 16
        %v1704 = vshll.u32 %v1576, 16
        %v1706 = vrot.slane %v1704, 1
        %v1707 = vor.u32 %v1702, %v1706
        %v1710 = vunpack.c.l.b16 %v1700
        %v1711 = vunpack.c.l.b16 %v1701
        %v1712 = vpack.c.b16 %v1711, %v1710
        %v1715 = vsel %vm534, %v1707, 0
        %1717 = vmatprep.subr.bf16.mxu0 0
        %1718 = vmatpush1.bf16.msra.mxu0 %v1712
        %1719 = vmatprep.subr.bf16.mxu0 0
        %1720 = vmatpush1.bf16.msra.mxu0 0
        %1721 = vmatprep.subr.bf16.mxu0 0
        %1722 = vmatpush1.bf16.msra.mxu0 0
        %1723 = vmatprep.subr.bf16.mxu0 0
        %1724 = vmatpush1.bf16.msra.mxu0 0
        %1725 = vmatprep.subr.bf16.mxu0 0
        %1726 = vmatpush1.bf16.msra.mxu0 0
        %1727 = vmatprep.subr.bf16.mxu0 0
        %1728 = vmatpush1.bf16.msra.mxu0 0
        %1729 = vmatprep.subr.bf16.mxu0 0
        %1730 = vmatpush1.bf16.msra.mxu0 0
        %1731 = vmatprep.subr.bf16.mxu0 0
        %1732 = vmatpush1.bf16.msra.mxu0 0
        %1733 = vmatprep.subr.bf16.mxu0 0
        %1734 = vmatpush1.bf16.msra.mxu0 0
        %1735 = vmatprep.subr.bf16.mxu0 0
        %1736 = vmatpush1.bf16.msra.mxu0 0
        %1737 = vmatprep.subr.bf16.mxu0 0
        %1738 = vmatpush1.bf16.msra.mxu0 0
        %1739 = vmatprep.subr.bf16.mxu0 0
        %1740 = vmatpush1.bf16.msra.mxu0 0
        %1741 = vmatprep.subr.bf16.mxu0 0
        %1742 = vmatpush1.bf16.msra.mxu0 0
        %1743 = vmatprep.subr.bf16.mxu0 0
        %1744 = vmatpush1.bf16.msra.mxu0 0
        %1745 = vmatprep.subr.bf16.mxu0 0
        %1746 = vmatpush1.bf16.msra.mxu0 0
        %1747 = vmatprep.subr.bf16.mxu0 0
        %1748 = vmatpush1.bf16.msra.mxu0 0
        %1749 = vmatprep.mubr.bf16.mxu0 0
        %1750 = vmatmul.mubr.bf16.gmra.mrb[0].mxu0 %v1715
        %v1751 = vpop.f32.mrb[0].mxu0
        %v1752 = vadd.f32 0.0, %v1751
        %v1753 = vpop.f32.mrb[0].mxu0
        %v1754 = vpop.f32.mrb[0].mxu0
        %v1755 = vpop.f32.mrb[0].mxu0
        %1756 = vdwg.mxu0
        %v1757 = vadd.f32 %v1694, %v1752
        %s1758 = scalar_lea.vmem [#allocation7], 64
        %v1759 = vld [vmem:[%s1758] sm:$0xf]
        %v1760 = vld [vmem:[%s1758 + $0x4] sm:$0xf]
        %v1761 = vshrl.u32 %v1595, 16
        %v1763 = vshll.u32 %v1595, 16
        %v1765 = vrot.slane %v1763, 1
        %v1766 = vor.u32 %v1761, %v1765
        %v1769 = vunpack.c.l.b16 %v1759
        %v1770 = vunpack.c.l.b16 %v1760
        %v1771 = vpack.c.b16 %v1770, %v1769
        %v1774 = vsel %vm534, %v1766, 0
        %1776 = vmatprep.subr.bf16.mxu0 0
        %1777 = vmatpush1.bf16.msra.mxu0 %v1771
        %1778 = vmatprep.subr.bf16.mxu0 0
        %1779 = vmatpush1.bf16.msra.mxu0 0
        %1780 = vmatprep.subr.bf16.mxu0 0
        %1781 = vmatpush1.bf16.msra.mxu0 0
        %1782 = vmatprep.subr.bf16.mxu0 0
        %1783 = vmatpush1.bf16.msra.mxu0 0
        %1784 = vmatprep.subr.bf16.mxu0 0
        %1785 = vmatpush1.bf16.msra.mxu0 0
        %1786 = vmatprep.subr.bf16.mxu0 0
        %1787 = vmatpush1.bf16.msra.mxu0 0
        %1788 = vmatprep.subr.bf16.mxu0 0
        %1789 = vmatpush1.bf16.msra.mxu0 0
        %1790 = vmatprep.subr.bf16.mxu0 0
        %1791 = vmatpush1.bf16.msra.mxu0 0
        %1792 = vmatprep.subr.bf16.mxu0 0
        %1793 = vmatpush1.bf16.msra.mxu0 0
        %1794 = vmatprep.subr.bf16.mxu0 0
        %1795 = vmatpush1.bf16.msra.mxu0 0
        %1796 = vmatprep.subr.bf16.mxu0 0
        %1797 = vmatpush1.bf16.msra.mxu0 0
        %1798 = vmatprep.subr.bf16.mxu0 0
        %1799 = vmatpush1.bf16.msra.mxu0 0
        %1800 = vmatprep.subr.bf16.mxu0 0
        %1801 = vmatpush1.bf16.msra.mxu0 0
        %1802 = vmatprep.subr.bf16.mxu0 0
        %1803 = vmatpush1.bf16.msra.mxu0 0
        %1804 = vmatprep.subr.bf16.mxu0 0
        %1805 = vmatpush1.bf16.msra.mxu0 0
        %1806 = vmatprep.subr.bf16.mxu0 0
        %1807 = vmatpush1.bf16.msra.mxu0 0
        %1808 = vmatprep.mubr.bf16.mxu0 0
        %1809 = vmatmul.mubr.bf16.gmra.mrb[0].mxu0 %v1774
        %v1810 = vpop.f32.mrb[0].mxu0
        %v1811 = vadd.f32 0.0, %v1810
        %v1812 = vpop.f32.mrb[0].mxu0
        %v1813 = vpop.f32.mrb[0].mxu0
        %v1814 = vpop.f32.mrb[0].mxu0
        %1815 = vdwg.mxu0
        %v1816 = vadd.f32 %v1757, %v1811
        %s1817 = scalar_lea.vmem [#allocation7], 16
        %v1818 = vld [vmem:[%s1817] sm:$0xf]
        %v1819 = vld [vmem:[%s1817 + $0x4] sm:$0xf]
        %v1821 = vrot.slane %v1576, 1
        %v1824 = vunpack.c.l.b16 %v1818
        %v1825 = vunpack.c.l.b16 %v1819
        %v1826 = vpack.c.b16 %v1825, %v1824
        %v1829 = vsel %vm534, %v1821, 0
        %1831 = vmatprep.subr.bf16.mxu0 0
        %1832 = vmatpush1.bf16.msra.mxu0 %v1826
        %1833 = vmatprep.subr.bf16.mxu0 0
        %1834 = vmatpush1.bf16.msra.mxu0 0
        %1835 = vmatprep.subr.bf16.mxu0 0
        %1836 = vmatpush1.bf16.msra.mxu0 0
        %1837 = vmatprep.subr.bf16.mxu0 0
        %1838 = vmatpush1.bf16.msra.mxu0 0
        %1839 = vmatprep.subr.bf16.mxu0 0
        %1840 = vmatpush1.bf16.msra.mxu0 0
        %1841 = vmatprep.subr.bf16.mxu0 0
        %1842 = vmatpush1.bf16.msra.mxu0 0
        %1843 = vmatprep.subr.bf16.mxu0 0
        %1844 = vmatpush1.bf16.msra.mxu0 0
        %1845 = vmatprep.subr.bf16.mxu0 0
        %1846 = vmatpush1.bf16.msra.mxu0 0
        %1847 = vmatprep.subr.bf16.mxu0 0
        %1848 = vmatpush1.bf16.msra.mxu0 0
        %1849 = vmatprep.subr.bf16.mxu0 0
        %1850 = vmatpush1.bf16.msra.mxu0 0
        %1851 = vmatprep.subr.bf16.mxu0 0
        %1852 = vmatpush1.bf16.msra.mxu0 0
        %1853 = vmatprep.subr.bf16.mxu0 0
        %1854 = vmatpush1.bf16.msra.mxu0 0
        %1855 = vmatprep.subr.bf16.mxu0 0
        %1856 = vmatpush1.bf16.msra.mxu0 0
        %1857 = vmatprep.subr.bf16.mxu0 0
        %1858 = vmatpush1.bf16.msra.mxu0 0
        %1859 = vmatprep.subr.bf16.mxu0 0
        %1860 = vmatpush1.bf16.msra.mxu0 0
        %1861 = vmatprep.subr.bf16.mxu0 0
        %1862 = vmatpush1.bf16.msra.mxu0 0
        %1863 = vmatprep.mubr.bf16.mxu0 0
        %1864 = vmatmul.mubr.bf16.gmra.mrb[0].mxu0 %v1829
        %v1865 = vpop.f32.mrb[0].mxu0
        %v1866 = vadd.f32 0.0, %v1865
        %v1867 = vpop.f32.mrb[0].mxu0
        %v1868 = vpop.f32.mrb[0].mxu0
        %v1869 = vpop.f32.mrb[0].mxu0
        %1870 = vdwg.mxu0
        %v1871 = vadd.f32 %v1816, %v1866
        %s1872 = scalar_lea.vmem [#allocation7], 72
        %v1873 = vld [vmem:[%s1872] sm:$0xf]
        %v1874 = vld [vmem:[%s1872 + $0x4] sm:$0xf]
        %v1876 = vrot.slane %v1595, 1
        %v1879 = vunpack.c.l.b16 %v1873
        %v1880 = vunpack.c.l.b16 %v1874
        %v1881 = vpack.c.b16 %v1880, %v1879
        %v1884 = vsel %vm534, %v1876, 0
        %1886 = vmatprep.subr.bf16.mxu0 0
        %1887 = vmatpush1.bf16.msra.mxu0 %v1881
        %1888 = vmatprep.subr.bf16.mxu0 0
        %1889 = vmatpush1.bf16.msra.mxu0 0
        %1890 = vmatprep.subr.bf16.mxu0 0
        %1891 = vmatpush1.bf16.msra.mxu0 0
        %1892 = vmatprep.subr.bf16.mxu0 0
        %1893 = vmatpush1.bf16.msra.mxu0 0
        %1894 = vmatprep.subr.bf16.mxu0 0
        %1895 = vmatpush1.bf16.msra.mxu0 0
        %1896 = vmatprep.subr.bf16.mxu0 0
        %1897 = vmatpush1.bf16.msra.mxu0 0
        %1898 = vmatprep.subr.bf16.mxu0 0
        %1899 = vmatpush1.bf16.msra.mxu0 0
        %1900 = vmatprep.subr.bf16.mxu0 0
        %1901 = vmatpush1.bf16.msra.mxu0 0
        %1902 = vmatprep.subr.bf16.mxu0 0
        %1903 = vmatpush1.bf16.msra.mxu0 0
        %1904 = vmatprep.subr.bf16.mxu0 0
        %1905 = vmatpush1.bf16.msra.mxu0 0
        %1906 = vmatprep.subr.bf16.mxu0 0
        %1907 = vmatpush1.bf16.msra.mxu0 0
        %1908 = vmatprep.subr.bf16.mxu0 0
        %1909 = vmatpush1.bf16.msra.mxu0 0
        %1910 = vmatprep.subr.bf16.mxu0 0
        %1911 = vmatpush1.bf16.msra.mxu0 0
        %1912 = vmatprep.subr.bf16.mxu0 0
        %1913 = vmatpush1.bf16.msra.mxu0 0
        %1914 = vmatprep.subr.bf16.mxu0 0
        %1915 = vmatpush1.bf16.msra.mxu0 0
        %1916 = vmatprep.subr.bf16.mxu0 0
        %1917 = vmatpush1.bf16.msra.mxu0 0
        %1918 = vmatprep.mubr.bf16.mxu0 0
        %1919 = vmatmul.mubr.bf16.gmra.mrb[0].mxu0 %v1884
        %v1920 = vpop.f32.mrb[0].mxu0
        %v1921 = vadd.f32 0.0, %v1920
        %v1922 = vpop.f32.mrb[0].mxu0
        %v1923 = vpop.f32.mrb[0].mxu0
        %v1924 = vpop.f32.mrb[0].mxu0
        %1925 = vdwg.mxu0
        %v1926 = vadd.f32 %v1871, %v1921
        %s1927 = scalar_lea.vmem [#allocation7], 24
        %v1928 = vld [vmem:[%s1927] sm:$0xf]
        %v1929 = vld [vmem:[%s1927 + $0x4] sm:$0xf]
        %v1930 = vrot.slane %v1702, 1
        %v1931 = vrot.slane %v1704, 2
        %v1932 = vor.u32 %v1930, %v1931
        %v1935 = vunpack.c.l.b16 %v1928
        %v1936 = vunpack.c.l.b16 %v1929
        %v1937 = vpack.c.b16 %v1936, %v1935
        %v1940 = vsel %vm534, %v1932, 0
        %1942 = vmatprep.subr.bf16.mxu0 0
        %1943 = vmatpush1.bf16.msra.mxu0 %v1937
        %1944 = vmatprep.subr.bf16.mxu0 0
        %1945 = vmatpush1.bf16.msra.mxu0 0
        %1946 = vmatprep.subr.bf16.mxu0 0
        %1947 = vmatpush1.bf16.msra.mxu0 0
        %1948 = vmatprep.subr.bf16.mxu0 0
        %1949 = vmatpush1.bf16.msra.mxu0 0
        %1950 = vmatprep.subr.bf16.mxu0 0
        %1951 = vmatpush1.bf16.msra.mxu0 0
        %1952 = vmatprep.subr.bf16.mxu0 0
        %1953 = vmatpush1.bf16.msra.mxu0 0
        %1954 = vmatprep.subr.bf16.mxu0 0
        %1955 = vmatpush1.bf16.msra.mxu0 0
        %1956 = vmatprep.subr.bf16.mxu0 0
        %1957 = vmatpush1.bf16.msra.mxu0 0
        %1958 = vmatprep.subr.bf16.mxu0 0
        %1959 = vmatpush1.bf16.msra.mxu0 0
        %1960 = vmatprep.subr.bf16.mxu0 0
        %1961 = vmatpush1.bf16.msra.mxu0 0
        %1962 = vmatprep.subr.bf16.mxu0 0
        %1963 = vmatpush1.bf16.msra.mxu0 0
        %1964 = vmatprep.subr.bf16.mxu0 0
        %1965 = vmatpush1.bf16.msra.mxu0 0
        %1966 = vmatprep.subr.bf16.mxu0 0
        %1967 = vmatpush1.bf16.msra.mxu0 0
        %1968 = vmatprep.subr.bf16.mxu0 0
        %1969 = vmatpush1.bf16.msra.mxu0 0
        %1970 = vmatprep.subr.bf16.mxu0 0
        %1971 = vmatpush1.bf16.msra.mxu0 0
        %1972 = vmatprep.subr.bf16.mxu0 0
        %1973 = vmatpush1.bf16.msra.mxu0 0
        %1974 = vmatprep.mubr.bf16.mxu0 0
        %1975 = vmatmul.mubr.bf16.gmra.mrb[0].mxu0 %v1940
        %v1976 = vpop.f32.mrb[0].mxu0
        %v1977 = vadd.f32 0.0, %v1976
        %v1978 = vpop.f32.mrb[0].mxu0
        %v1979 = vpop.f32.mrb[0].mxu0
        %v1980 = vpop.f32.mrb[0].mxu0
        %1981 = vdwg.mxu0
        %v1982 = vadd.f32 %v1926, %v1977
        %s1983 = scalar_lea.vmem [#allocation7], 80
        %v1984 = vld [vmem:[%s1983] sm:$0xf]
        %v1985 = vld [vmem:[%s1983 + $0x4] sm:$0xf]
        %v1986 = vrot.slane %v1761, 1
        %v1987 = vrot.slane %v1763, 2
        %v1988 = vor.u32 %v1986, %v1987
        %v1991 = vunpack.c.l.b16 %v1984
        %v1992 = vunpack.c.l.b16 %v1985
        %v1993 = vpack.c.b16 %v1992, %v1991
        %v1996 = vsel %vm534, %v1988, 0
        %1998 = vmatprep.subr.bf16.mxu0 0
        %1999 = vmatpush1.bf16.msra.mxu0 %v1993
        %2000 = vmatprep.subr.bf16.mxu0 0
        %2001 = vmatpush1.bf16.msra.mxu0 0
        %2002 = vmatprep.subr.bf16.mxu0 0
        %2003 = vmatpush1.bf16.msra.mxu0 0
        %2004 = vmatprep.subr.bf16.mxu0 0
        %2005 = vmatpush1.bf16.msra.mxu0 0
        %2006 = vmatprep.subr.bf16.mxu0 0
        %2007 = vmatpush1.bf16.msra.mxu0 0
        %2008 = vmatprep.subr.bf16.mxu0 0
        %2009 = vmatpush1.bf16.msra.mxu0 0
        %2010 = vmatprep.subr.bf16.mxu0 0
        %2011 = vmatpush1.bf16.msra.mxu0 0
        %2012 = vmatprep.subr.bf16.mxu0 0
        %2013 = vmatpush1.bf16.msra.mxu0 0
        %2014 = vmatprep.subr.bf16.mxu0 0
        %2015 = vmatpush1.bf16.msra.mxu0 0
        %2016 = vmatprep.subr.bf16.mxu0 0
        %2017 = vmatpush1.bf16.msra.mxu0 0
        %2018 = vmatprep.subr.bf16.mxu0 0
        %2019 = vmatpush1.bf16.msra.mxu0 0
        %2020 = vmatprep.subr.bf16.mxu0 0
        %2021 = vmatpush1.bf16.msra.mxu0 0
        %2022 = vmatprep.subr.bf16.mxu0 0
        %2023 = vmatpush1.bf16.msra.mxu0 0
        %2024 = vmatprep.subr.bf16.mxu0 0
        %2025 = vmatpush1.bf16.msra.mxu0 0
        %2026 = vmatprep.subr.bf16.mxu0 0
        %2027 = vmatpush1.bf16.msra.mxu0 0
        %2028 = vmatprep.subr.bf16.mxu0 0
        %2029 = vmatpush1.bf16.msra.mxu0 0
        %2030 = vmatprep.mubr.bf16.mxu0 0
        %2031 = vmatmul.mubr.bf16.gmra.mrb[0].mxu0 %v1996
        %v2032 = vpop.f32.mrb[0].mxu0
        %v2033 = vadd.f32 0.0, %v2032
        %v2034 = vpop.f32.mrb[0].mxu0
        %v2035 = vpop.f32.mrb[0].mxu0
        %v2036 = vpop.f32.mrb[0].mxu0
        %2037 = vdwg.mxu0
        %v2038 = vadd.f32 %v1982, %v2033
        %s2039 = scalar_lea.vmem [#allocation7], 32
        %v2040 = vld [vmem:[%s2039] sm:$0xf]
        %v2041 = vld [vmem:[%s2039 + $0x4] sm:$0xf]
        %v2042 = vrot.slane %v1576, 2
        %v2045 = vunpack.c.l.b16 %v2040
        %v2046 = vunpack.c.l.b16 %v2041
        %v2047 = vpack.c.b16 %v2046, %v2045
        %v2050 = vsel %vm534, %v2042, 0
        %2052 = vmatprep.subr.bf16.mxu0 0
        %2053 = vmatpush1.bf16.msra.mxu0 %v2047
        %2054 = vmatprep.subr.bf16.mxu0 0
        %2055 = vmatpush1.bf16.msra.mxu0 0
        %2056 = vmatprep.subr.bf16.mxu0 0
        %2057 = vmatpush1.bf16.msra.mxu0 0
        %2058 = vmatprep.subr.bf16.mxu0 0
        %2059 = vmatpush1.bf16.msra.mxu0 0
        %2060 = vmatprep.subr.bf16.mxu0 0
        %2061 = vmatpush1.bf16.msra.mxu0 0
        %2062 = vmatprep.subr.bf16.mxu0 0
        %2063 = vmatpush1.bf16.msra.mxu0 0
        %2064 = vmatprep.subr.bf16.mxu0 0
        %2065 = vmatpush1.bf16.msra.mxu0 0
        %2066 = vmatprep.subr.bf16.mxu0 0
        %2067 = vmatpush1.bf16.msra.mxu0 0
        %2068 = vmatprep.subr.bf16.mxu0 0
        %2069 = vmatpush1.bf16.msra.mxu0 0
        %2070 = vmatprep.subr.bf16.mxu0 0
        %2071 = vmatpush1.bf16.msra.mxu0 0
        %2072 = vmatprep.subr.bf16.mxu0 0
        %2073 = vmatpush1.bf16.msra.mxu0 0
        %2074 = vmatprep.subr.bf16.mxu0 0
        %2075 = vmatpush1.bf16.msra.mxu0 0
        %2076 = vmatprep.subr.bf16.mxu0 0
        %2077 = vmatpush1.bf16.msra.mxu0 0
        %2078 = vmatprep.subr.bf16.mxu0 0
        %2079 = vmatpush1.bf16.msra.mxu0 0
        %2080 = vmatprep.subr.bf16.mxu0 0
        %2081 = vmatpush1.bf16.msra.mxu0 0
        %2082 = vmatprep.subr.bf16.mxu0 0
        %2083 = vmatpush1.bf16.msra.mxu0 0
        %2084 = vmatprep.mubr.bf16.mxu0 0
        %2085 = vmatmul.mubr.bf16.gmra.mrb[0].mxu0 %v2050
        %v2086 = vpop.f32.mrb[0].mxu0
        %v2087 = vadd.f32 0.0, %v2086
        %v2088 = vpop.f32.mrb[0].mxu0
        %v2089 = vpop.f32.mrb[0].mxu0
        %v2090 = vpop.f32.mrb[0].mxu0
        %2091 = vdwg.mxu0
        %v2092 = vadd.f32 %v2038, %v2087
        %s2093 = scalar_lea.vmem [#allocation7], 88
        %v2094 = vld [vmem:[%s2093] sm:$0xf]
        %v2095 = vld [vmem:[%s2093 + $0x4] sm:$0xf]
        %v2096 = vrot.slane %v1595, 2
        %v2099 = vunpack.c.l.b16 %v2094
        %v2100 = vunpack.c.l.b16 %v2095
        %v2101 = vpack.c.b16 %v2100, %v2099
        %v2104 = vsel %vm534, %v2096, 0
        %2106 = vmatprep.subr.bf16.mxu0 0
        %2107 = vmatpush1.bf16.msra.mxu0 %v2101
        %2108 = vmatprep.subr.bf16.mxu0 0
        %2109 = vmatpush1.bf16.msra.mxu0 0
        %2110 = vmatprep.subr.bf16.mxu0 0
        %2111 = vmatpush1.bf16.msra.mxu0 0
        %2112 = vmatprep.subr.bf16.mxu0 0
        %2113 = vmatpush1.bf16.msra.mxu0 0
        %2114 = vmatprep.subr.bf16.mxu0 0
        %2115 = vmatpush1.bf16.msra.mxu0 0
        %2116 = vmatprep.subr.bf16.mxu0 0
        %2117 = vmatpush1.bf16.msra.mxu0 0
        %2118 = vmatprep.subr.bf16.mxu0 0
        %2119 = vmatpush1.bf16.msra.mxu0 0
        %2120 = vmatprep.subr.bf16.mxu0 0
        %2121 = vmatpush1.bf16.msra.mxu0 0
        %2122 = vmatprep.subr.bf16.mxu0 0
        %2123 = vmatpush1.bf16.msra.mxu0 0
        %2124 = vmatprep.subr.bf16.mxu0 0
        %2125 = vmatpush1.bf16.msra.mxu0 0
        %2126 = vmatprep.subr.bf16.mxu0 0
        %2127 = vmatpush1.bf16.msra.mxu0 0
        %2128 = vmatprep.subr.bf16.mxu0 0
        %2129 = vmatpush1.bf16.msra.mxu0 0
        %2130 = vmatprep.subr.bf16.mxu0 0
        %2131 = vmatpush1.bf16.msra.mxu0 0
        %2132 = vmatprep.subr.bf16.mxu0 0
        %2133 = vmatpush1.bf16.msra.mxu0 0
        %2134 = vmatprep.subr.bf16.mxu0 0
        %2135 = vmatpush1.bf16.msra.mxu0 0
        %2136 = vmatprep.subr.bf16.mxu0 0
        %2137 = vmatpush1.bf16.msra.mxu0 0
        %2138 = vmatprep.mubr.bf16.mxu0 0
        %2139 = vmatmul.mubr.bf16.gmra.mrb[0].mxu0 %v2104
        %v2140 = vpop.f32.mrb[0].mxu0
        %v2141 = vadd.f32 0.0, %v2140
        %v2142 = vpop.f32.mrb[0].mxu0
        %v2143 = vpop.f32.mrb[0].mxu0
        %v2144 = vpop.f32.mrb[0].mxu0
        %2145 = vdwg.mxu0
        %v2146 = vadd.f32 %v2092, %v2141
        %s2147 = scalar_lea.vmem [#allocation7], 40
        %v2148 = vld [vmem:[%s2147] sm:$0xf]
        %v2149 = vld [vmem:[%s2147 + $0x4] sm:$0xf]
        %v2150 = vrot.slane %v1702, 2
        %v2151 = vrot.slane %v1704, 3
        %v2152 = vor.u32 %v2150, %v2151
        %v2155 = vunpack.c.l.b16 %v2148
        %v2156 = vunpack.c.l.b16 %v2149
        %v2157 = vpack.c.b16 %v2156, %v2155
        %v2160 = vsel %vm534, %v2152, 0
        %2162 = vmatprep.subr.bf16.mxu0 0
        %2163 = vmatpush1.bf16.msra.mxu0 %v2157
        %2164 = vmatprep.subr.bf16.mxu0 0
        %2165 = vmatpush1.bf16.msra.mxu0 0
        %2166 = vmatprep.subr.bf16.mxu0 0
        %2167 = vmatpush1.bf16.msra.mxu0 0
        %2168 = vmatprep.subr.bf16.mxu0 0
        %2169 = vmatpush1.bf16.msra.mxu0 0
        %2170 = vmatprep.subr.bf16.mxu0 0
        %2171 = vmatpush1.bf16.msra.mxu0 0
        %2172 = vmatprep.subr.bf16.mxu0 0
        %2173 = vmatpush1.bf16.msra.mxu0 0
        %2174 = vmatprep.subr.bf16.mxu0 0
        %2175 = vmatpush1.bf16.msra.mxu0 0
        %2176 = vmatprep.subr.bf16.mxu0 0
        %2177 = vmatpush1.bf16.msra.mxu0 0
        %2178 = vmatprep.subr.bf16.mxu0 0
        %2179 = vmatpush1.bf16.msra.mxu0 0
        %2180 = vmatprep.subr.bf16.mxu0 0
        %2181 = vmatpush1.bf16.msra.mxu0 0
        %2182 = vmatprep.subr.bf16.mxu0 0
        %2183 = vmatpush1.bf16.msra.mxu0 0
        %2184 = vmatprep.subr.bf16.mxu0 0
        %2185 = vmatpush1.bf16.msra.mxu0 0
        %2186 = vmatprep.subr.bf16.mxu0 0
        %2187 = vmatpush1.bf16.msra.mxu0 0
        %2188 = vmatprep.subr.bf16.mxu0 0
        %2189 = vmatpush1.bf16.msra.mxu0 0
        %2190 = vmatprep.subr.bf16.mxu0 0
        %2191 = vmatpush1.bf16.msra.mxu0 0
        %2192 = vmatprep.subr.bf16.mxu0 0
        %2193 = vmatpush1.bf16.msra.mxu0 0
        %2194 = vmatprep.mubr.bf16.mxu0 0
        %2195 = vmatmul.mubr.bf16.gmra.mrb[0].mxu0 %v2160
        %v2196 = vpop.f32.mrb[0].mxu0
        %v2197 = vadd.f32 0.0, %v2196
        %v2198 = vpop.f32.mrb[0].mxu0
        %v2199 = vpop.f32.mrb[0].mxu0
        %v2200 = vpop.f32.mrb[0].mxu0
        %2201 = vdwg.mxu0
        %v2202 = vadd.f32 %v2146, %v2197
        %s2203 = scalar_lea.vmem [#allocation7], 96
        %v2204 = vld [vmem:[%s2203] sm:$0xf]
        %v2205 = vld [vmem:[%s2203 + $0x4] sm:$0xf]
        %v2206 = vrot.slane %v1761, 2
        %v2207 = vrot.slane %v1763, 3
        %v2208 = vor.u32 %v2206, %v2207
        %v2211 = vunpack.c.l.b16 %v2204
        %v2212 = vunpack.c.l.b16 %v2205
        %v2213 = vpack.c.b16 %v2212, %v2211
        %v2216 = vsel %vm534, %v2208, 0
        %2218 = vmatprep.subr.bf16.mxu0 0
        %2219 = vmatpush1.bf16.msra.mxu0 %v2213
        %2220 = vmatprep.subr.bf16.mxu0 0
        %2221 = vmatpush1.bf16.msra.mxu0 0
        %2222 = vmatprep.subr.bf16.mxu0 0
        %2223 = vmatpush1.bf16.msra.mxu0 0
        %2224 = vmatprep.subr.bf16.mxu0 0
        %2225 = vmatpush1.bf16.msra.mxu0 0
        %2226 = vmatprep.subr.bf16.mxu0 0
        %2227 = vmatpush1.bf16.msra.mxu0 0
        %2228 = vmatprep.subr.bf16.mxu0 0
        %2229 = vmatpush1.bf16.msra.mxu0 0
        %2230 = vmatprep.subr.bf16.mxu0 0
        %2231 = vmatpush1.bf16.msra.mxu0 0
        %2232 = vmatprep.subr.bf16.mxu0 0
        %2233 = vmatpush1.bf16.msra.mxu0 0
        %2234 = vmatprep.subr.bf16.mxu0 0
        %2235 = vmatpush1.bf16.msra.mxu0 0
        %2236 = vmatprep.subr.bf16.mxu0 0
        %2237 = vmatpush1.bf16.msra.mxu0 0
        %2238 = vmatprep.subr.bf16.mxu0 0
        %2239 = vmatpush1.bf16.msra.mxu0 0
        %2240 = vmatprep.subr.bf16.mxu0 0
        %2241 = vmatpush1.bf16.msra.mxu0 0
        %2242 = vmatprep.subr.bf16.mxu0 0
        %2243 = vmatpush1.bf16.msra.mxu0 0
        %2244 = vmatprep.subr.bf16.mxu0 0
        %2245 = vmatpush1.bf16.msra.mxu0 0
        %2246 = vmatprep.subr.bf16.mxu0 0
        %2247 = vmatpush1.bf16.msra.mxu0 0
        %2248 = vmatprep.subr.bf16.mxu0 0
        %2249 = vmatpush1.bf16.msra.mxu0 0
        %2250 = vmatprep.mubr.bf16.mxu0 0
        %2251 = vmatmul.mubr.bf16.gmra.mrb[0].mxu0 %v2216
        %v2252 = vpop.f32.mrb[0].mxu0
        %v2253 = vadd.f32 0.0, %v2252
        %v2254 = vpop.f32.mrb[0].mxu0
        %v2255 = vpop.f32.mrb[0].mxu0
        %v2256 = vpop.f32.mrb[0].mxu0
        %2257 = vdwg.mxu0
        %v2258 = vadd.f32 %v2202, %v2253
        %s2259 = scalar_lea.vmem [#allocation7], 48
        %v2260 = vld [vmem:[%s2259] sm:$0xf]
        %v2261 = vld [vmem:[%s2259 + $0x4] sm:$0xf]
        %v2262 = vrot.slane %v1576, 3
        %v2265 = vunpack.c.l.b16 %v2260
        %v2266 = vunpack.c.l.b16 %v2261
        %v2267 = vpack.c.b16 %v2266, %v2265
        %v2270 = vsel %vm534, %v2262, 0
        %2272 = vmatprep.subr.bf16.mxu0 0
        %2273 = vmatpush1.bf16.msra.mxu0 %v2267
        %2274 = vmatprep.subr.bf16.mxu0 0
        %2275 = vmatpush1.bf16.msra.mxu0 0
        %2276 = vmatprep.subr.bf16.mxu0 0
        %2277 = vmatpush1.bf16.msra.mxu0 0
        %2278 = vmatprep.subr.bf16.mxu0 0
        %2279 = vmatpush1.bf16.msra.mxu0 0
        %2280 = vmatprep.subr.bf16.mxu0 0
        %2281 = vmatpush1.bf16.msra.mxu0 0
        %2282 = vmatprep.subr.bf16.mxu0 0
        %2283 = vmatpush1.bf16.msra.mxu0 0
        %2284 = vmatprep.subr.bf16.mxu0 0
        %2285 = vmatpush1.bf16.msra.mxu0 0
        %2286 = vmatprep.subr.bf16.mxu0 0
        %2287 = vmatpush1.bf16.msra.mxu0 0
        %2288 = vmatprep.subr.bf16.mxu0 0
        %2289 = vmatpush1.bf16.msra.mxu0 0
        %2290 = vmatprep.subr.bf16.mxu0 0
        %2291 = vmatpush1.bf16.msra.mxu0 0
        %2292 = vmatprep.subr.bf16.mxu0 0
        %2293 = vmatpush1.bf16.msra.mxu0 0
        %2294 = vmatprep.subr.bf16.mxu0 0
        %2295 = vmatpush1.bf16.msra.mxu0 0
        %2296 = vmatprep.subr.bf16.mxu0 0
        %2297 = vmatpush1.bf16.msra.mxu0 0
        %2298 = vmatprep.subr.bf16.mxu0 0
        %2299 = vmatpush1.bf16.msra.mxu0 0
        %2300 = vmatprep.subr.bf16.mxu0 0
        %2301 = vmatpush1.bf16.msra.mxu0 0
        %2302 = vmatprep.subr.bf16.mxu0 0
        %2303 = vmatpush1.bf16.msra.mxu0 0
        %2304 = vmatprep.mubr.bf16.mxu0 0
        %2305 = vmatmul.mubr.bf16.gmra.mrb[0].mxu0 %v2270
        %v2306 = vpop.f32.mrb[0].mxu0
        %v2307 = vadd.f32 0.0, %v2306
        %v2308 = vpop.f32.mrb[0].mxu0
        %v2309 = vpop.f32.mrb[0].mxu0
        %v2310 = vpop.f32.mrb[0].mxu0
        %2311 = vdwg.mxu0
        %v2312 = vadd.f32 %v2258, %v2307
        %s2313 = scalar_lea.vmem [#allocation7], 104
        %v2314 = vld [vmem:[%s2313] sm:$0xf]
        %v2315 = vld [vmem:[%s2313 + $0x4] sm:$0xf]
        %v2316 = vrot.slane %v1595, 3
        %v2319 = vunpack.c.l.b16 %v2314
        %v2320 = vunpack.c.l.b16 %v2315
        %v2321 = vpack.c.b16 %v2320, %v2319
        %v2324 = vsel %vm534, %v2316, 0
        %2326 = vmatprep.subr.bf16.mxu0 0
        %2327 = vmatpush1.bf16.msra.mxu0 %v2321
        %2328 = vmatprep.subr.bf16.mxu0 0
        %2329 = vmatpush1.bf16.msra.mxu0 0
        %2330 = vmatprep.subr.bf16.mxu0 0
        %2331 = vmatpush1.bf16.msra.mxu0 0
        %2332 = vmatprep.subr.bf16.mxu0 0
        %2333 = vmatpush1.bf16.msra.mxu0 0
        %2334 = vmatprep.subr.bf16.mxu0 0
        %2335 = vmatpush1.bf16.msra.mxu0 0
        %2336 = vmatprep.subr.bf16.mxu0 0
        %2337 = vmatpush1.bf16.msra.mxu0 0
        %2338 = vmatprep.subr.bf16.mxu0 0
        %2339 = vmatpush1.bf16.msra.mxu0 0
        %2340 = vmatprep.subr.bf16.mxu0 0
        %2341 = vmatpush1.bf16.msra.mxu0 0
        %2342 = vmatprep.subr.bf16.mxu0 0
        %2343 = vmatpush1.bf16.msra.mxu0 0
        %2344 = vmatprep.subr.bf16.mxu0 0
        %2345 = vmatpush1.bf16.msra.mxu0 0
        %2346 = vmatprep.subr.bf16.mxu0 0
        %2347 = vmatpush1.bf16.msra.mxu0 0
        %2348 = vmatprep.subr.bf16.mxu0 0
        %2349 = vmatpush1.bf16.msra.mxu0 0
        %2350 = vmatprep.subr.bf16.mxu0 0
        %2351 = vmatpush1.bf16.msra.mxu0 0
        %2352 = vmatprep.subr.bf16.mxu0 0
        %2353 = vmatpush1.bf16.msra.mxu0 0
        %2354 = vmatprep.subr.bf16.mxu0 0
        %2355 = vmatpush1.bf16.msra.mxu0 0
        %2356 = vmatprep.subr.bf16.mxu0 0
        %2357 = vmatpush1.bf16.msra.mxu0 0
        %2358 = vmatprep.mubr.bf16.mxu0 0
        %2359 = vmatmul.mubr.bf16.gmra.mrb[0].mxu0 %v2324
        %v2360 = vpop.f32.mrb[0].mxu0
        %v2361 = vadd.f32 0.0, %v2360
        %v2362 = vpop.f32.mrb[0].mxu0
        %v2363 = vpop.f32.mrb[0].mxu0
        %v2364 = vpop.f32.mrb[0].mxu0
        %2365 = vdwg.mxu0
        %v2366 = vadd.f32 %v2312, %v2361
        %v2367 = vstv %s1551
        %v2368 = vadd.f32 %v2366, %v2367
        %v2369 = vxor.u32 %v2368, 2147483648
        %v2370 = vmul.f32 %v2369, 1.442695
        %v2371 = vpow.pop %v2370
        %v2372 = vadd.f32 %v2371, 1.0
        %v2373 = vrcp.pop %v2372
        %v2374 = vmul.f32 1.0, %v2373
        %v2375 = vmul.f32 %v2374, 0.33333334
        %v2376 = vmul.f32 %v630, 0.0625
        %v2377 = vmul.f32 %v632, 0.0625
        %v2378 = vmul.f32 %v634, 0.0625
        %v2379 = vmul.f32 %v636, 0.0625
        %v2380 = vmul.f32 %v638, 0.0625
        %v2381 = vmul.f32 %v640, 0.0625
        %v2382 = vmul.f32 %v642, 0.0625
        %v2383 = vmul.f32 %v644, 0.0625
        %s2384 = sld [smem:[#allocation2 + $0x2]]
        %v2385 = vpack.c.bf16 %v616, %v614
        %v2386 = vpack.c.bf16 %v620, %v618
        %v2387 = vpack.c.bf16 %v624, %v622
        %v2388 = vpack.c.bf16 %v628, %v626
        %v2393 = vunpack.c.l.b16 %v2385
        %v2394 = vunpack.c.h.b16 %v2385
        %v2395 = vunpack.c.l.b16 %v2386
        %v2396 = vunpack.c.h.b16 %v2386
        %v2397 = vunpack.c.l.b16 %v2387
        %v2398 = vunpack.c.h.b16 %v2387
        %v2399 = vunpack.c.l.b16 %v2388
        %v2400 = vunpack.c.h.b16 %v2388
        %v2401 = vlaneseq
        %v2402 = vand.u32 %v2401, 127
        %v2403 = vlaneseq
        %v2404 = vshrl.u32 %v2403, 7
        %v2405 = vsub.s32 %v2402, %v2404
        %v2406 = vrot.slane %v2393, %v2405
        %v2407 = vadd.s32 %v2402, 4294967288
        %v2408 = vlaneseq
        %v2409 = vshrl.u32 %v2408, 7
        %v2410 = vsub.s32 %v2407, %v2409
        %v2411 = vrot.slane %v2394, %v2410
        %vm2412 = vcmask 130112
        %v2413 = vsel %vm2412, %v2411, %v2406
        %v2414 = vlaneseq
        %v2415 = vshrl.u32 %v2414, 7
        %v2416 = vsub.s32 %v2402, %v2415
        %v2417 = vrot.slane %v2395, %v2416
        %v2418 = vlaneseq
        %v2419 = vshrl.u32 %v2418, 7
        %v2420 = vsub.s32 %v2407, %v2419
        %v2421 = vrot.slane %v2396, %v2420
        %v2422 = vsel %vm2412, %v2421, %v2417
        %v2423 = vlaneseq
        %v2424 = vshrl.u32 %v2423, 7
        %v2425 = vsub.s32 %v2402, %v2424
        %v2426 = vrot.slane %v2397, %v2425
        %v2427 = vlaneseq
        %v2428 = vshrl.u32 %v2427, 7
        %v2429 = vsub.s32 %v2407, %v2428
        %v2430 = vrot.slane %v2398, %v2429
        %v2431 = vsel %vm2412, %v2430, %v2426
        %v2432 = vlaneseq
        %v2433 = vshrl.u32 %v2432, 7
        %v2434 = vsub.s32 %v2402, %v2433
        %v2435 = vrot.slane %v2399, %v2434
        %v2436 = vlaneseq
        %v2437 = vshrl.u32 %v2436, 7
        %v2438 = vsub.s32 %v2407, %v2437
        %v2439 = vrot.slane %v2400, %v2438
        %v2440 = vsel %vm2412, %v2439, %v2435
        %v2441 = vsel %vm1564, %v2422, %v2413
        %v2442 = vsel %vm1566, %v2431, %v2441
        %v2443 = vsel %vm1568, %v2440, %v2442
        %v2444 = vpack.c.b16 %v2443, %v2443
        %v2446 = vsel %vm668, 0, %v2444
        %v2447 = vsel %vm1575, %v2446, 0
        %v2448 = vpack.c.bf16 %v2377, %v2376
        %v2449 = vpack.c.bf16 %v2379, %v2378
        %v2450 = vpack.c.bf16 %v2381, %v2380
        %v2451 = vpack.c.bf16 %v2383, %v2382
        %v2456 = vunpack.c.l.b16 %v2448
        %v2457 = vunpack.c.h.b16 %v2448
        %v2458 = vunpack.c.l.b16 %v2449
        %v2459 = vunpack.c.h.b16 %v2449
        %v2460 = vunpack.c.l.b16 %v2450
        %v2461 = vunpack.c.h.b16 %v2450
        %v2462 = vunpack.c.l.b16 %v2451
        %v2463 = vunpack.c.h.b16 %v2451
        %v2464 = vlaneseq
        %v2465 = vshrl.u32 %v2464, 7
        %v2466 = vsub.s32 %v2402, %v2465
        %v2467 = vrot.slane %v2456, %v2466
        %v2468 = vlaneseq
        %v2469 = vshrl.u32 %v2468, 7
        %v2470 = vsub.s32 %v2407, %v2469
        %v2471 = vrot.slane %v2457, %v2470
        %v2472 = vsel %vm2412, %v2471, %v2467
        %v2473 = vlaneseq
        %v2474 = vshrl.u32 %v2473, 7
        %v2475 = vsub.s32 %v2402, %v2474
        %v2476 = vrot.slane %v2458, %v2475
        %v2477 = vlaneseq
        %v2478 = vshrl.u32 %v2477, 7
        %v2479 = vsub.s32 %v2407, %v2478
        %v2480 = vrot.slane %v2459, %v2479
        %v2481 = vsel %vm2412, %v2480, %v2476
        %v2482 = vlaneseq
        %v2483 = vshrl.u32 %v2482, 7
        %v2484 = vsub.s32 %v2402, %v2483
        %v2485 = vrot.slane %v2460, %v2484
        %v2486 = vlaneseq
        %v2487 = vshrl.u32 %v2486, 7
        %v2488 = vsub.s32 %v2407, %v2487
        %v2489 = vrot.slane %v2461, %v2488
        %v2490 = vsel %vm2412, %v2489, %v2485
        %v2491 = vlaneseq
        %v2492 = vshrl.u32 %v2491, 7
        %v2493 = vsub.s32 %v2402, %v2492
        %v2494 = vrot.slane %v2462, %v2493
        %v2495 = vlaneseq
        %v2496 = vshrl.u32 %v2495, 7
        %v2497 = vsub.s32 %v2407, %v2496
        %v2498 = vrot.slane %v2463, %v2497
        %v2499 = vsel %vm2412, %v2498, %v2494
        %v2500 = vsel %vm1564, %v2481, %v2472
        %v2501 = vsel %vm1566, %v2490, %v2500
        %v2502 = vsel %vm1568, %v2499, %v2501
        %v2503 = vpack.c.b16 %v2502, %v2502
        %v2505 = vsel %vm668, 0, %v2503
        %v2506 = vsel %vm1575, %v2505, 0
        %v2507 = vld [vmem:[#allocation9] sm:$0xf]
        %v2508 = vld [vmem:[#allocation9 + $0x4] sm:$0xf]
        %s2509 = scalar_lea.vmem [#allocation9], 56
        %v2510 = vld [vmem:[%s2509] sm:$0xf]
        %v2511 = vld [vmem:[%s2509 + $0x4] sm:$0xf]
        %v2514 = vunpack.c.l.b16 %v2510
        %v2515 = vunpack.c.l.b16 %v2511
        %v2516 = vpack.c.b16 %v2515, %v2514
        %v2519 = vsel %vm534, %v2506, 0
        %2521 = vmatprep.subr.bf16.mxu0 0
        %2522 = vmatpush1.bf16.msra.mxu0 %v2516
        %2523 = vmatprep.subr.bf16.mxu0 0
        %2524 = vmatpush1.bf16.msra.mxu0 0
        %2525 = vmatprep.subr.bf16.mxu0 0
        %2526 = vmatpush1.bf16.msra.mxu0 0
        %2527 = vmatprep.subr.bf16.mxu0 0
        %2528 = vmatpush1.bf16.msra.mxu0 0
        %2529 = vmatprep.subr.bf16.mxu0 0
        %2530 = vmatpush1.bf16.msra.mxu0 0
        %2531 = vmatprep.subr.bf16.mxu0 0
        %2532 = vmatpush1.bf16.msra.mxu0 0
        %2533 = vmatprep.subr.bf16.mxu0 0
        %2534 = vmatpush1.bf16.msra.mxu0 0
        %2535 = vmatprep.subr.bf16.mxu0 0
        %2536 = vmatpush1.bf16.msra.mxu0 0
        %2537 = vmatprep.subr.bf16.mxu0 0
        %2538 = vmatpush1.bf16.msra.mxu0 0
        %2539 = vmatprep.subr.bf16.mxu0 0
        %2540 = vmatpush1.bf16.msra.mxu0 0
        %2541 = vmatprep.subr.bf16.mxu0 0
        %2542 = vmatpush1.bf16.msra.mxu0 0
        %2543 = vmatprep.subr.bf16.mxu0 0
        %2544 = vmatpush1.bf16.msra.mxu0 0
        %2545 = vmatprep.subr.bf16.mxu0 0
        %2546 = vmatpush1.bf16.msra.mxu0 0
        %2547 = vmatprep.subr.bf16.mxu0 0
        %2548 = vmatpush1.bf16.msra.mxu0 0
        %2549 = vmatprep.subr.bf16.mxu0 0
        %2550 = vmatpush1.bf16.msra.mxu0 0
        %2551 = vmatprep.subr.bf16.mxu0 0
        %2552 = vmatpush1.bf16.msra.mxu0 0
        %2553 = vmatprep.mubr.bf16.mxu0 0
        %2554 = vmatmul.mubr.bf16.gmra.mrb[0].mxu0 %v2519
        %v2555 = vpop.f32.mrb[0].mxu0
        %v2556 = vadd.f32 0.0, %v2555
        %v2557 = vpop.f32.mrb[0].mxu0
        %v2558 = vpop.f32.mrb[0].mxu0
        %v2559 = vpop.f32.mrb[0].mxu0
        %2560 = vdwg.mxu0
        %v2563 = vunpack.c.l.b16 %v2507
        %v2564 = vunpack.c.l.b16 %v2508
        %v2565 = vpack.c.b16 %v2564, %v2563
        %v2568 = vsel %vm534, %v2447, 0
        %2570 = vmatprep.subr.bf16.mxu0 0
        %2571 = vmatpush1.bf16.msra.mxu0 %v2565
        %2572 = vmatprep.subr.bf16.mxu0 0
        %2573 = vmatpush1.bf16.msra.mxu0 0
        %2574 = vmatprep.subr.bf16.mxu0 0
        %2575 = vmatpush1.bf16.msra.mxu0 0
        %2576 = vmatprep.subr.bf16.mxu0 0
        %2577 = vmatpush1.bf16.msra.mxu0 0
        %2578 = vmatprep.subr.bf16.mxu0 0
        %2579 = vmatpush1.bf16.msra.mxu0 0
        %2580 = vmatprep.subr.bf16.mxu0 0
        %2581 = vmatpush1.bf16.msra.mxu0 0
        %2582 = vmatprep.subr.bf16.mxu0 0
        %2583 = vmatpush1.bf16.msra.mxu0 0
        %2584 = vmatprep.subr.bf16.mxu0 0
        %2585 = vmatpush1.bf16.msra.mxu0 0
        %2586 = vmatprep.subr.bf16.mxu0 0
        %2587 = vmatpush1.bf16.msra.mxu0 0
        %2588 = vmatprep.subr.bf16.mxu0 0
        %2589 = vmatpush1.bf16.msra.mxu0 0
        %2590 = vmatprep.subr.bf16.mxu0 0
        %2591 = vmatpush1.bf16.msra.mxu0 0
        %2592 = vmatprep.subr.bf16.mxu0 0
        %2593 = vmatpush1.bf16.msra.mxu0 0
        %2594 = vmatprep.subr.bf16.mxu0 0
        %2595 = vmatpush1.bf16.msra.mxu0 0
        %2596 = vmatprep.subr.bf16.mxu0 0
        %2597 = vmatpush1.bf16.msra.mxu0 0
        %2598 = vmatprep.subr.bf16.mxu0 0
        %2599 = vmatpush1.bf16.msra.mxu0 0
        %2600 = vmatprep.subr.bf16.mxu0 0
        %2601 = vmatpush1.bf16.msra.mxu0 0
        %2602 = vmatprep.mubr.bf16.mxu0 0
        %2603 = vmatmul.mubr.bf16.gmra.mrb[0].mxu0 %v2568
        %v2604 = vpop.f32.mrb[0].mxu0
        %v2605 = vadd.f32 %v2556, %v2604
        %v2606 = vpop.f32.mrb[0].mxu0
        %v2607 = vpop.f32.mrb[0].mxu0
        %v2608 = vpop.f32.mrb[0].mxu0
        %2609 = vdwg.mxu0
        %s2610 = scalar_lea.vmem [#allocation9], 8
        %v2611 = vld [vmem:[%s2610] sm:$0xf]
        %v2612 = vld [vmem:[%s2610 + $0x4] sm:$0xf]
        %v2613 = vshrl.u32 %v2447, 16
        %v2615 = vshll.u32 %v2447, 16
        %v2617 = vrot.slane %v2615, 1
        %v2618 = vor.u32 %v2613, %v2617
        %v2621 = vunpack.c.l.b16 %v2611
        %v2622 = vunpack.c.l.b16 %v2612
        %v2623 = vpack.c.b16 %v2622, %v2621
        %v2626 = vsel %vm534, %v2618, 0
        %2628 = vmatprep.subr.bf16.mxu0 0
        %2629 = vmatpush1.bf16.msra.mxu0 %v2623
        %2630 = vmatprep.subr.bf16.mxu0 0
        %2631 = vmatpush1.bf16.msra.mxu0 0
        %2632 = vmatprep.subr.bf16.mxu0 0
        %2633 = vmatpush1.bf16.msra.mxu0 0
        %2634 = vmatprep.subr.bf16.mxu0 0
        %2635 = vmatpush1.bf16.msra.mxu0 0
        %2636 = vmatprep.subr.bf16.mxu0 0
        %2637 = vmatpush1.bf16.msra.mxu0 0
        %2638 = vmatprep.subr.bf16.mxu0 0
        %2639 = vmatpush1.bf16.msra.mxu0 0
        %2640 = vmatprep.subr.bf16.mxu0 0
        %2641 = vmatpush1.bf16.msra.mxu0 0
        %2642 = vmatprep.subr.bf16.mxu0 0
        %2643 = vmatpush1.bf16.msra.mxu0 0
        %2644 = vmatprep.subr.bf16.mxu0 0
        %2645 = vmatpush1.bf16.msra.mxu0 0
        %2646 = vmatprep.subr.bf16.mxu0 0
        %2647 = vmatpush1.bf16.msra.mxu0 0
        %2648 = vmatprep.subr.bf16.mxu0 0
        %2649 = vmatpush1.bf16.msra.mxu0 0
        %2650 = vmatprep.subr.bf16.mxu0 0
        %2651 = vmatpush1.bf16.msra.mxu0 0
        %2652 = vmatprep.subr.bf16.mxu0 0
        %2653 = vmatpush1.bf16.msra.mxu0 0
        %2654 = vmatprep.subr.bf16.mxu0 0
        %2655 = vmatpush1.bf16.msra.mxu0 0
        %2656 = vmatprep.subr.bf16.mxu0 0
        %2657 = vmatpush1.bf16.msra.mxu0 0
        %2658 = vmatprep.subr.bf16.mxu0 0
        %2659 = vmatpush1.bf16.msra.mxu0 0
        %2660 = vmatprep.mubr.bf16.mxu0 0
        %2661 = vmatmul.mubr.bf16.gmra.mrb[0].mxu0 %v2626
        %v2662 = vpop.f32.mrb[0].mxu0
        %v2663 = vadd.f32 0.0, %v2662
        %v2664 = vpop.f32.mrb[0].mxu0
        %v2665 = vpop.f32.mrb[0].mxu0
        %v2666 = vpop.f32.mrb[0].mxu0
        %2667 = vdwg.mxu0
        %v2668 = vadd.f32 %v2605, %v2663
        %s2669 = scalar_lea.vmem [#allocation9], 64
        %v2670 = vld [vmem:[%s2669] sm:$0xf]
        %v2671 = vld [vmem:[%s2669 + $0x4] sm:$0xf]
        %v2672 = vshrl.u32 %v2506, 16
        %v2674 = vshll.u32 %v2506, 16
        %v2676 = vrot.slane %v2674, 1
        %v2677 = vor.u32 %v2672, %v2676
        %v2680 = vunpack.c.l.b16 %v2670
        %v2681 = vunpack.c.l.b16 %v2671
        %v2682 = vpack.c.b16 %v2681, %v2680
        %v2685 = vsel %vm534, %v2677, 0
        %2687 = vmatprep.subr.bf16.mxu0 0
        %2688 = vmatpush1.bf16.msra.mxu0 %v2682
        %2689 = vmatprep.subr.bf16.mxu0 0
        %2690 = vmatpush1.bf16.msra.mxu0 0
        %2691 = vmatprep.subr.bf16.mxu0 0
        %2692 = vmatpush1.bf16.msra.mxu0 0
        %2693 = vmatprep.subr.bf16.mxu0 0
        %2694 = vmatpush1.bf16.msra.mxu0 0
        %2695 = vmatprep.subr.bf16.mxu0 0
        %2696 = vmatpush1.bf16.msra.mxu0 0
        %2697 = vmatprep.subr.bf16.mxu0 0
        %2698 = vmatpush1.bf16.msra.mxu0 0
        %2699 = vmatprep.subr.bf16.mxu0 0
        %2700 = vmatpush1.bf16.msra.mxu0 0
        %2701 = vmatprep.subr.bf16.mxu0 0
        %2702 = vmatpush1.bf16.msra.mxu0 0
        %2703 = vmatprep.subr.bf16.mxu0 0
        %2704 = vmatpush1.bf16.msra.mxu0 0
        %2705 = vmatprep.subr.bf16.mxu0 0
        %2706 = vmatpush1.bf16.msra.mxu0 0
        %2707 = vmatprep.subr.bf16.mxu0 0
        %2708 = vmatpush1.bf16.msra.mxu0 0
        %2709 = vmatprep.subr.bf16.mxu0 0
        %2710 = vmatpush1.bf16.msra.mxu0 0
        %2711 = vmatprep.subr.bf16.mxu0 0
        %2712 = vmatpush1.bf16.msra.mxu0 0
        %2713 = vmatprep.subr.bf16.mxu0 0
        %2714 = vmatpush1.bf16.msra.mxu0 0
        %2715 = vmatprep.subr.bf16.mxu0 0
        %2716 = vmatpush1.bf16.msra.mxu0 0
        %2717 = vmatprep.subr.bf16.mxu0 0
        %2718 = vmatpush1.bf16.msra.mxu0 0
        %2719 = vmatprep.mubr.bf16.mxu0 0
        %2720 = vmatmul.mubr.bf16.gmra.mrb[0].mxu0 %v2685
        %v2721 = vpop.f32.mrb[0].mxu0
        %v2722 = vadd.f32 0.0, %v2721
        %v2723 = vpop.f32.mrb[0].mxu0
        %v2724 = vpop.f32.mrb[0].mxu0
        %v2725 = vpop.f32.mrb[0].mxu0
        %2726 = vdwg.mxu0
        %v2727 = vadd.f32 %v2668, %v2722
        %s2728 = scalar_lea.vmem [#allocation9], 16
        %v2729 = vld [vmem:[%s2728] sm:$0xf]
        %v2730 = vld [vmem:[%s2728 + $0x4] sm:$0xf]
        %v2732 = vrot.slane %v2447, 1
        %v2735 = vunpack.c.l.b16 %v2729
        %v2736 = vunpack.c.l.b16 %v2730
        %v2737 = vpack.c.b16 %v2736, %v2735
        %v2740 = vsel %vm534, %v2732, 0
        %2742 = vmatprep.subr.bf16.mxu0 0
        %2743 = vmatpush1.bf16.msra.mxu0 %v2737
        %2744 = vmatprep.subr.bf16.mxu0 0
        %2745 = vmatpush1.bf16.msra.mxu0 0
        %2746 = vmatprep.subr.bf16.mxu0 0
        %2747 = vmatpush1.bf16.msra.mxu0 0
        %2748 = vmatprep.subr.bf16.mxu0 0
        %2749 = vmatpush1.bf16.msra.mxu0 0
        %2750 = vmatprep.subr.bf16.mxu0 0
        %2751 = vmatpush1.bf16.msra.mxu0 0
        %2752 = vmatprep.subr.bf16.mxu0 0
        %2753 = vmatpush1.bf16.msra.mxu0 0
        %2754 = vmatprep.subr.bf16.mxu0 0
        %2755 = vmatpush1.bf16.msra.mxu0 0
        %2756 = vmatprep.subr.bf16.mxu0 0
        %2757 = vmatpush1.bf16.msra.mxu0 0
        %2758 = vmatprep.subr.bf16.mxu0 0
        %2759 = vmatpush1.bf16.msra.mxu0 0
        %2760 = vmatprep.subr.bf16.mxu0 0
        %2761 = vmatpush1.bf16.msra.mxu0 0
        %2762 = vmatprep.subr.bf16.mxu0 0
        %2763 = vmatpush1.bf16.msra.mxu0 0
        %2764 = vmatprep.subr.bf16.mxu0 0
        %2765 = vmatpush1.bf16.msra.mxu0 0
        %2766 = vmatprep.subr.bf16.mxu0 0
        %2767 = vmatpush1.bf16.msra.mxu0 0
        %2768 = vmatprep.subr.bf16.mxu0 0
        %2769 = vmatpush1.bf16.msra.mxu0 0
        %2770 = vmatprep.subr.bf16.mxu0 0
        %2771 = vmatpush1.bf16.msra.mxu0 0
        %2772 = vmatprep.subr.bf16.mxu0 0
        %2773 = vmatpush1.bf16.msra.mxu0 0
        %2774 = vmatprep.mubr.bf16.mxu0 0
        %2775 = vmatmul.mubr.bf16.gmra.mrb[0].mxu0 %v2740
        %v2776 = vpop.f32.mrb[0].mxu0
        %v2777 = vadd.f32 0.0, %v2776
        %v2778 = vpop.f32.mrb[0].mxu0
        %v2779 = vpop.f32.mrb[0].mxu0
        %v2780 = vpop.f32.mrb[0].mxu0
        %2781 = vdwg.mxu0
        %v2782 = vadd.f32 %v2727, %v2777
        %s2783 = scalar_lea.vmem [#allocation9], 72
        %v2784 = vld [vmem:[%s2783] sm:$0xf]
        %v2785 = vld [vmem:[%s2783 + $0x4] sm:$0xf]
        %v2787 = vrot.slane %v2506, 1
        %v2790 = vunpack.c.l.b16 %v2784
        %v2791 = vunpack.c.l.b16 %v2785
        %v2792 = vpack.c.b16 %v2791, %v2790
        %v2795 = vsel %vm534, %v2787, 0
        %2797 = vmatprep.subr.bf16.mxu0 0
        %2798 = vmatpush1.bf16.msra.mxu0 %v2792
        %2799 = vmatprep.subr.bf16.mxu0 0
        %2800 = vmatpush1.bf16.msra.mxu0 0
        %2801 = vmatprep.subr.bf16.mxu0 0
        %2802 = vmatpush1.bf16.msra.mxu0 0
        %2803 = vmatprep.subr.bf16.mxu0 0
        %2804 = vmatpush1.bf16.msra.mxu0 0
        %2805 = vmatprep.subr.bf16.mxu0 0
        %2806 = vmatpush1.bf16.msra.mxu0 0
        %2807 = vmatprep.subr.bf16.mxu0 0
        %2808 = vmatpush1.bf16.msra.mxu0 0
        %2809 = vmatprep.subr.bf16.mxu0 0
        %2810 = vmatpush1.bf16.msra.mxu0 0
        %2811 = vmatprep.subr.bf16.mxu0 0
        %2812 = vmatpush1.bf16.msra.mxu0 0
        %2813 = vmatprep.subr.bf16.mxu0 0
        %2814 = vmatpush1.bf16.msra.mxu0 0
        %2815 = vmatprep.subr.bf16.mxu0 0
        %2816 = vmatpush1.bf16.msra.mxu0 0
        %2817 = vmatprep.subr.bf16.mxu0 0
        %2818 = vmatpush1.bf16.msra.mxu0 0
        %2819 = vmatprep.subr.bf16.mxu0 0
        %2820 = vmatpush1.bf16.msra.mxu0 0
        %2821 = vmatprep.subr.bf16.mxu0 0
        %2822 = vmatpush1.bf16.msra.mxu0 0
        %2823 = vmatprep.subr.bf16.mxu0 0
        %2824 = vmatpush1.bf16.msra.mxu0 0
        %2825 = vmatprep.subr.bf16.mxu0 0
        %2826 = vmatpush1.bf16.msra.mxu0 0
        %2827 = vmatprep.subr.bf16.mxu0 0
        %2828 = vmatpush1.bf16.msra.mxu0 0
        %2829 = vmatprep.mubr.bf16.mxu0 0
        %2830 = vmatmul.mubr.bf16.gmra.mrb[0].mxu0 %v2795
        %v2831 = vpop.f32.mrb[0].mxu0
        %v2832 = vadd.f32 0.0, %v2831
        %v2833 = vpop.f32.mrb[0].mxu0
        %v2834 = vpop.f32.mrb[0].mxu0
        %v2835 = vpop.f32.mrb[0].mxu0
        %2836 = vdwg.mxu0
        %v2837 = vadd.f32 %v2782, %v2832
        %s2838 = scalar_lea.vmem [#allocation9], 24
        %v2839 = vld [vmem:[%s2838] sm:$0xf]
        %v2840 = vld [vmem:[%s2838 + $0x4] sm:$0xf]
        %v2841 = vrot.slane %v2613, 1
        %v2842 = vrot.slane %v2615, 2
        %v2843 = vor.u32 %v2841, %v2842
        %v2846 = vunpack.c.l.b16 %v2839
        %v2847 = vunpack.c.l.b16 %v2840
        %v2848 = vpack.c.b16 %v2847, %v2846
        %v2851 = vsel %vm534, %v2843, 0
        %2853 = vmatprep.subr.bf16.mxu0 0
        %2854 = vmatpush1.bf16.msra.mxu0 %v2848
        %2855 = vmatprep.subr.bf16.mxu0 0
        %2856 = vmatpush1.bf16.msra.mxu0 0
        %2857 = vmatprep.subr.bf16.mxu0 0
        %2858 = vmatpush1.bf16.msra.mxu0 0
        %2859 = vmatprep.subr.bf16.mxu0 0
        %2860 = vmatpush1.bf16.msra.mxu0 0
        %2861 = vmatprep.subr.bf16.mxu0 0
        %2862 = vmatpush1.bf16.msra.mxu0 0
        %2863 = vmatprep.subr.bf16.mxu0 0
        %2864 = vmatpush1.bf16.msra.mxu0 0
        %2865 = vmatprep.subr.bf16.mxu0 0
        %2866 = vmatpush1.bf16.msra.mxu0 0
        %2867 = vmatprep.subr.bf16.mxu0 0
        %2868 = vmatpush1.bf16.msra.mxu0 0
        %2869 = vmatprep.subr.bf16.mxu0 0
        %2870 = vmatpush1.bf16.msra.mxu0 0
        %2871 = vmatprep.subr.bf16.mxu0 0
        %2872 = vmatpush1.bf16.msra.mxu0 0
        %2873 = vmatprep.subr.bf16.mxu0 0
        %2874 = vmatpush1.bf16.msra.mxu0 0
        %2875 = vmatprep.subr.bf16.mxu0 0
        %2876 = vmatpush1.bf16.msra.mxu0 0
        %2877 = vmatprep.subr.bf16.mxu0 0
        %2878 = vmatpush1.bf16.msra.mxu0 0
        %2879 = vmatprep.subr.bf16.mxu0 0
        %2880 = vmatpush1.bf16.msra.mxu0 0
        %2881 = vmatprep.subr.bf16.mxu0 0
        %2882 = vmatpush1.bf16.msra.mxu0 0
        %2883 = vmatprep.subr.bf16.mxu0 0
        %2884 = vmatpush1.bf16.msra.mxu0 0
        %2885 = vmatprep.mubr.bf16.mxu0 0
        %2886 = vmatmul.mubr.bf16.gmra.mrb[0].mxu0 %v2851
        %v2887 = vpop.f32.mrb[0].mxu0
        %v2888 = vadd.f32 0.0, %v2887
        %v2889 = vpop.f32.mrb[0].mxu0
        %v2890 = vpop.f32.mrb[0].mxu0
        %v2891 = vpop.f32.mrb[0].mxu0
        %2892 = vdwg.mxu0
        %v2893 = vadd.f32 %v2837, %v2888
        %s2894 = scalar_lea.vmem [#allocation9], 80
        %v2895 = vld [vmem:[%s2894] sm:$0xf]
        %v2896 = vld [vmem:[%s2894 + $0x4] sm:$0xf]
        %v2897 = vrot.slane %v2672, 1
        %v2898 = vrot.slane %v2674, 2
        %v2899 = vor.u32 %v2897, %v2898
        %v2902 = vunpack.c.l.b16 %v2895
        %v2903 = vunpack.c.l.b16 %v2896
        %v2904 = vpack.c.b16 %v2903, %v2902
        %v2907 = vsel %vm534, %v2899, 0
        %2909 = vmatprep.subr.bf16.mxu0 0
        %2910 = vmatpush1.bf16.msra.mxu0 %v2904
        %2911 = vmatprep.subr.bf16.mxu0 0
        %2912 = vmatpush1.bf16.msra.mxu0 0
        %2913 = vmatprep.subr.bf16.mxu0 0
        %2914 = vmatpush1.bf16.msra.mxu0 0
        %2915 = vmatprep.subr.bf16.mxu0 0
        %2916 = vmatpush1.bf16.msra.mxu0 0
        %2917 = vmatprep.subr.bf16.mxu0 0
        %2918 = vmatpush1.bf16.msra.mxu0 0
        %2919 = vmatprep.subr.bf16.mxu0 0
        %2920 = vmatpush1.bf16.msra.mxu0 0
        %2921 = vmatprep.subr.bf16.mxu0 0
        %2922 = vmatpush1.bf16.msra.mxu0 0
        %2923 = vmatprep.subr.bf16.mxu0 0
        %2924 = vmatpush1.bf16.msra.mxu0 0
        %2925 = vmatprep.subr.bf16.mxu0 0
        %2926 = vmatpush1.bf16.msra.mxu0 0
        %2927 = vmatprep.subr.bf16.mxu0 0
        %2928 = vmatpush1.bf16.msra.mxu0 0
        %2929 = vmatprep.subr.bf16.mxu0 0
        %2930 = vmatpush1.bf16.msra.mxu0 0
        %2931 = vmatprep.subr.bf16.mxu0 0
        %2932 = vmatpush1.bf16.msra.mxu0 0
        %2933 = vmatprep.subr.bf16.mxu0 0
        %2934 = vmatpush1.bf16.msra.mxu0 0
        %2935 = vmatprep.subr.bf16.mxu0 0
        %2936 = vmatpush1.bf16.msra.mxu0 0
        %2937 = vmatprep.subr.bf16.mxu0 0
        %2938 = vmatpush1.bf16.msra.mxu0 0
        %2939 = vmatprep.subr.bf16.mxu0 0
        %2940 = vmatpush1.bf16.msra.mxu0 0
        %2941 = vmatprep.mubr.bf16.mxu0 0
        %2942 = vmatmul.mubr.bf16.gmra.mrb[0].mxu0 %v2907
        %v2943 = vpop.f32.mrb[0].mxu0
        %v2944 = vadd.f32 0.0, %v2943
        %v2945 = vpop.f32.mrb[0].mxu0
        %v2946 = vpop.f32.mrb[0].mxu0
        %v2947 = vpop.f32.mrb[0].mxu0
        %2948 = vdwg.mxu0
        %v2949 = vadd.f32 %v2893, %v2944
        %s2950 = scalar_lea.vmem [#allocation9], 32
        %v2951 = vld [vmem:[%s2950] sm:$0xf]
        %v2952 = vld [vmem:[%s2950 + $0x4] sm:$0xf]
        %v2953 = vrot.slane %v2447, 2
        %v2956 = vunpack.c.l.b16 %v2951
        %v2957 = vunpack.c.l.b16 %v2952
        %v2958 = vpack.c.b16 %v2957, %v2956
        %v2961 = vsel %vm534, %v2953, 0
        %2963 = vmatprep.subr.bf16.mxu0 0
        %2964 = vmatpush1.bf16.msra.mxu0 %v2958
        %2965 = vmatprep.subr.bf16.mxu0 0
        %2966 = vmatpush1.bf16.msra.mxu0 0
        %2967 = vmatprep.subr.bf16.mxu0 0
        %2968 = vmatpush1.bf16.msra.mxu0 0
        %2969 = vmatprep.subr.bf16.mxu0 0
        %2970 = vmatpush1.bf16.msra.mxu0 0
        %2971 = vmatprep.subr.bf16.mxu0 0
        %2972 = vmatpush1.bf16.msra.mxu0 0
        %2973 = vmatprep.subr.bf16.mxu0 0
        %2974 = vmatpush1.bf16.msra.mxu0 0
        %2975 = vmatprep.subr.bf16.mxu0 0
        %2976 = vmatpush1.bf16.msra.mxu0 0
        %2977 = vmatprep.subr.bf16.mxu0 0
        %2978 = vmatpush1.bf16.msra.mxu0 0
        %2979 = vmatprep.subr.bf16.mxu0 0
        %2980 = vmatpush1.bf16.msra.mxu0 0
        %2981 = vmatprep.subr.bf16.mxu0 0
        %2982 = vmatpush1.bf16.msra.mxu0 0
        %2983 = vmatprep.subr.bf16.mxu0 0
        %2984 = vmatpush1.bf16.msra.mxu0 0
        %2985 = vmatprep.subr.bf16.mxu0 0
        %2986 = vmatpush1.bf16.msra.mxu0 0
        %2987 = vmatprep.subr.bf16.mxu0 0
        %2988 = vmatpush1.bf16.msra.mxu0 0
        %2989 = vmatprep.subr.bf16.mxu0 0
        %2990 = vmatpush1.bf16.msra.mxu0 0
        %2991 = vmatprep.subr.bf16.mxu0 0
        %2992 = vmatpush1.bf16.msra.mxu0 0
        %2993 = vmatprep.subr.bf16.mxu0 0
        %2994 = vmatpush1.bf16.msra.mxu0 0
        %2995 = vmatprep.mubr.bf16.mxu0 0
        %2996 = vmatmul.mubr.bf16.gmra.mrb[0].mxu0 %v2961
        %v2997 = vpop.f32.mrb[0].mxu0
        %v2998 = vadd.f32 0.0, %v2997
        %v2999 = vpop.f32.mrb[0].mxu0
        %v3000 = vpop.f32.mrb[0].mxu0
        %v3001 = vpop.f32.mrb[0].mxu0
        %3002 = vdwg.mxu0
        %v3003 = vadd.f32 %v2949, %v2998
        %s3004 = scalar_lea.vmem [#allocation9], 88
        %v3005 = vld [vmem:[%s3004] sm:$0xf]
        %v3006 = vld [vmem:[%s3004 + $0x4] sm:$0xf]
        %v3007 = vrot.slane %v2506, 2
        %v3010 = vunpack.c.l.b16 %v3005
        %v3011 = vunpack.c.l.b16 %v3006
        %v3012 = vpack.c.b16 %v3011, %v3010
        %v3015 = vsel %vm534, %v3007, 0
        %3017 = vmatprep.subr.bf16.mxu0 0
        %3018 = vmatpush1.bf16.msra.mxu0 %v3012
        %3019 = vmatprep.subr.bf16.mxu0 0
        %3020 = vmatpush1.bf16.msra.mxu0 0
        %3021 = vmatprep.subr.bf16.mxu0 0
        %3022 = vmatpush1.bf16.msra.mxu0 0
        %3023 = vmatprep.subr.bf16.mxu0 0
        %3024 = vmatpush1.bf16.msra.mxu0 0
        %3025 = vmatprep.subr.bf16.mxu0 0
        %3026 = vmatpush1.bf16.msra.mxu0 0
        %3027 = vmatprep.subr.bf16.mxu0 0
        %3028 = vmatpush1.bf16.msra.mxu0 0
        %3029 = vmatprep.subr.bf16.mxu0 0
        %3030 = vmatpush1.bf16.msra.mxu0 0
        %3031 = vmatprep.subr.bf16.mxu0 0
        %3032 = vmatpush1.bf16.msra.mxu0 0
        %3033 = vmatprep.subr.bf16.mxu0 0
        %3034 = vmatpush1.bf16.msra.mxu0 0
        %3035 = vmatprep.subr.bf16.mxu0 0
        %3036 = vmatpush1.bf16.msra.mxu0 0
        %3037 = vmatprep.subr.bf16.mxu0 0
        %3038 = vmatpush1.bf16.msra.mxu0 0
        %3039 = vmatprep.subr.bf16.mxu0 0
        %3040 = vmatpush1.bf16.msra.mxu0 0
        %3041 = vmatprep.subr.bf16.mxu0 0
        %3042 = vmatpush1.bf16.msra.mxu0 0
        %3043 = vmatprep.subr.bf16.mxu0 0
        %3044 = vmatpush1.bf16.msra.mxu0 0
        %3045 = vmatprep.subr.bf16.mxu0 0
        %3046 = vmatpush1.bf16.msra.mxu0 0
        %3047 = vmatprep.subr.bf16.mxu0 0
        %3048 = vmatpush1.bf16.msra.mxu0 0
        %3049 = vmatprep.mubr.bf16.mxu0 0
        %3050 = vmatmul.mubr.bf16.gmra.mrb[0].mxu0 %v3015
        %v3051 = vpop.f32.mrb[0].mxu0
        %v3052 = vadd.f32 0.0, %v3051
        %v3053 = vpop.f32.mrb[0].mxu0
        %v3054 = vpop.f32.mrb[0].mxu0
        %v3055 = vpop.f32.mrb[0].mxu0
        %3056 = vdwg.mxu0
        %v3057 = vadd.f32 %v3003, %v3052
        %s3058 = scalar_lea.vmem [#allocation9], 40
        %v3059 = vld [vmem:[%s3058] sm:$0xf]
        %v3060 = vld [vmem:[%s3058 + $0x4] sm:$0xf]
        %v3061 = vrot.slane %v2613, 2
        %v3062 = vrot.slane %v2615, 3
        %v3063 = vor.u32 %v3061, %v3062
        %v3066 = vunpack.c.l.b16 %v3059
        %v3067 = vunpack.c.l.b16 %v3060
        %v3068 = vpack.c.b16 %v3067, %v3066
        %v3071 = vsel %vm534, %v3063, 0
        %3073 = vmatprep.subr.bf16.mxu0 0
        %3074 = vmatpush1.bf16.msra.mxu0 %v3068
        %3075 = vmatprep.subr.bf16.mxu0 0
        %3076 = vmatpush1.bf16.msra.mxu0 0
        %3077 = vmatprep.subr.bf16.mxu0 0
        %3078 = vmatpush1.bf16.msra.mxu0 0
        %3079 = vmatprep.subr.bf16.mxu0 0
        %3080 = vmatpush1.bf16.msra.mxu0 0
        %3081 = vmatprep.subr.bf16.mxu0 0
        %3082 = vmatpush1.bf16.msra.mxu0 0
        %3083 = vmatprep.subr.bf16.mxu0 0
        %3084 = vmatpush1.bf16.msra.mxu0 0
        %3085 = vmatprep.subr.bf16.mxu0 0
        %3086 = vmatpush1.bf16.msra.mxu0 0
        %3087 = vmatprep.subr.bf16.mxu0 0
        %3088 = vmatpush1.bf16.msra.mxu0 0
        %3089 = vmatprep.subr.bf16.mxu0 0
        %3090 = vmatpush1.bf16.msra.mxu0 0
        %3091 = vmatprep.subr.bf16.mxu0 0
        %3092 = vmatpush1.bf16.msra.mxu0 0
        %3093 = vmatprep.subr.bf16.mxu0 0
        %3094 = vmatpush1.bf16.msra.mxu0 0
        %3095 = vmatprep.subr.bf16.mxu0 0
        %3096 = vmatpush1.bf16.msra.mxu0 0
        %3097 = vmatprep.subr.bf16.mxu0 0
        %3098 = vmatpush1.bf16.msra.mxu0 0
        %3099 = vmatprep.subr.bf16.mxu0 0
        %3100 = vmatpush1.bf16.msra.mxu0 0
        %3101 = vmatprep.subr.bf16.mxu0 0
        %3102 = vmatpush1.bf16.msra.mxu0 0
        %3103 = vmatprep.subr.bf16.mxu0 0
        %3104 = vmatpush1.bf16.msra.mxu0 0
        %3105 = vmatprep.mubr.bf16.mxu0 0
        %3106 = vmatmul.mubr.bf16.gmra.mrb[0].mxu0 %v3071
        %v3107 = vpop.f32.mrb[0].mxu0
        %v3108 = vadd.f32 0.0, %v3107
        %v3109 = vpop.f32.mrb[0].mxu0
        %v3110 = vpop.f32.mrb[0].mxu0
        %v3111 = vpop.f32.mrb[0].mxu0
        %3112 = vdwg.mxu0
        %v3113 = vadd.f32 %v3057, %v3108
        %s3114 = scalar_lea.vmem [#allocation9], 96
        %v3115 = vld [vmem:[%s3114] sm:$0xf]
        %v3116 = vld [vmem:[%s3114 + $0x4] sm:$0xf]
        %v3117 = vrot.slane %v2672, 2
        %v3118 = vrot.slane %v2674, 3
        %v3119 = vor.u32 %v3117, %v3118
        %v3122 = vunpack.c.l.b16 %v3115
        %v3123 = vunpack.c.l.b16 %v3116
        %v3124 = vpack.c.b16 %v3123, %v3122
        %v3127 = vsel %vm534, %v3119, 0
        %3129 = vmatprep.subr.bf16.mxu0 0
        %3130 = vmatpush1.bf16.msra.mxu0 %v3124
        %3131 = vmatprep.subr.bf16.mxu0 0
        %3132 = vmatpush1.bf16.msra.mxu0 0
        %3133 = vmatprep.subr.bf16.mxu0 0
        %3134 = vmatpush1.bf16.msra.mxu0 0
        %3135 = vmatprep.subr.bf16.mxu0 0
        %3136 = vmatpush1.bf16.msra.mxu0 0
        %3137 = vmatprep.subr.bf16.mxu0 0
        %3138 = vmatpush1.bf16.msra.mxu0 0
        %3139 = vmatprep.subr.bf16.mxu0 0
        %3140 = vmatpush1.bf16.msra.mxu0 0
        %3141 = vmatprep.subr.bf16.mxu0 0
        %3142 = vmatpush1.bf16.msra.mxu0 0
        %3143 = vmatprep.subr.bf16.mxu0 0
        %3144 = vmatpush1.bf16.msra.mxu0 0
        %3145 = vmatprep.subr.bf16.mxu0 0
        %3146 = vmatpush1.bf16.msra.mxu0 0
        %3147 = vmatprep.subr.bf16.mxu0 0
        %3148 = vmatpush1.bf16.msra.mxu0 0
        %3149 = vmatprep.subr.bf16.mxu0 0
        %3150 = vmatpush1.bf16.msra.mxu0 0
        %3151 = vmatprep.subr.bf16.mxu0 0
        %3152 = vmatpush1.bf16.msra.mxu0 0
        %3153 = vmatprep.subr.bf16.mxu0 0
        %3154 = vmatpush1.bf16.msra.mxu0 0
        %3155 = vmatprep.subr.bf16.mxu0 0
        %3156 = vmatpush1.bf16.msra.mxu0 0
        %3157 = vmatprep.subr.bf16.mxu0 0
        %3158 = vmatpush1.bf16.msra.mxu0 0
        %3159 = vmatprep.subr.bf16.mxu0 0
        %3160 = vmatpush1.bf16.msra.mxu0 0
        %3161 = vmatprep.mubr.bf16.mxu0 0
        %3162 = vmatmul.mubr.bf16.gmra.mrb[0].mxu0 %v3127
        %v3163 = vpop.f32.mrb[0].mxu0
        %v3164 = vadd.f32 0.0, %v3163
        %v3165 = vpop.f32.mrb[0].mxu0
        %v3166 = vpop.f32.mrb[0].mxu0
        %v3167 = vpop.f32.mrb[0].mxu0
        %3168 = vdwg.mxu0
        %v3169 = vadd.f32 %v3113, %v3164
        %s3170 = scalar_lea.vmem [#allocation9], 48
        %v3171 = vld [vmem:[%s3170] sm:$0xf]
        %v3172 = vld [vmem:[%s3170 + $0x4] sm:$0xf]
        %v3173 = vrot.slane %v2447, 3
        %v3176 = vunpack.c.l.b16 %v3171
        %v3177 = vunpack.c.l.b16 %v3172
        %v3178 = vpack.c.b16 %v3177, %v3176
        %v3181 = vsel %vm534, %v3173, 0
        %3183 = vmatprep.subr.bf16.mxu0 0
        %3184 = vmatpush1.bf16.msra.mxu0 %v3178
        %3185 = vmatprep.subr.bf16.mxu0 0
        %3186 = vmatpush1.bf16.msra.mxu0 0
        %3187 = vmatprep.subr.bf16.mxu0 0
        %3188 = vmatpush1.bf16.msra.mxu0 0
        %3189 = vmatprep.subr.bf16.mxu0 0
        %3190 = vmatpush1.bf16.msra.mxu0 0
        %3191 = vmatprep.subr.bf16.mxu0 0
        %3192 = vmatpush1.bf16.msra.mxu0 0
        %3193 = vmatprep.subr.bf16.mxu0 0
        %3194 = vmatpush1.bf16.msra.mxu0 0
        %3195 = vmatprep.subr.bf16.mxu0 0
        %3196 = vmatpush1.bf16.msra.mxu0 0
        %3197 = vmatprep.subr.bf16.mxu0 0
        %3198 = vmatpush1.bf16.msra.mxu0 0
        %3199 = vmatprep.subr.bf16.mxu0 0
        %3200 = vmatpush1.bf16.msra.mxu0 0
        %3201 = vmatprep.subr.bf16.mxu0 0
        %3202 = vmatpush1.bf16.msra.mxu0 0
        %3203 = vmatprep.subr.bf16.mxu0 0
        %3204 = vmatpush1.bf16.msra.mxu0 0
        %3205 = vmatprep.subr.bf16.mxu0 0
        %3206 = vmatpush1.bf16.msra.mxu0 0
        %3207 = vmatprep.subr.bf16.mxu0 0
        %3208 = vmatpush1.bf16.msra.mxu0 0
        %3209 = vmatprep.subr.bf16.mxu0 0
        %3210 = vmatpush1.bf16.msra.mxu0 0
        %3211 = vmatprep.subr.bf16.mxu0 0
        %3212 = vmatpush1.bf16.msra.mxu0 0
        %3213 = vmatprep.subr.bf16.mxu0 0
        %3214 = vmatpush1.bf16.msra.mxu0 0
        %3215 = vmatprep.mubr.bf16.mxu0 0
        %3216 = vmatmul.mubr.bf16.gmra.mrb[0].mxu0 %v3181
        %v3217 = vpop.f32.mrb[0].mxu0
        %v3218 = vadd.f32 0.0, %v3217
        %v3219 = vpop.f32.mrb[0].mxu0
        %v3220 = vpop.f32.mrb[0].mxu0
        %v3221 = vpop.f32.mrb[0].mxu0
        %3222 = vdwg.mxu0
        %v3223 = vadd.f32 %v3169, %v3218
        %s3224 = scalar_lea.vmem [#allocation9], 104
        %v3225 = vld [vmem:[%s3224] sm:$0xf]
        %v3226 = vld [vmem:[%s3224 + $0x4] sm:$0xf]
        %v3227 = vrot.slane %v2506, 3
        %v3230 = vunpack.c.l.b16 %v3225
        %v3231 = vunpack.c.l.b16 %v3226
        %v3232 = vpack.c.b16 %v3231, %v3230
        %v3235 = vsel %vm534, %v3227, 0
        %3237 = vmatprep.subr.bf16.mxu0 0
        %3238 = vmatpush1.bf16.msra.mxu0 %v3232
        %3239 = vmatprep.subr.bf16.mxu0 0
        %3240 = vmatpush1.bf16.msra.mxu0 0
        %3241 = vmatprep.subr.bf16.mxu0 0
        %3242 = vmatpush1.bf16.msra.mxu0 0
        %3243 = vmatprep.subr.bf16.mxu0 0
        %3244 = vmatpush1.bf16.msra.mxu0 0
        %3245 = vmatprep.subr.bf16.mxu0 0
        %3246 = vmatpush1.bf16.msra.mxu0 0
        %3247 = vmatprep.subr.bf16.mxu0 0
        %3248 = vmatpush1.bf16.msra.mxu0 0
        %3249 = vmatprep.subr.bf16.mxu0 0
        %3250 = vmatpush1.bf16.msra.mxu0 0
        %3251 = vmatprep.subr.bf16.mxu0 0
        %3252 = vmatpush1.bf16.msra.mxu0 0
        %3253 = vmatprep.subr.bf16.mxu0 0
        %3254 = vmatpush1.bf16.msra.mxu0 0
        %3255 = vmatprep.subr.bf16.mxu0 0
        %3256 = vmatpush1.bf16.msra.mxu0 0
        %3257 = vmatprep.subr.bf16.mxu0 0
        %3258 = vmatpush1.bf16.msra.mxu0 0
        %3259 = vmatprep.subr.bf16.mxu0 0
        %3260 = vmatpush1.bf16.msra.mxu0 0
        %3261 = vmatprep.subr.bf16.mxu0 0
        %3262 = vmatpush1.bf16.msra.mxu0 0
        %3263 = vmatprep.subr.bf16.mxu0 0
        %3264 = vmatpush1.bf16.msra.mxu0 0
        %3265 = vmatprep.subr.bf16.mxu0 0
        %3266 = vmatpush1.bf16.msra.mxu0 0
        %3267 = vmatprep.subr.bf16.mxu0 0
        %3268 = vmatpush1.bf16.msra.mxu0 0
        %3269 = vmatprep.mubr.bf16.mxu0 0
        %3270 = vmatmul.mubr.bf16.gmra.mrb[0].mxu0 %v3235
        %v3271 = vpop.f32.mrb[0].mxu0
        %v3272 = vadd.f32 0.0, %v3271
        %v3273 = vpop.f32.mrb[0].mxu0
        %v3274 = vpop.f32.mrb[0].mxu0
        %v3275 = vpop.f32.mrb[0].mxu0
        %3276 = vdwg.mxu0
        %v3277 = vadd.f32 %v3223, %v3272
        %v3278 = vstv %s2384
        %v3279 = vadd.f32 %v3277, %v3278
        %v3280 = vxor.u32 %v3279, 2147483648
        %v3281 = vmul.f32 %v3280, 1.442695
        %v3282 = vpow.pop %v3281
        %v3283 = vadd.f32 %v3282, 1.0
        %v3284 = vrcp.pop %v3283
        %v3285 = vmul.f32 1.0, %v3284
        %v3286 = vmul.f32 %v3285, 0.33333334
        %v3289 = vunpack.c.l.s4 1966171168
        %v3290 = vunpack.c.0.s8 %v3289
        %v3291 = vlaneseq
        %v3292 = vshrl.u32 %v3291, 7
        %v3293 = vsub.s32 %v3290, %v3292
        %v3294 = vrot.slane %v2375, %v3293
        %v3295 = vcombine.high %v3294, %v3294
        %v3297 = vunpack.c.l.s4 1966171168
        %v3298 = vunpack.c.0.s8 %v3297
        %v3299 = vlaneseq
        %v3300 = vshrl.u32 %v3299, 7
        %v3301 = vsub.s32 %v3298, %v3300
        %v3302 = vrot.slane %v3294, %v3301
        %v3304 = vunpack.c.l.s4 1966171168
        %v3305 = vunpack.c.0.s8 %v3304
        %v3306 = vlaneseq
        %v3307 = vshrl.u32 %v3306, 7
        %v3308 = vsub.s32 %v3305, %v3307
        %v3309 = vrot.slane %v3295, %v3308
        %v3310 = vcombine.high %v3302, %v3302
        %v3311 = vcombine.high %v3309, %v3309
        %v3312 = vlaneseq
        %v3313 = vshrl.u32 %v3312, 7
        %v3314 = vsub.s32 0, %v3313
        %v3315 = vrot.slane %v3302, %v3314
        %v3316 = vlaneseq
        %v3317 = vshrl.u32 %v3316, 7
        %v3318 = vsub.s32 0, %v3317
        %v3319 = vrot.slane %v3309, %v3318
        %v3320 = vlaneseq
        %v3321 = vshrl.u32 %v3320, 7
        %v3322 = vsub.s32 0, %v3321
        %v3323 = vrot.slane %v3310, %v3322
        %v3324 = vlaneseq
        %v3325 = vshrl.u32 %v3324, 7
        %v3326 = vsub.s32 0, %v3325
        %v3327 = vrot.slane %v3311, %v3326
        %v3332 = vadd.f32 %v1545, %v3315
        %v3333 = vadd.f32 %v1546, %v3315
        %v3334 = vadd.f32 %v1545, %v3319
        %v3335 = vadd.f32 %v1546, %v3319
        %v3336 = vadd.f32 %v1545, %v3323
        %v3337 = vadd.f32 %v1546, %v3323
        %v3338 = vadd.f32 %v1545, %v3327
        %v3339 = vadd.f32 %v1546, %v3327
        %v3340 = vlaneseq
        %v3341 = vshrl.u32 %v3340, 7
        %v3342 = vsub.s32 0, %v3341
        %v3343 = vrot.slane %v3286, %v3342
        %3345 = vbcast.lane.b32.xlu0 %v3343, 256
        %v3346 = vpop.permute.xlu0 %3345
        %s3348 = sor.u32 256, 8
        %3349 = vbcast.lane.b32.xlu0 %v3343, %s3348
        %v3350 = vpop.permute.xlu0 %3349
        %v3351 = vlaneseq
        %v3352 = vshrl.u32 %v3351, 7
        %v3353 = vsub.s32 1, %v3352
        %v3354 = vrot.slane %v3286, %v3353
        %3356 = vbcast.lane.b32.xlu0 %v3354, 256
        %v3357 = vpop.permute.xlu0 %3356
        %s3359 = sor.u32 256, 8
        %3360 = vbcast.lane.b32.xlu0 %v3354, %s3359
        %v3361 = vpop.permute.xlu0 %3360
        %v3362 = vlaneseq
        %v3363 = vshrl.u32 %v3362, 7
        %v3364 = vsub.s32 2, %v3363
        %v3365 = vrot.slane %v3286, %v3364
        %3367 = vbcast.lane.b32.xlu0 %v3365, 256
        %v3368 = vpop.permute.xlu0 %3367
        %s3370 = sor.u32 256, 8
        %3371 = vbcast.lane.b32.xlu0 %v3365, %s3370
        %v3372 = vpop.permute.xlu0 %3371
        %v3373 = vlaneseq
        %v3374 = vshrl.u32 %v3373, 7
        %v3375 = vsub.s32 3, %v3374
        %v3376 = vrot.slane %v3286, %v3375
        %3378 = vbcast.lane.b32.xlu0 %v3376, 256
        %v3379 = vpop.permute.xlu0 %3378
        %s3381 = sor.u32 256, 8
        %3382 = vbcast.lane.b32.xlu0 %v3376, %s3381
        %v3383 = vpop.permute.xlu0 %3382
        %v3384 = vadd.f32 %v3332, %v3346
        %v3385 = vadd.f32 %v3333, %v3350
        %v3386 = vadd.f32 %v3334, %v3357
        %v3387 = vadd.f32 %v3335, %v3361
        %v3388 = vadd.f32 %v3336, %v3368
        %v3389 = vadd.f32 %v3337, %v3372
        %v3390 = vadd.f32 %v3338, %v3379
        %v3391 = vadd.f32 %v3339, %v3383
        %v3392 = vcombine.low %v3384, %v3388
        %v3393 = vcombine.high %v3384, %v3388
        %v3395 = vunpack.c.l.s4 1983009808
        %v3396 = vunpack.c.0.s8 %v3395
        %v3397 = vlaneseq
        %v3398 = vshrl.u32 %v3397, 7
        %v3399 = vsub.s32 %v3396, %v3398
        %v3400 = vrot.slane %v3392, %v3399
        %v3402 = vunpack.c.l.s4 1983009808
        %v3403 = vunpack.c.0.s8 %v3402
        %v3404 = vlaneseq
        %v3405 = vshrl.u32 %v3404, 7
        %v3406 = vsub.s32 %v3403, %v3405
        %v3407 = vrot.slane %v3393, %v3406
        %v3408 = vcombine.low %v3386, %v3390
        %v3409 = vcombine.high %v3386, %v3390
        %v3411 = vunpack.c.l.s4 1983009808
        %v3412 = vunpack.c.0.s8 %v3411
        %v3413 = vlaneseq
        %v3414 = vshrl.u32 %v3413, 7
        %v3415 = vsub.s32 %v3412, %v3414
        %v3416 = vrot.slane %v3408, %v3415
        %v3418 = vunpack.c.l.s4 1983009808
        %v3419 = vunpack.c.0.s8 %v3418
        %v3420 = vlaneseq
        %v3421 = vshrl.u32 %v3420, 7
        %v3422 = vsub.s32 %v3419, %v3421
        %v3423 = vrot.slane %v3409, %v3422
        %v3424 = vcombine.low %v3400, %v3416
        %v3425 = vcombine.high %v3400, %v3416
        %v3427 = vunpack.c.l.s4 1934713408
        %v3428 = vunpack.c.0.s8 %v3427
        %v3429 = vlaneseq
        %v3430 = vshrl.u32 %v3429, 7
        %v3431 = vsub.s32 %v3428, %v3430
        %v3432 = vrot.slane %v3424, %v3431
        %v3434 = vunpack.c.l.s4 1934713408
        %v3435 = vunpack.c.0.s8 %v3434
        %v3436 = vlaneseq
        %v3437 = vshrl.u32 %v3436, 7
        %v3438 = vsub.s32 %v3435, %v3437
        %v3439 = vrot.slane %v3425, %v3438
        %v3440 = vcombine.low %v3407, %v3423
        %v3441 = vcombine.high %v3407, %v3423
        %v3443 = vunpack.c.l.s4 1934713408
        %v3444 = vunpack.c.0.s8 %v3443
        %v3445 = vlaneseq
        %v3446 = vshrl.u32 %v3445, 7
        %v3447 = vsub.s32 %v3444, %v3446
        %v3448 = vrot.slane %v3440, %v3447
        %v3450 = vunpack.c.l.s4 1934713408
        %v3451 = vunpack.c.0.s8 %v3450
        %v3452 = vlaneseq
        %v3453 = vshrl.u32 %v3452, 7
        %v3454 = vsub.s32 %v3451, %v3453
        %v3455 = vrot.slane %v3441, %v3454
        %v3456 = vcombine.high %v3432, 0.0
        %v3457 = vcombine.high %v3439, 0.0
        %v3458 = vcombine.high %v3448, 0.0
        %v3459 = vcombine.high %v3455, 0.0
        %v3460 = vcombine.low %v3385, %v3389
        %v3461 = vcombine.high %v3385, %v3389
        %v3463 = vunpack.c.l.s4 1983009808
        %v3464 = vunpack.c.0.s8 %v3463
        %v3465 = vlaneseq
        %v3466 = vshrl.u32 %v3465, 7
        %v3467 = vsub.s32 %v3464, %v3466
        %v3468 = vrot.slane %v3460, %v3467
        %v3470 = vunpack.c.l.s4 1983009808
        %v3471 = vunpack.c.0.s8 %v3470
        %v3472 = vlaneseq
        %v3473 = vshrl.u32 %v3472, 7
        %v3474 = vsub.s32 %v3471, %v3473
        %v3475 = vrot.slane %v3461, %v3474
        %v3476 = vcombine.low %v3387, %v3391
        %v3477 = vcombine.high %v3387, %v3391
        %v3479 = vunpack.c.l.s4 1983009808
        %v3480 = vunpack.c.0.s8 %v3479
        %v3481 = vlaneseq
        %v3482 = vshrl.u32 %v3481, 7
        %v3483 = vsub.s32 %v3480, %v3482
        %v3484 = vrot.slane %v3476, %v3483
        %v3486 = vunpack.c.l.s4 1983009808
        %v3487 = vunpack.c.0.s8 %v3486
        %v3488 = vlaneseq
        %v3489 = vshrl.u32 %v3488, 7
        %v3490 = vsub.s32 %v3487, %v3489
        %v3491 = vrot.slane %v3477, %v3490
        %v3492 = vcombine.low %v3468, %v3484
        %v3493 = vcombine.high %v3468, %v3484
        %v3495 = vunpack.c.l.s4 1934713408
        %v3496 = vunpack.c.0.s8 %v3495
        %v3497 = vlaneseq
        %v3498 = vshrl.u32 %v3497, 7
        %v3499 = vsub.s32 %v3496, %v3498
        %v3500 = vrot.slane %v3492, %v3499
        %v3502 = vunpack.c.l.s4 1934713408
        %v3503 = vunpack.c.0.s8 %v3502
        %v3504 = vlaneseq
        %v3505 = vshrl.u32 %v3504, 7
        %v3506 = vsub.s32 %v3503, %v3505
        %v3507 = vrot.slane %v3493, %v3506
        %v3508 = vcombine.low %v3475, %v3491
        %v3509 = vcombine.high %v3475, %v3491
        %v3511 = vunpack.c.l.s4 1934713408
        %v3512 = vunpack.c.0.s8 %v3511
        %v3513 = vlaneseq
        %v3514 = vshrl.u32 %v3513, 7
        %v3515 = vsub.s32 %v3512, %v3514
        %v3516 = vrot.slane %v3508, %v3515
        %v3518 = vunpack.c.l.s4 1934713408
        %v3519 = vunpack.c.0.s8 %v3518
        %v3520 = vlaneseq
        %v3521 = vshrl.u32 %v3520, 7
        %v3522 = vsub.s32 %v3519, %v3521
        %v3523 = vrot.slane %v3509, %v3522
        %v3524 = vcombine.high %v3500, 0.0
        %v3525 = vcombine.high %v3507, 0.0
        %v3526 = vcombine.high %v3516, 0.0
        %v3527 = vcombine.high %v3523, 0.0
        %3529 = vrot.lane.b32.xlu0 %v3456, 16
        %v3530 = vpop.permute.xlu0 %3529
        %3533 = vrot.lane.b32.xlu0 %v3439, 32
        %v3534 = vpop.permute.xlu0 %3533
        %3537 = vrot.lane.b32.xlu0 %v3457, 48
        %v3538 = vpop.permute.xlu0 %3537
        %3541 = vrot.lane.b32.xlu0 %v3448, 64
        %v3542 = vpop.permute.xlu0 %3541
        %3545 = vrot.lane.b32.xlu0 %v3458, 80
        %v3546 = vpop.permute.xlu0 %3545
        %3549 = vrot.lane.b32.xlu0 %v3455, 96
        %v3550 = vpop.permute.xlu0 %3549
        %3553 = vrot.lane.b32.xlu0 %v3459, 112
        %v3554 = vpop.permute.xlu0 %3553
        %3557 = vrot.lane.b32.xlu0 %v3524, 16
        %v3558 = vpop.permute.xlu0 %3557
        %3561 = vrot.lane.b32.xlu0 %v3507, 32
        %v3562 = vpop.permute.xlu0 %3561
        %3565 = vrot.lane.b32.xlu0 %v3525, 48
        %v3566 = vpop.permute.xlu0 %3565
        %3569 = vrot.lane.b32.xlu0 %v3516, 64
        %v3570 = vpop.permute.xlu0 %3569
        %3573 = vrot.lane.b32.xlu0 %v3526, 80
        %v3574 = vpop.permute.xlu0 %3573
        %3577 = vrot.lane.b32.xlu0 %v3523, 96
        %v3578 = vpop.permute.xlu0 %3577
        %3581 = vrot.lane.b32.xlu0 %v3527, 112
        %v3582 = vpop.permute.xlu0 %3581
        %v3584 = vsel %vm534, %v3432, %v3530
        %vm3585 = vcmask 261120
        %v3586 = vsel %vm3585, %v3584, %v3534
        %vm3587 = vcmask 392192
        %v3588 = vsel %vm3587, %v3586, %v3538
        %vm3589 = vcmask 523264
        %v3590 = vsel %vm3589, %v3588, %v3542
        %vm3591 = vcmask 654336
        %v3592 = vsel %vm3591, %v3590, %v3546
        %vm3593 = vcmask 785408
        %v3594 = vsel %vm3593, %v3592, %v3550
        %vm3595 = vcmask 916480
        %v3596 = vsel %vm3595, %v3594, %v3554
        %v3597 = vsel %vm534, %v3500, %v3558
        %v3598 = vsel %vm3585, %v3597, %v3562
        %v3599 = vsel %vm3587, %v3598, %v3566
        %v3600 = vsel %vm3589, %v3599, %v3570
        %v3601 = vsel %vm3591, %v3600, %v3574
        %v3602 = vsel %vm3593, %v3601, %v3578
        %v3603 = vsel %vm3595, %v3602, %v3582
        %v3606 = vcombine.low %v3596, %v3603
        %v3608 = vmul.f32 %v298, %v3606
        %3609 = vst [vmem:[%s296] sm:$0xff] %v3608
        %s3610 = sand.u32 %s143, 1
        %s3611 = scalar_lea.sflag [#allocation4], %s3610
        %s3612 = sand.u32 %s143, 1
        %s3613 = smul.addr %s3612, 8
        %s3614 = scalar_lea.vmem [#allocation12], %s3613
        // Predicated region
        $region61: #{tpu_custom_call.1} parent=39 // pred_check
          %p3615 = pneg %p153
        $region62: #{tpu_custom_call.1} parent=39 // pred_check_branch
          %3617 = sbr.rel (%p3615) target = $region64
        $region63: #{tpu_custom_call.1} parent=39 // pred_region
          %s3619 = ssub.s32 128, 128
          %3620 = vsyncadd %s3611, %s3619
          %s3621 = smul.addr %s25, 2
          %s3622 = smul.addr %s3621, 64
          %s3623 = scalar_lea.hbm %s5, %s3622
          %s3625 = sshll.u32 %s3614, 4
          %s3626 = int_to_ptr.vmem [resolvable:$true] %s3625
          %3628 = dma.vmem_to_hbm [thread:$0]  %s3626, 128, %s3623, %s3611
        $region64: #{tpu_custom_call.1} parent=39 // pred_fallthru
          _
      $region40: #{tpu_custom_call.1} parent=5 // pred_fallthru
        _
      %p3629 = scmp.le.s32.totalorder 2, %s20
      // Predicated region
      $region65: #{tpu_custom_call.1} parent=5 // pred_check
        %p3630 = pneg %p3629
      $region66: #{tpu_custom_call.1} parent=5 // pred_check_branch
        %3632 = sbr.rel (%p3630) target = $region68
      $region67: #{tpu_custom_call.1} parent=5 // pred_region
        %s3633 = ssub.s32 %s20, 2
        // Predicated region
        $region69: #{tpu_custom_call.1} parent=67 // pred_check
          %p3634 = pneg %p159
        $region70: #{tpu_custom_call.1} parent=67 // pred_check_branch
          %3636 = sbr.rel (%p3634) target = $region72
        $region71: #{tpu_custom_call.1} parent=67 // pred_region
          %s3637 = sand.u32 %s144, 1
          %s3638 = scalar_lea.sflag [#allocation4], %s3637
          %s3639 = sand.u32 %s144, 1
          %s3640 = smul.addr %s3639, 8
          %s3641 = scalar_lea.vmem [#allocation12], %s3640
          %3642 = dma.done %s3638, 128
        $region72: #{tpu_custom_call.1} parent=67 // pred_fallthru
          _
      $region68: #{tpu_custom_call.1} parent=5 // pred_fallthru
        _
    $region6: #{tpu_custom_call.1} parent=1 // loop_footer
      %s24 = sadd.s32 1, %s20
    $region7: #{tpu_custom_call.1} parent=1 // loop_footer_branch
      %19 = sbr.rel target = $region3
    $region8: #{tpu_custom_call.1} parent=1 // loop_exit
      _
    %3643 = vsyncpa [#allocation3], 1
    %s3644 = scalar_lea.sflag [#allocation3], 1
    %3645 = vsyncpa %s3644, 1
    %3646 = vsyncpa [#allocation8], 1
    %3647 = vsyncpa [#allocation11], 1
    %s3648 = scalar_lea.sflag [#allocation11], 1
    %3649 = vsyncpa %s3648, 1
    %3650 = vsyncpa [#allocation4], 1
    %s3651 = scalar_lea.sflag [#allocation4], 1
    %3652 = vsyncpa %s3651, 1
    %3653 = vsyncpa [#allocation5], 1
    %s3654 = scalar_lea.sflag [#allocation5], 1
    %3655 = vsyncpa %s3654, 1

</llo_original>
